<compile_context>
chip_gen: v5e
topology: v5e:2x2
jax: 0.10.0
libtpu: 0.0.40
codegen_flags: <defaults>
</compile_context>

<pallas_src>
import numpy as np
import jax
import jax.numpy as jnp
from jax.experimental import pallas as pl
from jax.experimental.pallas import tpu as pltpu


# Boolean mask from the torch module.  Its True positions (row-major over the
# 6x6 block) are the flat indices of x.reshape(B, 36) that feed fc1.
_MASK = np.array([[1.0, 1.0, 1.0, 0.0, 0.0, 0.0],
                  [1.0, 1.0, 1.0, 0.0, 0.0, 0.0],
                  [1.0, 1.0, 1.0, 0.0, 0.0, 0.0],
                  [0.0, 0.0, 0.0, 1.0, 0.0, 0.0],
                  [0.0, 0.0, 0.0, 0.0, 1.0, 0.0],
                  [0.0, 0.0, 0.0, 0.0, 0.0, 1.0]], dtype=np.float32)
_MASK_FLAT_IDX = np.flatnonzero(_MASK.reshape(-1) > 0.5)     # 12 indices


# ----------------------------------------------------------------------------
# Pallas kernel: 5-layer MLP (gather already folded into fc1's weight)
# ----------------------------------------------------------------------------
def _cembedder_ml_kernel(x_ref,
                         w1_ref, b1_ref, w2_ref, b2_ref, w3_ref, b3_ref,
                         w4_ref, b4_ref, w5_ref, b5_ref,
                         out_ref):
    f32, bf16 = jnp.float32, jnp.bfloat16

    def dense(h_bf16, w_ref, b_ref):
        # bf16 x bf16 -> f32 accumulate: single native MXU pass per K-chunk.
        acc = jnp.dot(h_bf16, w_ref[...], preferred_element_type=f32)
        return acc + b_ref[...].astype(f32)

    def lrelu(acc_f32):
        # LeakyReLU(0.1) on the f32 accumulator, then carry bf16 to the next layer.
        return jnp.where(acc_f32 > 0, acc_f32, 0.1 * acc_f32).astype(bf16)

    h = x_ref[...]                                  # [TB, 36] bf16 (gather folded into w1)
    h = lrelu(dense(h, w1_ref, b1_ref))             # [TB, E/2]  bf16
    h = lrelu(dense(h, w2_ref, b2_ref))             # [TB, E]    bf16
    h = lrelu(dense(h, w3_ref, b3_ref))             # [TB, 2E]   bf16
    a = dense(h, w4_ref, b4_ref)                    # [TB, 4E]   f32
    # Sigmoid via tanh: single EUP op, avoids the f32 VALU divide.
    h = (0.5 * (jnp.tanh(0.5 * a) + 1.0)).astype(bf16)
    out_ref[...] = dense(h, w5_ref, b5_ref).astype(out_ref.dtype)   # [TB, E]

    # TODO(synk): log=True branch (0.4*log(x) input rescale + final LayerNorm)
    # not implemented; the default constructor path is log=False.


# ----------------------------------------------------------------------------
# Host-side weight prep
# ----------------------------------------------------------------------------
def fold_mask_into_fc1(params):
    """Fold the boolean-mask gather into fc1's weight.

    x[:, :, ind] @ W1  ==  x.reshape(B, 36) @ W1_eff  where W1_eff is W1's rows
    scattered into a zero [36, E/2] matrix -> removes all in-kernel lane gathers.
    """
    w1 = params["w1"]                                           # [12, E/2]
    w1_eff = jnp.zeros((36, w1.shape[1]), w1.dtype)
    w1_eff = w1_eff.at[jnp.asarray(_MASK_FLAT_IDX)].set(w1)     # [36, E/2]
    out = dict(params)
    out["w1"] = w1_eff
    return out


# ----------------------------------------------------------------------------
# Wrapper
# ----------------------------------------------------------------------------
def cembedder_ml(x, dev_params, *, batch_tile=512):
    """Forward pass of CEmbedder_ml (log=False). x: [B, 1, 6, 6] (or [B, 36])."""
    B = x.shape[0]
    # Cast once outside the kernel: the MXU consumes bf16 LHS anyway and this
    # halves the (tiny) input DMA.
    x_flat = x.reshape(B, 36).astype(jnp.bfloat16)
    embed_dim = dev_params["w5"].shape[1]

    assert batch_tile % 8 == 0, "batch_tile must be a multiple of 8"
    # Small B (weight-DMA-bound): single grid step, don't split/duplicate the
    # ~1 MB bf16 weight stream.  Large B: tile the batch; on v7x choose
    # batch_tile so pl.cdiv(B, batch_tile) is >=2 (and even) so both
    # TensorCores stay busy when compute-bound.
    tb = B if B <= batch_tile else batch_tile
    grid = (pl.cdiv(B, tb),)

    def pinned(a):
        # Constant index_map -> the tensor stays VMEM-resident across all grid
        # steps (no re-DMA); Buffered(1) drops the useless second pipeline buffer.
        return pl.BlockSpec(a.shape, lambda i: (0, 0),
                            pipeline_mode=pl.Buffered(1))

    weight_args = (dev_params["w1"], dev_params["b1"],
                   dev_params["w2"], dev_params["b2"],
                   dev_params["w3"], dev_params["b3"],
                   dev_params["w4"], dev_params["b4"],
                   dev_params["w5"], dev_params["b5"])

    out = pl.pallas_call(
        _cembedder_ml_kernel,
        grid=grid,
        in_specs=[pl.BlockSpec((tb, 36), lambda i: (i, 0))]
                 + [pinned(a) for a in weight_args],
        out_specs=pl.BlockSpec((tb, embed_dim), lambda i: (i, 0)),
        out_shape=jax.ShapeDtypeStruct((B, embed_dim), jnp.float32),
        compiler_params=pltpu.CompilerParams(
            dimension_semantics=("parallel",)),      # megacore-shardable on v7x
    )(x_flat, *weight_args)

    return out[:, None, :]                           # [B, 1, embed_dim], as in torch


# ----------------------------------------------------------------------------
# Deterministic synthetic parameters (nn.Linear-like, stored [in, out])
# ----------------------------------------------------------------------------
def make_params(key, embed_dim, in_dim=12):
    dims = [(in_dim, embed_dim // 2),
            (embed_dim // 2, embed_dim),
            (embed_dim, 2 * embed_dim),
            (2 * embed_dim, 4 * embed_dim),
            (4 * embed_dim, embed_dim)]
    keys = jax.random.split(key, 2 * len(dims))
    params = {}
    for n, (din, dout) in enumerate(dims, 1):
        bound = 1.0 / (din ** 0.5)
        params[f"w{n}"] = jax.random.uniform(keys[2 * (n - 1)], (din, dout),
                                             jnp.float32, -bound, bound)
        params[f"b{n}"] = jax.random.uniform(keys[2 * (n - 1) + 1], (1, dout),
                                             jnp.float32, -bound, bound)
    return params


# ----------------------------------------------------------------------------
# References
# ----------------------------------------------------------------------------
def ref_forward_bf16(x, params_bf16):
    """Pure-JAX reference with the kernel's exact numeric contract
    (bf16 operands, f32 accumulation, bf16 activation carry, tanh-sigmoid)."""
    f32, bf16 = jnp.float32, jnp.bfloat16
    b = x.shape[0]
    idx = jnp.asarray(_MASK_FLAT_IDX)
    h = x.reshape(b, 36)[:, idx].astype(bf16)        # x[:, :, ind] -> [b, 12]

    def dense(h, w, bias):
        return jnp.dot(h, w, preferred_element_type=f32) + bias.astype(f32)

    def lrelu(a):
        return jnp.where(a > 0, a, 0.1 * a).astype(bf16)

    h = lrelu(dense(h, params_bf16["w1"], params_bf16["b1"]))
    h = lrelu(dense(h, params_bf16["w2"], params_bf16["b2"]))
    h = lrelu(dense(h, params_bf16["w3"], params_bf16["b3"]))
    a = dense(h, params_bf16["w4"], params_bf16["b4"])
    h = (0.5 * (jnp.tanh(0.5 * a) + 1.0)).astype(bf16)
    h = dense(h, params_bf16["w5"], params_bf16["b5"])
    return h[:, None, :]                              # [b, 1, embed_dim]


def ref_forward_f32(x, params_f32):
    """Torch-faithful full-f32 reference (exact sigmoid) to bound bf16 drift."""
    b = x.shape[0]
    h = x.reshape(b, 36)[:, jnp.asarray(_MASK_FLAT_IDX)]

    def dense(h, w, bias):
        return h @ w + bias

    def lrelu(a):
        return jnp.where(a > 0, a, 0.1 * a)

    h = lrelu(dense(h, params_f32["w1"], params_f32["b1"]))
    h = lrelu(dense(h, params_f32["w2"], params_f32["b2"]))
    h = lrelu(dense(h, params_f32["w3"], params_f32["b3"]))
    h = jax.nn.sigmoid(dense(h, params_f32["w4"], params_f32["b4"]))
    h = dense(h, params_f32["w5"], params_f32["b5"])
    return h[:, None, :]


if __name__ == "__main__":
    # Small shapes consistent with the module: x is [B, 1, 6, 6] (stiffness block).
    B, EMBED_DIM = 2, 256

    key = jax.random.PRNGKey(0)
    kx, kp = jax.random.split(key)
    x = jax.random.normal(kx, (B, 1, 6, 6), jnp.float32)
    params_f32 = make_params(kp, EMBED_DIM)

    # Device-side weights: bf16 storage (halves the dominant weight DMA at small
    # batch), with the fc1 mask-gather folded in.
    params_bf16 = {k: v.astype(jnp.bfloat16) for k, v in params_f32.items()}
    dev_params = fold_mask_into_fc1(params_bf16)

    out = jax.block_until_ready(cembedder_ml(x, dev_params))
    assert out.shape == (B, 1, EMBED_DIM)
    assert out.dtype == jnp.float32

    # 1) Exact-contract check (same bf16/f32 numerics as the kernel).
    ref_b = ref_forward_bf16(x, params_bf16)
    assert jnp.allclose(out, ref_b, rtol=2e-3, atol=2e-3), "mismatch vs bf16 JAX reference"

    # 2) Torch-faithful f32 check (bounds accumulated bf16 drift + mask handling).
    ref_f = ref_forward_f32(x, params_f32)
    assert jnp.allclose(out, ref_f, rtol=5e-2, atol=5e-2), \
        "excessive drift vs f32 torch-faithful reference"

    # 3) Ragged / multi-tile batch: exercises grid > 1 and a partial last block.
    B2 = 41
    x2 = jax.random.normal(jax.random.PRNGKey(1), (B2, 1, 6, 6), jnp.float32)
    out2 = jax.block_until_ready(cembedder_ml(x2, dev_params, batch_tile=16))
    ref2 = ref_forward_bf16(x2, params_bf16)
    assert out2.shape == (B2, 1, EMBED_DIM)
    assert jnp.allclose(out2, ref2, rtol=2e-3, atol=2e-3), "mismatch on ragged multi-tile batch"

    print("KERNEL_OK")
</pallas_src>

<mosaic_0001>
module attributes {stable_mosaic.version = 11 : i64} {
  func.func @_cembedder_ml_kernel(%arg0: i32, %arg1: memref<2x36xbf16, #tpu.memory_space<vmem>>, %arg2: memref<36x128xbf16, #tpu.memory_space<vmem>>, %arg3: memref<1x128xbf16, #tpu.memory_space<vmem>>, %arg4: memref<128x256xbf16, #tpu.memory_space<vmem>>, %arg5: memref<1x256xbf16, #tpu.memory_space<vmem>>, %arg6: memref<256x512xbf16, #tpu.memory_space<vmem>>, %arg7: memref<1x512xbf16, #tpu.memory_space<vmem>>, %arg8: memref<512x1024xbf16, #tpu.memory_space<vmem>>, %arg9: memref<1x1024xbf16, #tpu.memory_space<vmem>>, %arg10: memref<1024x256xbf16, #tpu.memory_space<vmem>>, %arg11: memref<1x256xbf16, #tpu.memory_space<vmem>>, %arg12: memref<2x256xf32, #tpu.memory_space<vmem>>) attributes {dimension_semantics = [#tpu.dimension_semantics<parallel>], iteration_bounds = array<i64: 1>, scalar_prefetch = 0 : i64, scratch_operands = 0 : i64, tpu.core_type = #tpu.core_type<tc>, window_params = [{transform_indices = @transform_0, window_bounds = array<i64: 2, 36>}, {pipeline_mode = #tpu.pipeline_mode<synchronous>, transform_indices = @transform_1, window_bounds = array<i64: 36, 128>}, {pipeline_mode = #tpu.pipeline_mode<synchronous>, transform_indices = @transform_2, window_bounds = array<i64: 1, 128>}, {pipeline_mode = #tpu.pipeline_mode<synchronous>, transform_indices = @transform_3, window_bounds = array<i64: 128, 256>}, {pipeline_mode = #tpu.pipeline_mode<synchronous>, transform_indices = @transform_4, window_bounds = array<i64: 1, 256>}, {pipeline_mode = #tpu.pipeline_mode<synchronous>, transform_indices = @transform_5, window_bounds = array<i64: 256, 512>}, {pipeline_mode = #tpu.pipeline_mode<synchronous>, transform_indices = @transform_6, window_bounds = array<i64: 1, 512>}, {pipeline_mode = #tpu.pipeline_mode<synchronous>, transform_indices = @transform_7, window_bounds = array<i64: 512, 1024>}, {pipeline_mode = #tpu.pipeline_mode<synchronous>, transform_indices = @transform_8, window_bounds = array<i64: 1, 1024>}, {pipeline_mode = #tpu.pipeline_mode<synchronous>, transform_indices = @transform_9, window_bounds = array<i64: 1024, 256>}, {pipeline_mode = #tpu.pipeline_mode<synchronous>, transform_indices = @transform_10, window_bounds = array<i64: 1, 256>}, {transform_indices = @transform_11, window_bounds = array<i64: 2, 256>}]} {
    %c0 = arith.constant 0 : index
    %c0_0 = arith.constant 0 : index
    %0 = vector.load %arg1[%c0, %c0_0] : memref<2x36xbf16, #tpu.memory_space<vmem>>, vector<2x36xbf16>
    %c0_1 = arith.constant 0 : index
    %c0_2 = arith.constant 0 : index
    %1 = vector.load %arg2[%c0_1, %c0_2] : memref<36x128xbf16, #tpu.memory_space<vmem>>, vector<36x128xbf16>
    %cst = arith.constant dense<0.000000e+00> : vector<2x128xf32>
    %2 = tpu.matmul %0, %1, %cst {dimension_numbers = #tpu.dot_dimension_numbers<[1], [0], [0], [1], [0, 0, 1, 1], [], []>} : vector<2x36xbf16>, vector<36x128xbf16>, vector<2x128xf32> -> vector<2x128xf32>
    %c0_3 = arith.constant 0 : index
    %c0_4 = arith.constant 0 : index
    %3 = vector.load %arg3[%c0_3, %c0_4] : memref<1x128xbf16, #tpu.memory_space<vmem>>, vector<1x128xbf16>
    %4 = arith.extf %3 : vector<1x128xbf16> to vector<1x128xf32>
    %5 = vector.broadcast %4 : vector<1x128xf32> to vector<2x128xf32>
    %6 = arith.addf %2, %5 : vector<2x128xf32>
    %cst_5 = arith.constant 0.000000e+00 : f32
    %7 = vector.broadcast %cst_5 : f32 to vector<2x128xf32>
    %8 = arith.cmpf ogt, %6, %7 : vector<2x128xf32>
    %cst_6 = arith.constant 1.000000e-01 : f32
    %9 = vector.broadcast %cst_6 : f32 to vector<2x128xf32>
    %10 = arith.mulf %9, %6 : vector<2x128xf32>
    %11 = arith.select %8, %6, %10 : vector<2x128xi1>, vector<2x128xf32>
    %12 = arith.truncf %11 : vector<2x128xf32> to vector<2x128xbf16>
    %c0_7 = arith.constant 0 : index
    %c0_8 = arith.constant 0 : index
    %13 = vector.load %arg4[%c0_7, %c0_8] : memref<128x256xbf16, #tpu.memory_space<vmem>>, vector<128x256xbf16>
    %cst_9 = arith.constant dense<0.000000e+00> : vector<2x256xf32>
    %14 = tpu.matmul %12, %13, %cst_9 {dimension_numbers = #tpu.dot_dimension_numbers<[1], [0], [0], [1], [0, 0, 1, 1], [], []>} : vector<2x128xbf16>, vector<128x256xbf16>, vector<2x256xf32> -> vector<2x256xf32>
    %c0_10 = arith.constant 0 : index
    %c0_11 = arith.constant 0 : index
    %15 = vector.load %arg5[%c0_10, %c0_11] : memref<1x256xbf16, #tpu.memory_space<vmem>>, vector<1x256xbf16>
    %16 = arith.extf %15 : vector<1x256xbf16> to vector<1x256xf32>
    %17 = vector.broadcast %16 : vector<1x256xf32> to vector<2x256xf32>
    %18 = arith.addf %14, %17 : vector<2x256xf32>
    %cst_12 = arith.constant 0.000000e+00 : f32
    %19 = vector.broadcast %cst_12 : f32 to vector<2x256xf32>
    %20 = arith.cmpf ogt, %18, %19 : vector<2x256xf32>
    %cst_13 = arith.constant 1.000000e-01 : f32
    %21 = vector.broadcast %cst_13 : f32 to vector<2x256xf32>
    %22 = arith.mulf %21, %18 : vector<2x256xf32>
    %23 = arith.select %20, %18, %22 : vector<2x256xi1>, vector<2x256xf32>
    %24 = arith.truncf %23 : vector<2x256xf32> to vector<2x256xbf16>
    %c0_14 = arith.constant 0 : index
    %c0_15 = arith.constant 0 : index
    %25 = vector.load %arg6[%c0_14, %c0_15] : memref<256x512xbf16, #tpu.memory_space<vmem>>, vector<256x512xbf16>
    %cst_16 = arith.constant dense<0.000000e+00> : vector<2x512xf32>
    %26 = tpu.matmul %24, %25, %cst_16 {dimension_numbers = #tpu.dot_dimension_numbers<[1], [0], [0], [1], [0, 0, 1, 1], [], []>} : vector<2x256xbf16>, vector<256x512xbf16>, vector<2x512xf32> -> vector<2x512xf32>
    %c0_17 = arith.constant 0 : index
    %c0_18 = arith.constant 0 : index
    %27 = vector.load %arg7[%c0_17, %c0_18] : memref<1x512xbf16, #tpu.memory_space<vmem>>, vector<1x512xbf16>
    %28 = arith.extf %27 : vector<1x512xbf16> to vector<1x512xf32>
    %29 = vector.broadcast %28 : vector<1x512xf32> to vector<2x512xf32>
    %30 = arith.addf %26, %29 : vector<2x512xf32>
    %cst_19 = arith.constant 0.000000e+00 : f32
    %31 = vector.broadcast %cst_19 : f32 to vector<2x512xf32>
    %32 = arith.cmpf ogt, %30, %31 : vector<2x512xf32>
    %cst_20 = arith.constant 1.000000e-01 : f32
    %33 = vector.broadcast %cst_20 : f32 to vector<2x512xf32>
    %34 = arith.mulf %33, %30 : vector<2x512xf32>
    %35 = arith.select %32, %30, %34 : vector<2x512xi1>, vector<2x512xf32>
    %36 = arith.truncf %35 : vector<2x512xf32> to vector<2x512xbf16>
    %c0_21 = arith.constant 0 : index
    %c0_22 = arith.constant 0 : index
    %37 = vector.load %arg8[%c0_21, %c0_22] : memref<512x1024xbf16, #tpu.memory_space<vmem>>, vector<512x1024xbf16>
    %cst_23 = arith.constant dense<0.000000e+00> : vector<2x1024xf32>
    %38 = tpu.matmul %36, %37, %cst_23 {dimension_numbers = #tpu.dot_dimension_numbers<[1], [0], [0], [1], [0, 0, 1, 1], [], []>} : vector<2x512xbf16>, vector<512x1024xbf16>, vector<2x1024xf32> -> vector<2x1024xf32>
    %c0_24 = arith.constant 0 : index
    %c0_25 = arith.constant 0 : index
    %39 = vector.load %arg9[%c0_24, %c0_25] : memref<1x1024xbf16, #tpu.memory_space<vmem>>, vector<1x1024xbf16>
    %40 = arith.extf %39 : vector<1x1024xbf16> to vector<1x1024xf32>
    %41 = vector.broadcast %40 : vector<1x1024xf32> to vector<2x1024xf32>
    %42 = arith.addf %38, %41 : vector<2x1024xf32>
    %cst_26 = arith.constant 5.000000e-01 : f32
    %43 = vector.broadcast %cst_26 : f32 to vector<2x1024xf32>
    %44 = arith.mulf %43, %42 : vector<2x1024xf32>
    %45 = math.tanh %44 : vector<2x1024xf32>
    %cst_27 = arith.constant 1.000000e+00 : f32
    %46 = vector.broadcast %cst_27 : f32 to vector<2x1024xf32>
    %47 = arith.addf %45, %46 : vector<2x1024xf32>
    %cst_28 = arith.constant 5.000000e-01 : f32
    %48 = vector.broadcast %cst_28 : f32 to vector<2x1024xf32>
    %49 = arith.mulf %48, %47 : vector<2x1024xf32>
    %50 = arith.truncf %49 : vector<2x1024xf32> to vector<2x1024xbf16>
    %c0_29 = arith.constant 0 : index
    %c0_30 = arith.constant 0 : index
    %51 = vector.load %arg10[%c0_29, %c0_30] : memref<1024x256xbf16, #tpu.memory_space<vmem>>, vector<1024x256xbf16>
    %cst_31 = arith.constant dense<0.000000e+00> : vector<2x256xf32>
    %52 = tpu.matmul %50, %51, %cst_31 {dimension_numbers = #tpu.dot_dimension_numbers<[1], [0], [0], [1], [0, 0, 1, 1], [], []>} : vector<2x1024xbf16>, vector<1024x256xbf16>, vector<2x256xf32> -> vector<2x256xf32>
    %c0_32 = arith.constant 0 : index
    %c0_33 = arith.constant 0 : index
    %53 = vector.load %arg11[%c0_32, %c0_33] : memref<1x256xbf16, #tpu.memory_space<vmem>>, vector<1x256xbf16>
    %54 = arith.extf %53 : vector<1x256xbf16> to vector<1x256xf32>
    %55 = vector.broadcast %54 : vector<1x256xf32> to vector<2x256xf32>
    %56 = arith.addf %52, %55 : vector<2x256xf32>
    %c0_34 = arith.constant 0 : index
    %c0_35 = arith.constant 0 : index
    %57 = vector.load %arg12[%c0_34, %c0_35] : memref<2x256xf32, #tpu.memory_space<vmem>>, vector<2x256xf32>
    tpu.vector_store %arg12[%c0_34, %c0_35], %56 {strides = array<i32>} : memref<2x256xf32, #tpu.memory_space<vmem>>, vector<2x256xf32>,
    return
  }
  func.func @transform_0(%arg0: i32) -> (i32, i32) {
    %c0_i32 = arith.constant 0 : i32
    %c0_i32_0 = arith.constant 0 : i32
    return %arg0, %c0_i32 : i32, i32
  }
  func.func @transform_1(%arg0: i32) -> (i32, i32) {
    %c0_i32 = arith.constant 0 : i32
    %c0_i32_0 = arith.constant 0 : i32
    %c0_i32_1 = arith.constant 0 : i32
    return %c0_i32, %c0_i32_0 : i32, i32
  }
  func.func @transform_2(%arg0: i32) -> (i32, i32) {
    %c0_i32 = arith.constant 0 : i32
    %c0_i32_0 = arith.constant 0 : i32
    %c0_i32_1 = arith.constant 0 : i32
    return %c0_i32, %c0_i32_0 : i32, i32
  }
  func.func @transform_3(%arg0: i32) -> (i32, i32) {
    %c0_i32 = arith.constant 0 : i32
    %c0_i32_0 = arith.constant 0 : i32
    %c0_i32_1 = arith.constant 0 : i32
    return %c0_i32, %c0_i32_0 : i32, i32
  }
  func.func @transform_4(%arg0: i32) -> (i32, i32) {
    %c0_i32 = arith.constant 0 : i32
    %c0_i32_0 = arith.constant 0 : i32
    %c0_i32_1 = arith.constant 0 : i32
    return %c0_i32, %c0_i32_0 : i32, i32
  }
  func.func @transform_5(%arg0: i32) -> (i32, i32) {
    %c0_i32 = arith.constant 0 : i32
    %c0_i32_0 = arith.constant 0 : i32
    %c0_i32_1 = arith.constant 0 : i32
    return %c0_i32, %c0_i32_0 : i32, i32
  }
  func.func @transform_6(%arg0: i32) -> (i32, i32) {
    %c0_i32 = arith.constant 0 : i32
    %c0_i32_0 = arith.constant 0 : i32
    %c0_i32_1 = arith.constant 0 : i32
    return %c0_i32, %c0_i32_0 : i32, i32
  }
  func.func @transform_7(%arg0: i32) -> (i32, i32) {
    %c0_i32 = arith.constant 0 : i32
    %c0_i32_0 = arith.constant 0 : i32
    %c0_i32_1 = arith.constant 0 : i32
    return %c0_i32, %c0_i32_0 : i32, i32
  }
  func.func @transform_8(%arg0: i32) -> (i32, i32) {
    %c0_i32 = arith.constant 0 : i32
    %c0_i32_0 = arith.constant 0 : i32
    %c0_i32_1 = arith.constant 0 : i32
    return %c0_i32, %c0_i32_0 : i32, i32
  }
  func.func @transform_9(%arg0: i32) -> (i32, i32) {
    %c0_i32 = arith.constant 0 : i32
    %c0_i32_0 = arith.constant 0 : i32
    %c0_i32_1 = arith.constant 0 : i32
    return %c0_i32, %c0_i32_0 : i32, i32
  }
  func.func @transform_10(%arg0: i32) -> (i32, i32) {
    %c0_i32 = arith.constant 0 : i32
    %c0_i32_0 = arith.constant 0 : i32
    %c0_i32_1 = arith.constant 0 : i32
    return %c0_i32, %c0_i32_0 : i32, i32
  }
  func.func @transform_11(%arg0: i32) -> (i32, i32) {
    %c0_i32 = arith.constant 0 : i32
    %c0_i32_0 = arith.constant 0 : i32
    return %arg0, %c0_i32 : i32, i32
  }
}

</mosaic_0001>

<llo_original>
// kernel: tpu_custom_call.1
$region0: #{tpu_custom_call.1}
  #allocation0 [shape = 'u32[]', space=smem, size = 0x4, offset = 0x4, fixed_abs, tag = 'smem constant byte address 0x4 - core index']
  #allocation1 [shape = 'u32[72,128]{1,0:T(1,128)}', space=vmem, size = 0x9000, scoped, tag = 'internal scratch']
  %s0 = inlined_call_operand.hbm [shape: bf16[2,36], index: 0, kind: input, shape index: {}]
  %s1 = inlined_call_operand.hbm [shape: bf16[36,128], index: 1, kind: input, shape index: {}]
  %s2 = inlined_call_operand.hbm [shape: bf16[1,128], index: 2, kind: input, shape index: {}]
  %s3 = inlined_call_operand.hbm [shape: bf16[128,256], index: 3, kind: input, shape index: {}]
  %s4 = inlined_call_operand.hbm [shape: bf16[1,256], index: 4, kind: input, shape index: {}]
  %s5 = inlined_call_operand.hbm [shape: bf16[256,512], index: 5, kind: input, shape index: {}]
  %s6 = inlined_call_operand.vmem [shape: bf16[1,512], index: 6, kind: input, shape index: {}]
  %s7 = inlined_call_operand.hbm [shape: bf16[512,1024], index: 7, kind: input, shape index: {}]
  %s8 = inlined_call_operand.hbm [shape: bf16[1,1024], index: 8, kind: input, shape index: {}]
  %s9 = inlined_call_operand.hbm [shape: bf16[1024,256], index: 9, kind: input, shape index: {}]
  %s10 = inlined_call_operand.vmem [shape: bf16[1,256], index: 10, kind: input, shape index: {}]
  %s11 = inlined_call_operand.hbm [shape: f32[2,256], index: 11, kind: output, shape index: {}]
  %s12 = sld [smem:[#allocation0]]
  $region90: #{tpu_custom_call.1} parent=0
    _
  %s14 = ssub.s32 1, %s12
  %s15 = scalar_select 0, %s14, %s12
  $region1: #{tpu_custom_call.1} parent=0
    #allocation2 [shape = 'u8[512]{0}', space=vmem, size = 0x400, scoped, tag = 'input window, operand 0, single buffered']
    #allocation3 [shape = 's32[1]{0}', space=sflag, size = 0x4, scoped, tag = 'scoped memory for tpu_custom_call.1']
    #allocation4 [shape = 's32[1]{0}', space=sflag, size = 0x4, scoped, tag = 'scoped memory for tpu_custom_call.1']
    #allocation5 [shape = 'u8[10240]{0}', space=vmem, size = 0x2800, scoped, tag = 'input window, operand 1, single buffered']
    #allocation6 [shape = 's32[1]{0}', space=sflag, size = 0x4, scoped, tag = 'scoped memory for tpu_custom_call.1']
    #allocation7 [shape = 'u8[512]{0}', space=vmem, size = 0x400, scoped, tag = 'input window, operand 2, single buffered']
    #allocation8 [shape = 'u8[65536]{0}', space=vmem, size = 0x10000, scoped, tag = 'input window, operand 3, single buffered']
    #allocation9 [shape = 's32[1]{0}', space=sflag, size = 0x4, scoped, tag = 'scoped memory for tpu_custom_call.1']
    #allocation10 [shape = 'u8[1024]{0}', space=vmem, size = 0x400, scoped, tag = 'input window, operand 4, single buffered']
    #allocation11 [shape = 'u8[262144]{0}', space=vmem, size = 0x40000, scoped, tag = 'input window, operand 5, single buffered']
    #allocation12 [shape = 's32[1]{0}', space=sflag, size = 0x4, scoped, tag = 'scoped memory for tpu_custom_call.1']
    #allocation13 [shape = 'u8[1048576]{0}', space=vmem, size = 0x100000, scoped, tag = 'input window, operand 7, single buffered']
    #allocation14 [shape = 'u8[4096]{0}', space=vmem, size = 0x1000, scoped, tag = 'input window, operand 8, single buffered']
    #allocation15 [shape = 's32[1]{0}', space=sflag, size = 0x4, scoped, tag = 'scoped memory for tpu_custom_call.1']
    #allocation16 [shape = 'u8[524288]{0}', space=vmem, size = 0x80000, scoped, tag = 'input window, operand 9, single buffered']
    #allocation17 [shape = 'u8[2048]{0}', space=vmem, size = 0x800, scoped, tag = 'output window, operand 0, single buffered']
    %16 = vsyncpa [#allocation3], 0
    %17 = vsyncpa [#allocation6], 0
    %18 = vsyncpa [#allocation9], 0
    %19 = vsyncpa [#allocation12], 0
    %20 = vsyncpa [#allocation15], 0
    %21 = vsyncpa [#allocation4], 0
    // Predicated region
    $region2: #{tpu_custom_call.1} parent=1 // pred_check
      _
    $region3: #{tpu_custom_call.1} parent=1 // pred_check_branch
      %23 = sbr.rel (0) target = $region5
    $region4: #{tpu_custom_call.1} parent=1 // pred_region
      %25 = vsyncadd [#allocation3], 0
      %s27 = sshll.u32 %s0, 4
      %s28 = int_to_ptr.hbm [resolvable:$true] %s27
      %s29 = sshll.u32 [#allocation2], 4
      %s30 = int_to_ptr.vmem [resolvable:$true] %s29
      %32 = dma.hbm_to_vmem [thread:$0]  %s28, 16, %s30, [#allocation3]
    $region5: #{tpu_custom_call.1} parent=1 // pred_fallthru
      _
    // Predicated region
    $region6: #{tpu_custom_call.1} parent=1 // pred_check
      _
    $region7: #{tpu_custom_call.1} parent=1 // pred_check_branch
      %34 = sbr.rel (0) target = $region9
    $region8: #{tpu_custom_call.1} parent=1 // pred_region
      %36 = vsyncadd [#allocation6], 0
      %s37 = sshll.u32 %s1, 4
      %s38 = int_to_ptr.hbm [resolvable:$true] %s37
      %s39 = sshll.u32 [#allocation5], 4
      %s40 = int_to_ptr.vmem [resolvable:$true] %s39
      %45 = dma.hbm_to_vmem [thread:$0]  %s38, 320, %s40, [#allocation6], 64, 64, 4
    $region9: #{tpu_custom_call.1} parent=1 // pred_fallthru
      _
    // Predicated region
    $region10: #{tpu_custom_call.1} parent=1 // pred_check
      _
    $region11: #{tpu_custom_call.1} parent=1 // pred_check_branch
      %47 = sbr.rel (0) target = $region13
    $region12: #{tpu_custom_call.1} parent=1 // pred_region
      %49 = vsyncadd [#allocation6], 0
      %s51 = sshll.u32 %s2, 4
      %s52 = int_to_ptr.hbm [resolvable:$true] %s51
      %s53 = sshll.u32 [#allocation7], 4
      %s54 = int_to_ptr.vmem [resolvable:$true] %s53
      %56 = dma.hbm_to_vmem [thread:$0]  %s52, 16, %s54, [#allocation6]
    $region13: #{tpu_custom_call.1} parent=1 // pred_fallthru
      _
    // Predicated region
    $region14: #{tpu_custom_call.1} parent=1 // pred_check
      _
    $region15: #{tpu_custom_call.1} parent=1 // pred_check_branch
      %58 = sbr.rel (0) target = $region17
    $region16: #{tpu_custom_call.1} parent=1 // pred_region
      %60 = vsyncadd [#allocation9], 0
      %s61 = sshll.u32 %s3, 4
      %s62 = int_to_ptr.hbm [resolvable:$true] %s61
      %s63 = sshll.u32 [#allocation8], 4
      %s64 = int_to_ptr.vmem [resolvable:$true] %s63
      %69 = dma.hbm_to_vmem [thread:$0]  %s62, 2048, %s64, [#allocation9], 128, 128, 8
    $region17: #{tpu_custom_call.1} parent=1 // pred_fallthru
      _
    // Predicated region
    $region18: #{tpu_custom_call.1} parent=1 // pred_check
      _
    $region19: #{tpu_custom_call.1} parent=1 // pred_check_branch
      %71 = sbr.rel (0) target = $region21
    $region20: #{tpu_custom_call.1} parent=1 // pred_region
      %73 = vsyncadd [#allocation9], 0
      %s75 = sshll.u32 %s4, 4
      %s76 = int_to_ptr.hbm [resolvable:$true] %s75
      %s77 = sshll.u32 [#allocation10], 4
      %s78 = int_to_ptr.vmem [resolvable:$true] %s77
      %80 = dma.hbm_to_vmem [thread:$0]  %s76, 32, %s78, [#allocation9]
    $region21: #{tpu_custom_call.1} parent=1 // pred_fallthru
      _
    // Predicated region
    $region22: #{tpu_custom_call.1} parent=1 // pred_check
      _
    $region23: #{tpu_custom_call.1} parent=1 // pred_check_branch
      %82 = sbr.rel (0) target = $region25
    $region24: #{tpu_custom_call.1} parent=1 // pred_region
      %84 = vsyncadd [#allocation12], 0
      %s85 = sshll.u32 %s5, 4
      %s86 = int_to_ptr.hbm [resolvable:$true] %s85
      %s87 = sshll.u32 [#allocation11], 4
      %s88 = int_to_ptr.vmem [resolvable:$true] %s87
      %93 = dma.hbm_to_vmem [thread:$0]  %s86, 8192, %s88, [#allocation12], 256, 256, 16
    $region25: #{tpu_custom_call.1} parent=1 // pred_fallthru
      _
    // Predicated region
    $region26: #{tpu_custom_call.1} parent=1 // pred_check
      _
    $region27: #{tpu_custom_call.1} parent=1 // pred_check_branch
      %95 = sbr.rel (0) target = $region29
    $region28: #{tpu_custom_call.1} parent=1 // pred_region
      _
    $region29: #{tpu_custom_call.1} parent=1 // pred_fallthru
      _
    // Predicated region
    $region30: #{tpu_custom_call.1} parent=1 // pred_check
      _
    $region31: #{tpu_custom_call.1} parent=1 // pred_check_branch
      %97 = sbr.rel (0) target = $region33
    $region32: #{tpu_custom_call.1} parent=1 // pred_region
      %99 = vsyncadd [#allocation12], 0
      %s100 = sshll.u32 %s7, 4
      %s101 = int_to_ptr.hbm [resolvable:$true] %s100
      %s102 = sshll.u32 [#allocation13], 4
      %s103 = int_to_ptr.vmem [resolvable:$true] %s102
      %108 = dma.hbm_to_vmem [thread:$0]  %s101, 32768, %s103, [#allocation12], 512, 512, 32
    $region33: #{tpu_custom_call.1} parent=1 // pred_fallthru
      _
    // Predicated region
    $region34: #{tpu_custom_call.1} parent=1 // pred_check
      _
    $region35: #{tpu_custom_call.1} parent=1 // pred_check_branch
      %110 = sbr.rel (0) target = $region37
    $region36: #{tpu_custom_call.1} parent=1 // pred_region
      %112 = vsyncadd [#allocation15], 0
      %s114 = sshll.u32 %s8, 4
      %s115 = int_to_ptr.hbm [resolvable:$true] %s114
      %s116 = sshll.u32 [#allocation14], 4
      %s117 = int_to_ptr.vmem [resolvable:$true] %s116
      %119 = dma.hbm_to_vmem [thread:$0]  %s115, 128, %s117, [#allocation15]
    $region37: #{tpu_custom_call.1} parent=1 // pred_fallthru
      _
    // Predicated region
    $region38: #{tpu_custom_call.1} parent=1 // pred_check
      _
    $region39: #{tpu_custom_call.1} parent=1 // pred_check_branch
      %121 = sbr.rel (0) target = $region41
    $region40: #{tpu_custom_call.1} parent=1 // pred_region
      %123 = vsyncadd [#allocation15], 0
      %s124 = sshll.u32 %s9, 4
      %s125 = int_to_ptr.hbm [resolvable:$true] %s124
      %s126 = sshll.u32 [#allocation16], 4
      %s127 = int_to_ptr.vmem [resolvable:$true] %s126
      %132 = dma.hbm_to_vmem [thread:$0]  %s125, 16384, %s127, [#allocation15], 128, 128, 8
    $region41: #{tpu_custom_call.1} parent=1 // pred_fallthru
      _
    // Predicated region
    $region42: #{tpu_custom_call.1} parent=1 // pred_check
      _
    $region43: #{tpu_custom_call.1} parent=1 // pred_check_branch
      %134 = sbr.rel (0) target = $region45
    $region44: #{tpu_custom_call.1} parent=1 // pred_region
      _
    $region45: #{tpu_custom_call.1} parent=1 // pred_fallthru
      _
    // Predicated region
    $region46: #{tpu_custom_call.1} parent=1 // pred_check
      _
    $region47: #{tpu_custom_call.1} parent=1 // pred_check_branch
      %136 = sbr.rel (0) target = $region49
    $region48: #{tpu_custom_call.1} parent=1 // pred_region
      %138 = dma.done [#allocation3], 16
    $region49: #{tpu_custom_call.1} parent=1 // pred_fallthru
      _
    // Predicated region
    $region50: #{tpu_custom_call.1} parent=1 // pred_check
      _
    $region51: #{tpu_custom_call.1} parent=1 // pred_check_branch
      %140 = sbr.rel (0) target = $region53
    $region52: #{tpu_custom_call.1} parent=1 // pred_region
      %142 = dma.done [#allocation6], 320
    $region53: #{tpu_custom_call.1} parent=1 // pred_fallthru
      _
    // Predicated region
    $region54: #{tpu_custom_call.1} parent=1 // pred_check
      _
    $region55: #{tpu_custom_call.1} parent=1 // pred_check_branch
      %144 = sbr.rel (0) target = $region57
    $region56: #{tpu_custom_call.1} parent=1 // pred_region
      %146 = dma.done [#allocation6], 16
    $region57: #{tpu_custom_call.1} parent=1 // pred_fallthru
      _
    // Predicated region
    $region58: #{tpu_custom_call.1} parent=1 // pred_check
      _
    $region59: #{tpu_custom_call.1} parent=1 // pred_check_branch
      %148 = sbr.rel (0) target = $region61
    $region60: #{tpu_custom_call.1} parent=1 // pred_region
      %150 = dma.done [#allocation9], 2048
    $region61: #{tpu_custom_call.1} parent=1 // pred_fallthru
      _
    // Predicated region
    $region62: #{tpu_custom_call.1} parent=1 // pred_check
      _
    $region63: #{tpu_custom_call.1} parent=1 // pred_check_branch
      %152 = sbr.rel (0) target = $region65
    $region64: #{tpu_custom_call.1} parent=1 // pred_region
      %154 = dma.done [#allocation9], 32
    $region65: #{tpu_custom_call.1} parent=1 // pred_fallthru
      _
    // Predicated region
    $region66: #{tpu_custom_call.1} parent=1 // pred_check
      _
    $region67: #{tpu_custom_call.1} parent=1 // pred_check_branch
      %156 = sbr.rel (0) target = $region69
    $region68: #{tpu_custom_call.1} parent=1 // pred_region
      %158 = dma.done [#allocation12], 8192
    $region69: #{tpu_custom_call.1} parent=1 // pred_fallthru
      _
    // Predicated region
    $region70: #{tpu_custom_call.1} parent=1 // pred_check
      _
    $region71: #{tpu_custom_call.1} parent=1 // pred_check_branch
      %160 = sbr.rel (0) target = $region73
    $region72: #{tpu_custom_call.1} parent=1 // pred_region
      %162 = dma.done [#allocation12], 32768
    $region73: #{tpu_custom_call.1} parent=1 // pred_fallthru
      _
    // Predicated region
    $region74: #{tpu_custom_call.1} parent=1 // pred_check
      _
    $region75: #{tpu_custom_call.1} parent=1 // pred_check_branch
      %164 = sbr.rel (0) target = $region77
    $region76: #{tpu_custom_call.1} parent=1 // pred_region
      %166 = dma.done [#allocation15], 128
    $region77: #{tpu_custom_call.1} parent=1 // pred_fallthru
      _
    // Predicated region
    $region78: #{tpu_custom_call.1} parent=1 // pred_check
      _
    $region79: #{tpu_custom_call.1} parent=1 // pred_check_branch
      %168 = sbr.rel (0) target = $region81
    $region80: #{tpu_custom_call.1} parent=1 // pred_region
      %170 = dma.done [#allocation15], 16384
    $region81: #{tpu_custom_call.1} parent=1 // pred_fallthru
      _
    %v172 = vld [vmem:[#allocation2] sm:$0x1]
    %v173 = vld [vmem:[#allocation5] sm:$0xf]
    %v174 = vld [vmem:[#allocation5 + $0x4] sm:$0xf]
    %v175 = vld [vmem:[#allocation5 + $0x8] sm:$0xf]
    %v176 = vld [vmem:[#allocation5 + $0xc] sm:$0xf]
    %v177 = vld [vmem:[#allocation5 + $0x10] sm:$0x3]
    %v178 = vld [vmem:[#allocation7] sm:$0x1]
    %v179 = vunpack.c.l.bf16 %v178
    %v180 = vperm.slane %v179, 0
    %v186 = vunpack.c.l.b16 %v173
    %v187 = vunpack.c.l.b16 %v174
    %v188 = vunpack.c.l.b16 %v175
    %v189 = vunpack.c.l.b16 %v176
    %v190 = vunpack.c.l.b16 %v177
    %v191 = vpack.c.b16 %v187, %v186
    %v192 = vpack.c.b16 %v189, %v188
    %v193 = vpack.c.b16 %v190, %v190
    %vm196 = vcmask 293888
    %v198 = vsel %vm196, %v172, 0
    %vm200 = vcmask 1041408
    %v202 = vsel %vm200, %v193, 0
    %204 = vmatpush.bf16.msra.mxu0 0
    %205 = vmatpush.bf16.msra.mxu0 0
    %206 = vmatpush.bf16.msra.mxu0 0
    %207 = vmatpush.bf16.msra.mxu0 0
    %208 = vmatpush.bf16.msra.mxu0 0
    %209 = vmatpush.bf16.msra.mxu0 %v202
    %210 = vmatpush.bf16.msra.mxu0 %v192
    %211 = vmatpush.bf16.msra.mxu0 %v191
    %212 = vmatmul.bf16.gmra.mxu0 %v198
    %v213 = vpop.f32.mrf.mxu0
    %v214 = vadd.f32 %v180, %v213
    %v215 = vpop.f32.mrf.mxu0
    %216 = vdwg.mxu0
    %vm217 = vcmp.gt.f32.partialorder %v214, 0.0
    %v218 = vmul.f32 %v214, 0.1
    %v219 = vsel %vm217, %v214, %v218
    %v220 = vpack.c.bf16 %v219, %v219
    %v221 = vld [vmem:[#allocation8] sm:$0xff]
    %v222 = vld [vmem:[#allocation8 + $0x8] sm:$0xff]
    %v223 = vld [vmem:[#allocation8 + $0x10] sm:$0xff]
    %v224 = vld [vmem:[#allocation8 + $0x18] sm:$0xff]
    %v225 = vld [vmem:[#allocation8 + $0x20] sm:$0xff]
    %v226 = vld [vmem:[#allocation8 + $0x28] sm:$0xff]
    %v227 = vld [vmem:[#allocation8 + $0x30] sm:$0xff]
    %v228 = vld [vmem:[#allocation8 + $0x38] sm:$0xff]
    %v229 = vld [vmem:[#allocation8 + $0x40] sm:$0xff]
    %v230 = vld [vmem:[#allocation8 + $0x48] sm:$0xff]
    %v231 = vld [vmem:[#allocation8 + $0x50] sm:$0xff]
    %v232 = vld [vmem:[#allocation8 + $0x58] sm:$0xff]
    %v233 = vld [vmem:[#allocation8 + $0x60] sm:$0xff]
    %v234 = vld [vmem:[#allocation8 + $0x68] sm:$0xff]
    %v235 = vld [vmem:[#allocation8 + $0x70] sm:$0xff]
    %v236 = vld [vmem:[#allocation8 + $0x78] sm:$0xff]
    %v237 = vld [vmem:[#allocation10] sm:$0x3]
    %v238 = vunpack.c.l.bf16 %v237
    %v240 = vperm.slane %v238, 0
    %v241 = vperm.slane %v238, 2
    %v244 = vperm.slane %v240, 0
    %v245 = vperm.slane %v241, 0
    %v262 = vunpack.c.l.b16 %v221
    %v263 = vunpack.c.h.b16 %v221
    %v264 = vunpack.c.l.b16 %v222
    %v265 = vunpack.c.h.b16 %v222
    %v266 = vunpack.c.l.b16 %v223
    %v267 = vunpack.c.h.b16 %v223
    %v268 = vunpack.c.l.b16 %v224
    %v269 = vunpack.c.h.b16 %v224
    %v270 = vunpack.c.l.b16 %v225
    %v271 = vunpack.c.h.b16 %v225
    %v272 = vunpack.c.l.b16 %v226
    %v273 = vunpack.c.h.b16 %v226
    %v274 = vunpack.c.l.b16 %v227
    %v275 = vunpack.c.h.b16 %v227
    %v276 = vunpack.c.l.b16 %v228
    %v277 = vunpack.c.h.b16 %v228
    %v278 = vunpack.c.l.b16 %v229
    %v279 = vunpack.c.h.b16 %v229
    %v280 = vunpack.c.l.b16 %v230
    %v281 = vunpack.c.h.b16 %v230
    %v282 = vunpack.c.l.b16 %v231
    %v283 = vunpack.c.h.b16 %v231
    %v284 = vunpack.c.l.b16 %v232
    %v285 = vunpack.c.h.b16 %v232
    %v286 = vunpack.c.l.b16 %v233
    %v287 = vunpack.c.h.b16 %v233
    %v288 = vunpack.c.l.b16 %v234
    %v289 = vunpack.c.h.b16 %v234
    %v290 = vunpack.c.l.b16 %v235
    %v291 = vunpack.c.h.b16 %v235
    %v292 = vunpack.c.l.b16 %v236
    %v293 = vunpack.c.h.b16 %v236
    %v294 = vpack.c.b16 %v264, %v262
    %v295 = vpack.c.b16 %v265, %v263
    %v296 = vpack.c.b16 %v268, %v266
    %v297 = vpack.c.b16 %v269, %v267
    %v298 = vpack.c.b16 %v272, %v270
    %v299 = vpack.c.b16 %v273, %v271
    %v300 = vpack.c.b16 %v276, %v274
    %v301 = vpack.c.b16 %v277, %v275
    %v302 = vpack.c.b16 %v280, %v278
    %v303 = vpack.c.b16 %v281, %v279
    %v304 = vpack.c.b16 %v284, %v282
    %v305 = vpack.c.b16 %v285, %v283
    %v306 = vpack.c.b16 %v288, %v286
    %v307 = vpack.c.b16 %v289, %v287
    %v308 = vpack.c.b16 %v292, %v290
    %v309 = vpack.c.b16 %v293, %v291
    %326 = vmatpush.bf16.msra.mxu0 %v308
    %327 = vmatpush.bf16.msra.mxu0 %v306
    %328 = vmatpush.bf16.msra.mxu0 %v304
    %329 = vmatpush.bf16.msra.mxu0 %v302
    %330 = vmatpush.bf16.msra.mxu0 %v300
    %331 = vmatpush.bf16.msra.mxu0 %v298
    %332 = vmatpush.bf16.msra.mxu0 %v296
    %333 = vmatpush.bf16.msra.mxu0 %v294
    %334 = vmatmul.bf16.gmra.mxu0 %v220
    %v335 = vpop.f32.mrf.mxu0
    %v336 = vadd.f32 %v244, %v335
    %v337 = vpop.f32.mrf.mxu0
    %338 = vdwg.mxu0
    %339 = vmatpush.bf16.msra.mxu0 %v309
    %340 = vmatpush.bf16.msra.mxu0 %v307
    %341 = vmatpush.bf16.msra.mxu0 %v305
    %342 = vmatpush.bf16.msra.mxu0 %v303
    %343 = vmatpush.bf16.msra.mxu0 %v301
    %344 = vmatpush.bf16.msra.mxu0 %v299
    %345 = vmatpush.bf16.msra.mxu0 %v297
    %346 = vmatpush.bf16.msra.mxu0 %v295
    %347 = vmatmul.bf16.gmra.mxu0 %v220
    %v348 = vpop.f32.mrf.mxu0
    %v349 = vadd.f32 %v245, %v348
    %v350 = vpop.f32.mrf.mxu0
    %351 = vdwg.mxu0
    %vm352 = vcmp.gt.f32.partialorder %v336, 0.0
    %vm353 = vcmp.gt.f32.partialorder %v349, 0.0
    %v354 = vmul.f32 %v336, 0.1
    %v355 = vmul.f32 %v349, 0.1
    %v356 = vsel %vm352, %v336, %v354
    %v357 = vsel %vm353, %v349, %v355
    %v358 = vpack.c.bf16 %v356, %v356
    %v359 = vpack.c.bf16 %v357, %v357
    %v360 = vld [vmem:[#allocation11] sm:$0xff]
    %v361 = vld [vmem:[#allocation11 + $0x8] sm:$0xff]
    %v362 = vld [vmem:[#allocation11 + $0x10] sm:$0xff]
    %v363 = vld [vmem:[#allocation11 + $0x18] sm:$0xff]
    %v364 = vld [vmem:[#allocation11 + $0x20] sm:$0xff]
    %v365 = vld [vmem:[#allocation11 + $0x28] sm:$0xff]
    %v366 = vld [vmem:[#allocation11 + $0x30] sm:$0xff]
    %v367 = vld [vmem:[#allocation11 + $0x38] sm:$0xff]
    %v368 = vld [vmem:[#allocation11 + $0x40] sm:$0xff]
    %v369 = vld [vmem:[#allocation11 + $0x48] sm:$0xff]
    %v370 = vld [vmem:[#allocation11 + $0x50] sm:$0xff]
    %v371 = vld [vmem:[#allocation11 + $0x58] sm:$0xff]
    %v372 = vld [vmem:[#allocation11 + $0x60] sm:$0xff]
    %v373 = vld [vmem:[#allocation11 + $0x68] sm:$0xff]
    %v374 = vld [vmem:[#allocation11 + $0x70] sm:$0xff]
    %v375 = vld [vmem:[#allocation11 + $0x78] sm:$0xff]
    %v376 = vld [vmem:[#allocation11 + $0x80] sm:$0xff]
    %v377 = vld [vmem:[#allocation11 + $0x88] sm:$0xff]
    %v378 = vld [vmem:[#allocation11 + $0x90] sm:$0xff]
    %v379 = vld [vmem:[#allocation11 + $0x98] sm:$0xff]
    %v380 = vld [vmem:[#allocation11 + $0xa0] sm:$0xff]
    %v381 = vld [vmem:[#allocation11 + $0xa8] sm:$0xff]
    %v382 = vld [vmem:[#allocation11 + $0xb0] sm:$0xff]
    %v383 = vld [vmem:[#allocation11 + $0xb8] sm:$0xff]
    %v384 = vld [vmem:[#allocation11 + $0xc0] sm:$0xff]
    %v385 = vld [vmem:[#allocation11 + $0xc8] sm:$0xff]
    %v386 = vld [vmem:[#allocation11 + $0xd0] sm:$0xff]
    %v387 = vld [vmem:[#allocation11 + $0xd8] sm:$0xff]
    %v388 = vld [vmem:[#allocation11 + $0xe0] sm:$0xff]
    %v389 = vld [vmem:[#allocation11 + $0xe8] sm:$0xff]
    %v390 = vld [vmem:[#allocation11 + $0xf0] sm:$0xff]
    %v391 = vld [vmem:[#allocation11 + $0xf8] sm:$0xff]
    %v392 = vld [vmem:[#allocation11 + $0x100] sm:$0xff]
    %v393 = vld [vmem:[#allocation11 + $0x108] sm:$0xff]
    %v394 = vld [vmem:[#allocation11 + $0x110] sm:$0xff]
    %v395 = vld [vmem:[#allocation11 + $0x118] sm:$0xff]
    %v396 = vld [vmem:[#allocation11 + $0x120] sm:$0xff]
    %v397 = vld [vmem:[#allocation11 + $0x128] sm:$0xff]
    %v398 = vld [vmem:[#allocation11 + $0x130] sm:$0xff]
    %v399 = vld [vmem:[#allocation11 + $0x138] sm:$0xff]
    %v400 = vld [vmem:[#allocation11 + $0x140] sm:$0xff]
    %v401 = vld [vmem:[#allocation11 + $0x148] sm:$0xff]
    %v402 = vld [vmem:[#allocation11 + $0x150] sm:$0xff]
    %v403 = vld [vmem:[#allocation11 + $0x158] sm:$0xff]
    %v404 = vld [vmem:[#allocation11 + $0x160] sm:$0xff]
    %v405 = vld [vmem:[#allocation11 + $0x168] sm:$0xff]
    %v406 = vld [vmem:[#allocation11 + $0x170] sm:$0xff]
    %v407 = vld [vmem:[#allocation11 + $0x178] sm:$0xff]
    %v408 = vld [vmem:[#allocation11 + $0x180] sm:$0xff]
    %v409 = vld [vmem:[#allocation11 + $0x188] sm:$0xff]
    %v410 = vld [vmem:[#allocation11 + $0x190] sm:$0xff]
    %v411 = vld [vmem:[#allocation11 + $0x198] sm:$0xff]
    %v412 = vld [vmem:[#allocation11 + $0x1a0] sm:$0xff]
    %v413 = vld [vmem:[#allocation11 + $0x1a8] sm:$0xff]
    %v414 = vld [vmem:[#allocation11 + $0x1b0] sm:$0xff]
    %v415 = vld [vmem:[#allocation11 + $0x1b8] sm:$0xff]
    %v416 = vld [vmem:[#allocation11 + $0x1c0] sm:$0xff]
    %v417 = vld [vmem:[#allocation11 + $0x1c8] sm:$0xff]
    %v418 = vld [vmem:[#allocation11 + $0x1d0] sm:$0xff]
    %v419 = vld [vmem:[#allocation11 + $0x1d8] sm:$0xff]
    %v420 = vld [vmem:[#allocation11 + $0x1e0] sm:$0xff]
    %v421 = vld [vmem:[#allocation11 + $0x1e8] sm:$0xff]
    %v422 = vld [vmem:[#allocation11 + $0x1f0] sm:$0xff]
    %v423 = vld [vmem:[#allocation11 + $0x1f8] sm:$0xff]
    %v424 = vld [vmem:[%s6] sm:$0xf]
    %v425 = vunpack.c.l.bf16 %v424
    %v427 = vperm.slane %v425, 0
    %v428 = vperm.slane %v425, 2
    %v429 = vperm.slane %v425, 4
    %v430 = vperm.slane %v425, 6
    %v435 = vperm.slane %v427, 0
    %v436 = vperm.slane %v428, 0
    %v437 = vperm.slane %v429, 0
    %v438 = vperm.slane %v430, 0
    %v503 = vunpack.c.l.b16 %v360
    %v504 = vunpack.c.h.b16 %v360
    %v505 = vunpack.c.l.b16 %v361
    %v506 = vunpack.c.h.b16 %v361
    %v507 = vunpack.c.l.b16 %v362
    %v508 = vunpack.c.h.b16 %v362
    %v509 = vunpack.c.l.b16 %v363
    %v510 = vunpack.c.h.b16 %v363
    %v511 = vunpack.c.l.b16 %v364
    %v512 = vunpack.c.h.b16 %v364
    %v513 = vunpack.c.l.b16 %v365
    %v514 = vunpack.c.h.b16 %v365
    %v515 = vunpack.c.l.b16 %v366
    %v516 = vunpack.c.h.b16 %v366
    %v517 = vunpack.c.l.b16 %v367
    %v518 = vunpack.c.h.b16 %v367
    %v519 = vunpack.c.l.b16 %v368
    %v520 = vunpack.c.h.b16 %v368
    %v521 = vunpack.c.l.b16 %v369
    %v522 = vunpack.c.h.b16 %v369
    %v523 = vunpack.c.l.b16 %v370
    %v524 = vunpack.c.h.b16 %v370
    %v525 = vunpack.c.l.b16 %v371
    %v526 = vunpack.c.h.b16 %v371
    %v527 = vunpack.c.l.b16 %v372
    %v528 = vunpack.c.h.b16 %v372
    %v529 = vunpack.c.l.b16 %v373
    %v530 = vunpack.c.h.b16 %v373
    %v531 = vunpack.c.l.b16 %v374
    %v532 = vunpack.c.h.b16 %v374
    %v533 = vunpack.c.l.b16 %v375
    %v534 = vunpack.c.h.b16 %v375
    %v535 = vunpack.c.l.b16 %v376
    %v536 = vunpack.c.h.b16 %v376
    %v537 = vunpack.c.l.b16 %v377
    %v538 = vunpack.c.h.b16 %v377
    %v539 = vunpack.c.l.b16 %v378
    %v540 = vunpack.c.h.b16 %v378
    %v541 = vunpack.c.l.b16 %v379
    %v542 = vunpack.c.h.b16 %v379
    %v543 = vunpack.c.l.b16 %v380
    %v544 = vunpack.c.h.b16 %v380
    %v545 = vunpack.c.l.b16 %v381
    %v546 = vunpack.c.h.b16 %v381
    %v547 = vunpack.c.l.b16 %v382
    %v548 = vunpack.c.h.b16 %v382
    %v549 = vunpack.c.l.b16 %v383
    %v550 = vunpack.c.h.b16 %v383
    %v551 = vunpack.c.l.b16 %v384
    %v552 = vunpack.c.h.b16 %v384
    %v553 = vunpack.c.l.b16 %v385
    %v554 = vunpack.c.h.b16 %v385
    %v555 = vunpack.c.l.b16 %v386
    %v556 = vunpack.c.h.b16 %v386
    %v557 = vunpack.c.l.b16 %v387
    %v558 = vunpack.c.h.b16 %v387
    %v559 = vunpack.c.l.b16 %v388
    %v560 = vunpack.c.h.b16 %v388
    %v561 = vunpack.c.l.b16 %v389
    %v562 = vunpack.c.h.b16 %v389
    %v563 = vunpack.c.l.b16 %v390
    %v564 = vunpack.c.h.b16 %v390
    %v565 = vunpack.c.l.b16 %v391
    %v566 = vunpack.c.h.b16 %v391
    %v567 = vunpack.c.l.b16 %v392
    %v568 = vunpack.c.h.b16 %v392
    %v569 = vunpack.c.l.b16 %v393
    %v570 = vunpack.c.h.b16 %v393
    %v571 = vunpack.c.l.b16 %v394
    %v572 = vunpack.c.h.b16 %v394
    %v573 = vunpack.c.l.b16 %v395
    %v574 = vunpack.c.h.b16 %v395
    %v575 = vunpack.c.l.b16 %v396
    %v576 = vunpack.c.h.b16 %v396
    %v577 = vunpack.c.l.b16 %v397
    %v578 = vunpack.c.h.b16 %v397
    %v579 = vunpack.c.l.b16 %v398
    %v580 = vunpack.c.h.b16 %v398
    %v581 = vunpack.c.l.b16 %v399
    %v582 = vunpack.c.h.b16 %v399
    %v583 = vunpack.c.l.b16 %v400
    %v584 = vunpack.c.h.b16 %v400
    %v585 = vunpack.c.l.b16 %v401
    %v586 = vunpack.c.h.b16 %v401
    %v587 = vunpack.c.l.b16 %v402
    %v588 = vunpack.c.h.b16 %v402
    %v589 = vunpack.c.l.b16 %v403
    %v590 = vunpack.c.h.b16 %v403
    %v591 = vunpack.c.l.b16 %v404
    %v592 = vunpack.c.h.b16 %v404
    %v593 = vunpack.c.l.b16 %v405
    %v594 = vunpack.c.h.b16 %v405
    %v595 = vunpack.c.l.b16 %v406
    %v596 = vunpack.c.h.b16 %v406
    %v597 = vunpack.c.l.b16 %v407
    %v598 = vunpack.c.h.b16 %v407
    %v599 = vunpack.c.l.b16 %v408
    %v600 = vunpack.c.h.b16 %v408
    %v601 = vunpack.c.l.b16 %v409
    %v602 = vunpack.c.h.b16 %v409
    %v603 = vunpack.c.l.b16 %v410
    %v604 = vunpack.c.h.b16 %v410
    %v605 = vunpack.c.l.b16 %v411
    %v606 = vunpack.c.h.b16 %v411
    %v607 = vunpack.c.l.b16 %v412
    %v608 = vunpack.c.h.b16 %v412
    %v609 = vunpack.c.l.b16 %v413
    %v610 = vunpack.c.h.b16 %v413
    %v611 = vunpack.c.l.b16 %v414
    %v612 = vunpack.c.h.b16 %v414
    %v613 = vunpack.c.l.b16 %v415
    %v614 = vunpack.c.h.b16 %v415
    %v615 = vunpack.c.l.b16 %v416
    %v616 = vunpack.c.h.b16 %v416
    %v617 = vunpack.c.l.b16 %v417
    %v618 = vunpack.c.h.b16 %v417
    %v619 = vunpack.c.l.b16 %v418
    %v620 = vunpack.c.h.b16 %v418
    %v621 = vunpack.c.l.b16 %v419
    %v622 = vunpack.c.h.b16 %v419
    %v623 = vunpack.c.l.b16 %v420
    %v624 = vunpack.c.h.b16 %v420
    %v625 = vunpack.c.l.b16 %v421
    %v626 = vunpack.c.h.b16 %v421
    %v627 = vunpack.c.l.b16 %v422
    %v628 = vunpack.c.h.b16 %v422
    %v629 = vunpack.c.l.b16 %v423
    %v630 = vunpack.c.h.b16 %v423
    %v631 = vpack.c.b16 %v507, %v503
    %v632 = vpack.c.b16 %v508, %v504
    %v633 = vpack.c.b16 %v509, %v505
    %v634 = vpack.c.b16 %v510, %v506
    %v635 = vpack.c.b16 %v515, %v511
    %v636 = vpack.c.b16 %v516, %v512
    %v637 = vpack.c.b16 %v517, %v513
    %v638 = vpack.c.b16 %v518, %v514
    %v639 = vpack.c.b16 %v523, %v519
    %v640 = vpack.c.b16 %v524, %v520
    %v641 = vpack.c.b16 %v525, %v521
    %v642 = vpack.c.b16 %v526, %v522
    %v643 = vpack.c.b16 %v531, %v527
    %v644 = vpack.c.b16 %v532, %v528
    %v645 = vpack.c.b16 %v533, %v529
    %v646 = vpack.c.b16 %v534, %v530
    %v647 = vpack.c.b16 %v539, %v535
    %v648 = vpack.c.b16 %v540, %v536
    %v649 = vpack.c.b16 %v541, %v537
    %v650 = vpack.c.b16 %v542, %v538
    %v651 = vpack.c.b16 %v547, %v543
    %v652 = vpack.c.b16 %v548, %v544
    %v653 = vpack.c.b16 %v549, %v545
    %v654 = vpack.c.b16 %v550, %v546
    %v655 = vpack.c.b16 %v555, %v551
    %v656 = vpack.c.b16 %v556, %v552
    %v657 = vpack.c.b16 %v557, %v553
    %v658 = vpack.c.b16 %v558, %v554
    %v659 = vpack.c.b16 %v563, %v559
    %v660 = vpack.c.b16 %v564, %v560
    %v661 = vpack.c.b16 %v565, %v561
    %v662 = vpack.c.b16 %v566, %v562
    %v663 = vpack.c.b16 %v571, %v567
    %v664 = vpack.c.b16 %v572, %v568
    %v665 = vpack.c.b16 %v573, %v569
    %v666 = vpack.c.b16 %v574, %v570
    %v667 = vpack.c.b16 %v579, %v575
    %v668 = vpack.c.b16 %v580, %v576
    %v669 = vpack.c.b16 %v581, %v577
    %v670 = vpack.c.b16 %v582, %v578
    %v671 = vpack.c.b16 %v587, %v583
    %v672 = vpack.c.b16 %v588, %v584
    %v673 = vpack.c.b16 %v589, %v585
    %v674 = vpack.c.b16 %v590, %v586
    %v675 = vpack.c.b16 %v595, %v591
    %v676 = vpack.c.b16 %v596, %v592
    %v677 = vpack.c.b16 %v597, %v593
    %v678 = vpack.c.b16 %v598, %v594
    %v679 = vpack.c.b16 %v603, %v599
    %v680 = vpack.c.b16 %v604, %v600
    %v681 = vpack.c.b16 %v605, %v601
    %v682 = vpack.c.b16 %v606, %v602
    %v683 = vpack.c.b16 %v611, %v607
    %v684 = vpack.c.b16 %v612, %v608
    %v685 = vpack.c.b16 %v613, %v609
    %v686 = vpack.c.b16 %v614, %v610
    %v687 = vpack.c.b16 %v619, %v615
    %v688 = vpack.c.b16 %v620, %v616
    %v689 = vpack.c.b16 %v621, %v617
    %v690 = vpack.c.b16 %v622, %v618
    %v691 = vpack.c.b16 %v627, %v623
    %v692 = vpack.c.b16 %v628, %v624
    %v693 = vpack.c.b16 %v629, %v625
    %v694 = vpack.c.b16 %v630, %v626
    %759 = vmatpush.bf16.msra.mxu0 %v659
    %760 = vmatpush.bf16.msra.mxu0 %v655
    %761 = vmatpush.bf16.msra.mxu0 %v651
    %762 = vmatpush.bf16.msra.mxu0 %v647
    %763 = vmatpush.bf16.msra.mxu0 %v643
    %764 = vmatpush.bf16.msra.mxu0 %v639
    %765 = vmatpush.bf16.msra.mxu0 %v635
    %766 = vmatpush.bf16.msra.mxu0 %v631
    %767 = vmatmul.bf16.gmra.mxu0 %v358
    %v768 = vpop.f32.mrf.mxu0
    %v769 = vadd.f32 %v435, %v768
    %v770 = vpop.f32.mrf.mxu0
    %771 = vdwg.mxu0
    %772 = vmatpush.bf16.msra.mxu0 %v691
    %773 = vmatpush.bf16.msra.mxu0 %v687
    %774 = vmatpush.bf16.msra.mxu0 %v683
    %775 = vmatpush.bf16.msra.mxu0 %v679
    %776 = vmatpush.bf16.msra.mxu0 %v675
    %777 = vmatpush.bf16.msra.mxu0 %v671
    %778 = vmatpush.bf16.msra.mxu0 %v667
    %779 = vmatpush.bf16.msra.mxu0 %v663
    %780 = vmatmul.bf16.gmra.mxu0 %v359
    %v781 = vpop.f32.mrf.mxu0
    %v782 = vadd.f32 %v769, %v781
    %v783 = vpop.f32.mrf.mxu0
    %784 = vdwg.mxu0
    %785 = vmatpush.bf16.msra.mxu0 %v660
    %786 = vmatpush.bf16.msra.mxu0 %v656
    %787 = vmatpush.bf16.msra.mxu0 %v652
    %788 = vmatpush.bf16.msra.mxu0 %v648
    %789 = vmatpush.bf16.msra.mxu0 %v644
    %790 = vmatpush.bf16.msra.mxu0 %v640
    %791 = vmatpush.bf16.msra.mxu0 %v636
    %792 = vmatpush.bf16.msra.mxu0 %v632
    %793 = vmatmul.bf16.gmra.mxu0 %v358
    %v794 = vpop.f32.mrf.mxu0
    %v795 = vadd.f32 %v436, %v794
    %v796 = vpop.f32.mrf.mxu0
    %797 = vdwg.mxu0
    %798 = vmatpush.bf16.msra.mxu0 %v692
    %799 = vmatpush.bf16.msra.mxu0 %v688
    %800 = vmatpush.bf16.msra.mxu0 %v684
    %801 = vmatpush.bf16.msra.mxu0 %v680
    %802 = vmatpush.bf16.msra.mxu0 %v676
    %803 = vmatpush.bf16.msra.mxu0 %v672
    %804 = vmatpush.bf16.msra.mxu0 %v668
    %805 = vmatpush.bf16.msra.mxu0 %v664
    %806 = vmatmul.bf16.gmra.mxu0 %v359
    %v807 = vpop.f32.mrf.mxu0
    %v808 = vadd.f32 %v795, %v807
    %v809 = vpop.f32.mrf.mxu0
    %810 = vdwg.mxu0
    %811 = vmatpush.bf16.msra.mxu0 %v661
    %812 = vmatpush.bf16.msra.mxu0 %v657
    %813 = vmatpush.bf16.msra.mxu0 %v653
    %814 = vmatpush.bf16.msra.mxu0 %v649
    %815 = vmatpush.bf16.msra.mxu0 %v645
    %816 = vmatpush.bf16.msra.mxu0 %v641
    %817 = vmatpush.bf16.msra.mxu0 %v637
    %818 = vmatpush.bf16.msra.mxu0 %v633
    %819 = vmatmul.bf16.gmra.mxu0 %v358
    %v820 = vpop.f32.mrf.mxu0
    %v821 = vadd.f32 %v437, %v820
    %v822 = vpop.f32.mrf.mxu0
    %823 = vdwg.mxu0
    %824 = vmatpush.bf16.msra.mxu0 %v693
    %825 = vmatpush.bf16.msra.mxu0 %v689
    %826 = vmatpush.bf16.msra.mxu0 %v685
    %827 = vmatpush.bf16.msra.mxu0 %v681
    %828 = vmatpush.bf16.msra.mxu0 %v677
    %829 = vmatpush.bf16.msra.mxu0 %v673
    %830 = vmatpush.bf16.msra.mxu0 %v669
    %831 = vmatpush.bf16.msra.mxu0 %v665
    %832 = vmatmul.bf16.gmra.mxu0 %v359
    %v833 = vpop.f32.mrf.mxu0
    %v834 = vadd.f32 %v821, %v833
    %v835 = vpop.f32.mrf.mxu0
    %836 = vdwg.mxu0
    %837 = vmatpush.bf16.msra.mxu0 %v662
    %838 = vmatpush.bf16.msra.mxu0 %v658
    %839 = vmatpush.bf16.msra.mxu0 %v654
    %840 = vmatpush.bf16.msra.mxu0 %v650
    %841 = vmatpush.bf16.msra.mxu0 %v646
    %842 = vmatpush.bf16.msra.mxu0 %v642
    %843 = vmatpush.bf16.msra.mxu0 %v638
    %844 = vmatpush.bf16.msra.mxu0 %v634
    %845 = vmatmul.bf16.gmra.mxu0 %v358
    %v846 = vpop.f32.mrf.mxu0
    %v847 = vadd.f32 %v438, %v846
    %v848 = vpop.f32.mrf.mxu0
    %849 = vdwg.mxu0
    %850 = vmatpush.bf16.msra.mxu0 %v694
    %851 = vmatpush.bf16.msra.mxu0 %v690
    %852 = vmatpush.bf16.msra.mxu0 %v686
    %853 = vmatpush.bf16.msra.mxu0 %v682
    %854 = vmatpush.bf16.msra.mxu0 %v678
    %855 = vmatpush.bf16.msra.mxu0 %v674
    %856 = vmatpush.bf16.msra.mxu0 %v670
    %857 = vmatpush.bf16.msra.mxu0 %v666
    %858 = vmatmul.bf16.gmra.mxu0 %v359
    %v859 = vpop.f32.mrf.mxu0
    %v860 = vadd.f32 %v847, %v859
    %v861 = vpop.f32.mrf.mxu0
    %862 = vdwg.mxu0
    %vm863 = vcmp.gt.f32.partialorder %v782, 0.0
    %vm864 = vcmp.gt.f32.partialorder %v808, 0.0
    %vm865 = vcmp.gt.f32.partialorder %v834, 0.0
    %vm866 = vcmp.gt.f32.partialorder %v860, 0.0
    %v867 = vmul.f32 %v782, 0.1
    %v868 = vmul.f32 %v808, 0.1
    %v869 = vmul.f32 %v834, 0.1
    %v870 = vmul.f32 %v860, 0.1
    %v871 = vsel %vm863, %v782, %v867
    %v872 = vsel %vm864, %v808, %v868
    %v873 = vsel %vm865, %v834, %v869
    %v874 = vsel %vm866, %v860, %v870
    %v875 = vpack.c.bf16 %v871, %v871
    %v876 = vpack.c.bf16 %v872, %v872
    %v877 = vpack.c.bf16 %v873, %v873
    %v878 = vpack.c.bf16 %v874, %v874
    %v879 = vld [vmem:[#allocation13] sm:$0xff]
    %v880 = vld [vmem:[#allocation13 + $0x8] sm:$0xff]
    %v881 = vld [vmem:[#allocation13 + $0x10] sm:$0xff]
    %v882 = vld [vmem:[#allocation13 + $0x18] sm:$0xff]
    %v883 = vld [vmem:[#allocation13 + $0x20] sm:$0xff]
    %v884 = vld [vmem:[#allocation13 + $0x28] sm:$0xff]
    %v885 = vld [vmem:[#allocation13 + $0x30] sm:$0xff]
    %v886 = vld [vmem:[#allocation13 + $0x38] sm:$0xff]
    %v887 = vld [vmem:[#allocation13 + $0x40] sm:$0xff]
    %v888 = vld [vmem:[#allocation13 + $0x48] sm:$0xff]
    %v889 = vld [vmem:[#allocation13 + $0x50] sm:$0xff]
    %v890 = vld [vmem:[#allocation13 + $0x58] sm:$0xff]
    %v891 = vld [vmem:[#allocation13 + $0x60] sm:$0xff]
    %v892 = vld [vmem:[#allocation13 + $0x68] sm:$0xff]
    %v893 = vld [vmem:[#allocation13 + $0x70] sm:$0xff]
    %v894 = vld [vmem:[#allocation13 + $0x78] sm:$0xff]
    %v895 = vld [vmem:[#allocation13 + $0x80] sm:$0xff]
    %v896 = vld [vmem:[#allocation13 + $0x88] sm:$0xff]
    %v897 = vld [vmem:[#allocation13 + $0x90] sm:$0xff]
    %v898 = vld [vmem:[#allocation13 + $0x98] sm:$0xff]
    %v899 = vld [vmem:[#allocation13 + $0xa0] sm:$0xff]
    %v900 = vld [vmem:[#allocation13 + $0xa8] sm:$0xff]
    %v901 = vld [vmem:[#allocation13 + $0xb0] sm:$0xff]
    %v902 = vld [vmem:[#allocation13 + $0xb8] sm:$0xff]
    %v903 = vld [vmem:[#allocation13 + $0xc0] sm:$0xff]
    %v904 = vld [vmem:[#allocation13 + $0xc8] sm:$0xff]
    %v905 = vld [vmem:[#allocation13 + $0xd0] sm:$0xff]
    %v906 = vld [vmem:[#allocation13 + $0xd8] sm:$0xff]
    %v907 = vld [vmem:[#allocation13 + $0xe0] sm:$0xff]
    %v908 = vld [vmem:[#allocation13 + $0xe8] sm:$0xff]
    %v909 = vld [vmem:[#allocation13 + $0xf0] sm:$0xff]
    %v910 = vld [vmem:[#allocation13 + $0xf8] sm:$0xff]
    %v911 = vld [vmem:[#allocation13 + $0x100] sm:$0xff]
    %v912 = vld [vmem:[#allocation13 + $0x108] sm:$0xff]
    %v913 = vld [vmem:[#allocation13 + $0x110] sm:$0xff]
    %v914 = vld [vmem:[#allocation13 + $0x118] sm:$0xff]
    %v915 = vld [vmem:[#allocation13 + $0x120] sm:$0xff]
    %v916 = vld [vmem:[#allocation13 + $0x128] sm:$0xff]
    %v917 = vld [vmem:[#allocation13 + $0x130] sm:$0xff]
    %v918 = vld [vmem:[#allocation13 + $0x138] sm:$0xff]
    %v919 = vld [vmem:[#allocation13 + $0x140] sm:$0xff]
    %v920 = vld [vmem:[#allocation13 + $0x148] sm:$0xff]
    %v921 = vld [vmem:[#allocation13 + $0x150] sm:$0xff]
    %v922 = vld [vmem:[#allocation13 + $0x158] sm:$0xff]
    %v923 = vld [vmem:[#allocation13 + $0x160] sm:$0xff]
    %v924 = vld [vmem:[#allocation13 + $0x168] sm:$0xff]
    %v925 = vld [vmem:[#allocation13 + $0x170] sm:$0xff]
    %v926 = vld [vmem:[#allocation13 + $0x178] sm:$0xff]
    %v927 = vld [vmem:[#allocation13 + $0x180] sm:$0xff]
    %v928 = vld [vmem:[#allocation13 + $0x188] sm:$0xff]
    %v929 = vld [vmem:[#allocation13 + $0x190] sm:$0xff]
    %v930 = vld [vmem:[#allocation13 + $0x198] sm:$0xff]
    %v931 = vld [vmem:[#allocation13 + $0x1a0] sm:$0xff]
    %v932 = vld [vmem:[#allocation13 + $0x1a8] sm:$0xff]
    %v933 = vld [vmem:[#allocation13 + $0x1b0] sm:$0xff]
    %v934 = vld [vmem:[#allocation13 + $0x1b8] sm:$0xff]
    %v935 = vld [vmem:[#allocation13 + $0x1c0] sm:$0xff]
    %v936 = vld [vmem:[#allocation13 + $0x1c8] sm:$0xff]
    %v937 = vld [vmem:[#allocation13 + $0x1d0] sm:$0xff]
    %v938 = vld [vmem:[#allocation13 + $0x1d8] sm:$0xff]
    %v939 = vld [vmem:[#allocation13 + $0x1e0] sm:$0xff]
    %v940 = vld [vmem:[#allocation13 + $0x1e8] sm:$0xff]
    %v941 = vld [vmem:[#allocation13 + $0x1f0] sm:$0xff]
    %v942 = vld [vmem:[#allocation13 + $0x1f8] sm:$0xff]
    %v943 = vld [vmem:[#allocation13 + $0x200] sm:$0xff]
    %v944 = vld [vmem:[#allocation13 + $0x208] sm:$0xff]
    %v945 = vld [vmem:[#allocation13 + $0x210] sm:$0xff]
    %v946 = vld [vmem:[#allocation13 + $0x218] sm:$0xff]
    %v947 = vld [vmem:[#allocation13 + $0x220] sm:$0xff]
    %v948 = vld [vmem:[#allocation13 + $0x228] sm:$0xff]
    %v949 = vld [vmem:[#allocation13 + $0x230] sm:$0xff]
    %v950 = vld [vmem:[#allocation13 + $0x238] sm:$0xff]
    %v951 = vld [vmem:[#allocation13 + $0x240] sm:$0xff]
    %v952 = vld [vmem:[#allocation13 + $0x248] sm:$0xff]
    %v953 = vld [vmem:[#allocation13 + $0x250] sm:$0xff]
    %v954 = vld [vmem:[#allocation13 + $0x258] sm:$0xff]
    %v955 = vld [vmem:[#allocation13 + $0x260] sm:$0xff]
    %v956 = vld [vmem:[#allocation13 + $0x268] sm:$0xff]
    %v957 = vld [vmem:[#allocation13 + $0x270] sm:$0xff]
    %v958 = vld [vmem:[#allocation13 + $0x278] sm:$0xff]
    %v959 = vld [vmem:[#allocation13 + $0x280] sm:$0xff]
    %v960 = vld [vmem:[#allocation13 + $0x288] sm:$0xff]
    %v961 = vld [vmem:[#allocation13 + $0x290] sm:$0xff]
    %v962 = vld [vmem:[#allocation13 + $0x298] sm:$0xff]
    %v963 = vld [vmem:[#allocation13 + $0x2a0] sm:$0xff]
    %v964 = vld [vmem:[#allocation13 + $0x2a8] sm:$0xff]
    %v965 = vld [vmem:[#allocation13 + $0x2b0] sm:$0xff]
    %v966 = vld [vmem:[#allocation13 + $0x2b8] sm:$0xff]
    %v967 = vld [vmem:[#allocation13 + $0x2c0] sm:$0xff]
    %v968 = vld [vmem:[#allocation13 + $0x2c8] sm:$0xff]
    %v969 = vld [vmem:[#allocation13 + $0x2d0] sm:$0xff]
    %v970 = vld [vmem:[#allocation13 + $0x2d8] sm:$0xff]
    %v971 = vld [vmem:[#allocation13 + $0x2e0] sm:$0xff]
    %v972 = vld [vmem:[#allocation13 + $0x2e8] sm:$0xff]
    %v973 = vld [vmem:[#allocation13 + $0x2f0] sm:$0xff]
    %v974 = vld [vmem:[#allocation13 + $0x2f8] sm:$0xff]
    %v975 = vld [vmem:[#allocation13 + $0x300] sm:$0xff]
    %v976 = vld [vmem:[#allocation13 + $0x308] sm:$0xff]
    %v977 = vld [vmem:[#allocation13 + $0x310] sm:$0xff]
    %v978 = vld [vmem:[#allocation13 + $0x318] sm:$0xff]
    %v979 = vld [vmem:[#allocation13 + $0x320] sm:$0xff]
    %v980 = vld [vmem:[#allocation13 + $0x328] sm:$0xff]
    %v981 = vld [vmem:[#allocation13 + $0x330] sm:$0xff]
    %v982 = vld [vmem:[#allocation13 + $0x338] sm:$0xff]
    %v983 = vld [vmem:[#allocation13 + $0x340] sm:$0xff]
    %v984 = vld [vmem:[#allocation13 + $0x348] sm:$0xff]
    %v985 = vld [vmem:[#allocation13 + $0x350] sm:$0xff]
    %v986 = vld [vmem:[#allocation13 + $0x358] sm:$0xff]
    %v987 = vld [vmem:[#allocation13 + $0x360] sm:$0xff]
    %v988 = vld [vmem:[#allocation13 + $0x368] sm:$0xff]
    %v989 = vld [vmem:[#allocation13 + $0x370] sm:$0xff]
    %v990 = vld [vmem:[#allocation13 + $0x378] sm:$0xff]
    %v991 = vld [vmem:[#allocation13 + $0x380] sm:$0xff]
    %v992 = vld [vmem:[#allocation13 + $0x388] sm:$0xff]
    %v993 = vld [vmem:[#allocation13 + $0x390] sm:$0xff]
    %v994 = vld [vmem:[#allocation13 + $0x398] sm:$0xff]
    %v995 = vld [vmem:[#allocation13 + $0x3a0] sm:$0xff]
    %v996 = vld [vmem:[#allocation13 + $0x3a8] sm:$0xff]
    %v997 = vld [vmem:[#allocation13 + $0x3b0] sm:$0xff]
    %v998 = vld [vmem:[#allocation13 + $0x3b8] sm:$0xff]
    %v999 = vld [vmem:[#allocation13 + $0x3c0] sm:$0xff]
    %v1000 = vld [vmem:[#allocation13 + $0x3c8] sm:$0xff]
    %v1001 = vld [vmem:[#allocation13 + $0x3d0] sm:$0xff]
    %v1002 = vld [vmem:[#allocation13 + $0x3d8] sm:$0xff]
    %v1003 = vld [vmem:[#allocation13 + $0x3e0] sm:$0xff]
    %v1004 = vld [vmem:[#allocation13 + $0x3e8] sm:$0xff]
    %v1005 = vld [vmem:[#allocation13 + $0x3f0] sm:$0xff]
    %v1006 = vld [vmem:[#allocation13 + $0x3f8] sm:$0xff]
    %v1007 = vld [vmem:[#allocation13 + $0x400] sm:$0xff]
    %v1008 = vld [vmem:[#allocation13 + $0x408] sm:$0xff]
    %v1009 = vld [vmem:[#allocation13 + $0x410] sm:$0xff]
    %v1010 = vld [vmem:[#allocation13 + $0x418] sm:$0xff]
    %v1011 = vld [vmem:[#allocation13 + $0x420] sm:$0xff]
    %v1012 = vld [vmem:[#allocation13 + $0x428] sm:$0xff]
    %v1013 = vld [vmem:[#allocation13 + $0x430] sm:$0xff]
    %v1014 = vld [vmem:[#allocation13 + $0x438] sm:$0xff]
    %v1015 = vld [vmem:[#allocation13 + $0x440] sm:$0xff]
    %v1016 = vld [vmem:[#allocation13 + $0x448] sm:$0xff]
    %v1017 = vld [vmem:[#allocation13 + $0x450] sm:$0xff]
    %v1018 = vld [vmem:[#allocation13 + $0x458] sm:$0xff]
    %v1019 = vld [vmem:[#allocation13 + $0x460] sm:$0xff]
    %v1020 = vld [vmem:[#allocation13 + $0x468] sm:$0xff]
    %v1021 = vld [vmem:[#allocation13 + $0x470] sm:$0xff]
    %v1022 = vld [vmem:[#allocation13 + $0x478] sm:$0xff]
    %v1023 = vld [vmem:[#allocation13 + $0x480] sm:$0xff]
    %v1024 = vld [vmem:[#allocation13 + $0x488] sm:$0xff]
    %v1025 = vld [vmem:[#allocation13 + $0x490] sm:$0xff]
    %v1026 = vld [vmem:[#allocation13 + $0x498] sm:$0xff]
    %v1027 = vld [vmem:[#allocation13 + $0x4a0] sm:$0xff]
    %v1028 = vld [vmem:[#allocation13 + $0x4a8] sm:$0xff]
    %v1029 = vld [vmem:[#allocation13 + $0x4b0] sm:$0xff]
    %v1030 = vld [vmem:[#allocation13 + $0x4b8] sm:$0xff]
    %v1031 = vld [vmem:[#allocation13 + $0x4c0] sm:$0xff]
    %v1032 = vld [vmem:[#allocation13 + $0x4c8] sm:$0xff]
    %v1033 = vld [vmem:[#allocation13 + $0x4d0] sm:$0xff]
    %v1034 = vld [vmem:[#allocation13 + $0x4d8] sm:$0xff]
    %v1035 = vld [vmem:[#allocation13 + $0x4e0] sm:$0xff]
    %v1036 = vld [vmem:[#allocation13 + $0x4e8] sm:$0xff]
    %v1037 = vld [vmem:[#allocation13 + $0x4f0] sm:$0xff]
    %v1038 = vld [vmem:[#allocation13 + $0x4f8] sm:$0xff]
    %v1039 = vld [vmem:[#allocation13 + $0x500] sm:$0xff]
    %v1040 = vld [vmem:[#allocation13 + $0x508] sm:$0xff]
    %v1041 = vld [vmem:[#allocation13 + $0x510] sm:$0xff]
    %v1042 = vld [vmem:[#allocation13 + $0x518] sm:$0xff]
    %v1043 = vld [vmem:[#allocation13 + $0x520] sm:$0xff]
    %v1044 = vld [vmem:[#allocation13 + $0x528] sm:$0xff]
    %v1045 = vld [vmem:[#allocation13 + $0x530] sm:$0xff]
    %v1046 = vld [vmem:[#allocation13 + $0x538] sm:$0xff]
    %v1047 = vld [vmem:[#allocation13 + $0x540] sm:$0xff]
    %v1048 = vld [vmem:[#allocation13 + $0x548] sm:$0xff]
    %v1049 = vld [vmem:[#allocation13 + $0x550] sm:$0xff]
    %v1050 = vld [vmem:[#allocation13 + $0x558] sm:$0xff]
    %v1051 = vld [vmem:[#allocation13 + $0x560] sm:$0xff]
    %v1052 = vld [vmem:[#allocation13 + $0x568] sm:$0xff]
    %v1053 = vld [vmem:[#allocation13 + $0x570] sm:$0xff]
    %v1054 = vld [vmem:[#allocation13 + $0x578] sm:$0xff]
    %v1055 = vld [vmem:[#allocation13 + $0x580] sm:$0xff]
    %v1056 = vld [vmem:[#allocation13 + $0x588] sm:$0xff]
    %v1057 = vld [vmem:[#allocation13 + $0x590] sm:$0xff]
    %v1058 = vld [vmem:[#allocation13 + $0x598] sm:$0xff]
    %v1059 = vld [vmem:[#allocation13 + $0x5a0] sm:$0xff]
    %v1060 = vld [vmem:[#allocation13 + $0x5a8] sm:$0xff]
    %v1061 = vld [vmem:[#allocation13 + $0x5b0] sm:$0xff]
    %v1062 = vld [vmem:[#allocation13 + $0x5b8] sm:$0xff]
    %v1063 = vld [vmem:[#allocation13 + $0x5c0] sm:$0xff]
    %v1064 = vld [vmem:[#allocation13 + $0x5c8] sm:$0xff]
    %v1065 = vld [vmem:[#allocation13 + $0x5d0] sm:$0xff]
    %v1066 = vld [vmem:[#allocation13 + $0x5d8] sm:$0xff]
    %v1067 = vld [vmem:[#allocation13 + $0x5e0] sm:$0xff]
    %v1068 = vld [vmem:[#allocation13 + $0x5e8] sm:$0xff]
    %v1069 = vld [vmem:[#allocation13 + $0x5f0] sm:$0xff]
    %v1070 = vld [vmem:[#allocation13 + $0x5f8] sm:$0xff]
    %v1071 = vld [vmem:[#allocation13 + $0x600] sm:$0xff]
    %v1072 = vld [vmem:[#allocation13 + $0x608] sm:$0xff]
    %v1073 = vld [vmem:[#allocation13 + $0x610] sm:$0xff]
    %v1074 = vld [vmem:[#allocation13 + $0x618] sm:$0xff]
    %v1075 = vld [vmem:[#allocation13 + $0x620] sm:$0xff]
    %v1076 = vld [vmem:[#allocation13 + $0x628] sm:$0xff]
    %v1077 = vld [vmem:[#allocation13 + $0x630] sm:$0xff]
    %v1078 = vld [vmem:[#allocation13 + $0x638] sm:$0xff]
    %v1079 = vld [vmem:[#allocation13 + $0x640] sm:$0xff]
    %v1080 = vld [vmem:[#allocation13 + $0x648] sm:$0xff]
    %v1081 = vld [vmem:[#allocation13 + $0x650] sm:$0xff]
    %v1082 = vld [vmem:[#allocation13 + $0x658] sm:$0xff]
    %v1083 = vld [vmem:[#allocation13 + $0x660] sm:$0xff]
    %v1084 = vld [vmem:[#allocation13 + $0x668] sm:$0xff]
    %v1085 = vld [vmem:[#allocation13 + $0x670] sm:$0xff]
    %v1086 = vld [vmem:[#allocation13 + $0x678] sm:$0xff]
    %v1087 = vld [vmem:[#allocation13 + $0x680] sm:$0xff]
    %v1088 = vld [vmem:[#allocation13 + $0x688] sm:$0xff]
    %v1089 = vld [vmem:[#allocation13 + $0x690] sm:$0xff]
    %v1090 = vld [vmem:[#allocation13 + $0x698] sm:$0xff]
    %v1091 = vld [vmem:[#allocation13 + $0x6a0] sm:$0xff]
    %v1092 = vld [vmem:[#allocation13 + $0x6a8] sm:$0xff]
    %v1093 = vld [vmem:[#allocation13 + $0x6b0] sm:$0xff]
    %v1094 = vld [vmem:[#allocation13 + $0x6b8] sm:$0xff]
    %v1095 = vld [vmem:[#allocation13 + $0x6c0] sm:$0xff]
    %v1096 = vld [vmem:[#allocation13 + $0x6c8] sm:$0xff]
    %v1097 = vld [vmem:[#allocation13 + $0x6d0] sm:$0xff]
    %v1098 = vld [vmem:[#allocation13 + $0x6d8] sm:$0xff]
    %v1099 = vld [vmem:[#allocation13 + $0x6e0] sm:$0xff]
    %v1100 = vld [vmem:[#allocation13 + $0x6e8] sm:$0xff]
    %v1101 = vld [vmem:[#allocation13 + $0x6f0] sm:$0xff]
    %v1102 = vld [vmem:[#allocation13 + $0x6f8] sm:$0xff]
    %v1103 = vld [vmem:[#allocation13 + $0x700] sm:$0xff]
    %v1104 = vld [vmem:[#allocation13 + $0x708] sm:$0xff]
    %v1105 = vld [vmem:[#allocation13 + $0x710] sm:$0xff]
    %v1106 = vld [vmem:[#allocation13 + $0x718] sm:$0xff]
    %v1107 = vld [vmem:[#allocation13 + $0x720] sm:$0xff]
    %v1108 = vld [vmem:[#allocation13 + $0x728] sm:$0xff]
    %v1109 = vld [vmem:[#allocation13 + $0x730] sm:$0xff]
    %v1110 = vld [vmem:[#allocation13 + $0x738] sm:$0xff]
    %v1111 = vld [vmem:[#allocation13 + $0x740] sm:$0xff]
    %v1112 = vld [vmem:[#allocation13 + $0x748] sm:$0xff]
    %v1113 = vld [vmem:[#allocation13 + $0x750] sm:$0xff]
    %v1114 = vld [vmem:[#allocation13 + $0x758] sm:$0xff]
    %v1115 = vld [vmem:[#allocation13 + $0x760] sm:$0xff]
    %v1116 = vld [vmem:[#allocation13 + $0x768] sm:$0xff]
    %v1117 = vld [vmem:[#allocation13 + $0x770] sm:$0xff]
    %v1118 = vld [vmem:[#allocation13 + $0x778] sm:$0xff]
    %v1119 = vld [vmem:[#allocation13 + $0x780] sm:$0xff]
    %v1120 = vld [vmem:[#allocation13 + $0x788] sm:$0xff]
    %v1121 = vld [vmem:[#allocation13 + $0x790] sm:$0xff]
    %v1122 = vld [vmem:[#allocation13 + $0x798] sm:$0xff]
    %v1123 = vld [vmem:[#allocation13 + $0x7a0] sm:$0xff]
    %v1124 = vld [vmem:[#allocation13 + $0x7a8] sm:$0xff]
    %v1125 = vld [vmem:[#allocation13 + $0x7b0] sm:$0xff]
    %v1126 = vld [vmem:[#allocation13 + $0x7b8] sm:$0xff]
    %v1127 = vld [vmem:[#allocation13 + $0x7c0] sm:$0xff]
    %v1128 = vld [vmem:[#allocation13 + $0x7c8] sm:$0xff]
    %v1129 = vld [vmem:[#allocation13 + $0x7d0] sm:$0xff]
    %v1130 = vld [vmem:[#allocation13 + $0x7d8] sm:$0xff]
    %v1131 = vld [vmem:[#allocation13 + $0x7e0] sm:$0xff]
    %v1132 = vld [vmem:[#allocation13 + $0x7e8] sm:$0xff]
    %v1133 = vld [vmem:[#allocation13 + $0x7f0] sm:$0xff]
    %v1134 = vld [vmem:[#allocation13 + $0x7f8] sm:$0xff]
    %v1135 = vld [vmem:[#allocation14] sm:$0xff]
    %v1136 = vunpack.c.l.bf16 %v1135
    %v1137 = vunpack.c.h.bf16 %v1135
    %v1140 = vperm.slane %v1136, 0
    %v1141 = vperm.slane %v1136, 2
    %v1142 = vperm.slane %v1136, 4
    %v1143 = vperm.slane %v1136, 6
    %v1144 = vperm.slane %v1137, 0
    %v1145 = vperm.slane %v1137, 2
    %v1146 = vperm.slane %v1137, 4
    %v1147 = vperm.slane %v1137, 6
    %v1156 = vperm.slane %v1140, 0
    %v1157 = vperm.slane %v1141, 0
    %v1158 = vperm.slane %v1142, 0
    %v1159 = vperm.slane %v1143, 0
    %v1160 = vperm.slane %v1144, 0
    %v1161 = vperm.slane %v1145, 0
    %v1162 = vperm.slane %v1146, 0
    %v1163 = vperm.slane %v1147, 0
    %v1420 = vunpack.c.l.b16 %v879
    %v1421 = vunpack.c.h.b16 %v879
    %v1422 = vunpack.c.l.b16 %v880
    %v1423 = vunpack.c.h.b16 %v880
    %v1424 = vunpack.c.l.b16 %v881
    %v1425 = vunpack.c.h.b16 %v881
    %v1426 = vunpack.c.l.b16 %v882
    %v1427 = vunpack.c.h.b16 %v882
    %v1428 = vunpack.c.l.b16 %v883
    %v1429 = vunpack.c.h.b16 %v883
    %v1430 = vunpack.c.l.b16 %v884
    %v1431 = vunpack.c.h.b16 %v884
    %v1432 = vunpack.c.l.b16 %v885
    %v1433 = vunpack.c.h.b16 %v885
    %v1434 = vunpack.c.l.b16 %v886
    %v1435 = vunpack.c.h.b16 %v886
    %v1436 = vunpack.c.l.b16 %v887
    %v1437 = vunpack.c.h.b16 %v887
    %v1438 = vunpack.c.l.b16 %v888
    %v1439 = vunpack.c.h.b16 %v888
    %v1440 = vunpack.c.l.b16 %v889
    %v1441 = vunpack.c.h.b16 %v889
    %v1442 = vunpack.c.l.b16 %v890
    %v1443 = vunpack.c.h.b16 %v890
    %v1444 = vunpack.c.l.b16 %v891
    %v1445 = vunpack.c.h.b16 %v891
    %v1446 = vunpack.c.l.b16 %v892
    %v1447 = vunpack.c.h.b16 %v892
    %v1448 = vunpack.c.l.b16 %v893
    %v1449 = vunpack.c.h.b16 %v893
    %v1450 = vunpack.c.l.b16 %v894
    %v1451 = vunpack.c.h.b16 %v894
    %v1452 = vunpack.c.l.b16 %v895
    %v1453 = vunpack.c.h.b16 %v895
    %v1454 = vunpack.c.l.b16 %v896
    %v1455 = vunpack.c.h.b16 %v896
    %v1456 = vunpack.c.l.b16 %v897
    %v1457 = vunpack.c.h.b16 %v897
    %v1458 = vunpack.c.l.b16 %v898
    %v1459 = vunpack.c.h.b16 %v898
    %v1460 = vunpack.c.l.b16 %v899
    %v1461 = vunpack.c.h.b16 %v899
    %v1462 = vunpack.c.l.b16 %v900
    %v1463 = vunpack.c.h.b16 %v900
    %v1464 = vunpack.c.l.b16 %v901
    %v1465 = vunpack.c.h.b16 %v901
    %v1466 = vunpack.c.l.b16 %v902
    %v1467 = vunpack.c.h.b16 %v902
    %v1468 = vunpack.c.l.b16 %v903
    %v1469 = vunpack.c.h.b16 %v903
    %v1470 = vunpack.c.l.b16 %v904
    %v1471 = vunpack.c.h.b16 %v904
    %v1472 = vunpack.c.l.b16 %v905
    %v1473 = vunpack.c.h.b16 %v905
    %v1474 = vunpack.c.l.b16 %v906
    %v1475 = vunpack.c.h.b16 %v906
    %v1476 = vunpack.c.l.b16 %v907
    %v1477 = vunpack.c.h.b16 %v907
    %v1478 = vunpack.c.l.b16 %v908
    %v1479 = vunpack.c.h.b16 %v908
    %v1480 = vunpack.c.l.b16 %v909
    %v1481 = vunpack.c.h.b16 %v909
    %v1482 = vunpack.c.l.b16 %v910
    %v1483 = vunpack.c.h.b16 %v910
    %v1484 = vunpack.c.l.b16 %v911
    %v1485 = vunpack.c.h.b16 %v911
    %v1486 = vunpack.c.l.b16 %v912
    %v1487 = vunpack.c.h.b16 %v912
    %v1488 = vunpack.c.l.b16 %v913
    %v1489 = vunpack.c.h.b16 %v913
    %v1490 = vunpack.c.l.b16 %v914
    %v1491 = vunpack.c.h.b16 %v914
    %v1492 = vunpack.c.l.b16 %v915
    %v1493 = vunpack.c.h.b16 %v915
    %v1494 = vunpack.c.l.b16 %v916
    %v1495 = vunpack.c.h.b16 %v916
    %v1496 = vunpack.c.l.b16 %v917
    %v1497 = vunpack.c.h.b16 %v917
    %v1498 = vunpack.c.l.b16 %v918
    %v1499 = vunpack.c.h.b16 %v918
    %v1500 = vunpack.c.l.b16 %v919
    %v1501 = vunpack.c.h.b16 %v919
    %v1502 = vunpack.c.l.b16 %v920
    %v1503 = vunpack.c.h.b16 %v920
    %v1504 = vunpack.c.l.b16 %v921
    %v1505 = vunpack.c.h.b16 %v921
    %v1506 = vunpack.c.l.b16 %v922
    %v1507 = vunpack.c.h.b16 %v922
    %v1508 = vunpack.c.l.b16 %v923
    %v1509 = vunpack.c.h.b16 %v923
    %v1510 = vunpack.c.l.b16 %v924
    %v1511 = vunpack.c.h.b16 %v924
    %v1512 = vunpack.c.l.b16 %v925
    %v1513 = vunpack.c.h.b16 %v925
    %v1514 = vunpack.c.l.b16 %v926
    %v1515 = vunpack.c.h.b16 %v926
    %v1516 = vunpack.c.l.b16 %v927
    %v1517 = vunpack.c.h.b16 %v927
    %v1518 = vunpack.c.l.b16 %v928
    %v1519 = vunpack.c.h.b16 %v928
    %v1520 = vunpack.c.l.b16 %v929
    %v1521 = vunpack.c.h.b16 %v929
    %v1522 = vunpack.c.l.b16 %v930
    %v1523 = vunpack.c.h.b16 %v930
    %v1524 = vunpack.c.l.b16 %v931
    %v1525 = vunpack.c.h.b16 %v931
    %v1526 = vunpack.c.l.b16 %v932
    %v1527 = vunpack.c.h.b16 %v932
    %v1528 = vunpack.c.l.b16 %v933
    %v1529 = vunpack.c.h.b16 %v933
    %v1530 = vunpack.c.l.b16 %v934
    %v1531 = vunpack.c.h.b16 %v934
    %v1532 = vunpack.c.l.b16 %v935
    %v1533 = vunpack.c.h.b16 %v935
    %v1534 = vunpack.c.l.b16 %v936
    %v1535 = vunpack.c.h.b16 %v936
    %v1536 = vunpack.c.l.b16 %v937
    %v1537 = vunpack.c.h.b16 %v937
    %v1538 = vunpack.c.l.b16 %v938
    %v1539 = vunpack.c.h.b16 %v938
    %v1540 = vunpack.c.l.b16 %v939
    %v1541 = vunpack.c.h.b16 %v939
    %v1542 = vunpack.c.l.b16 %v940
    %v1543 = vunpack.c.h.b16 %v940
    %v1544 = vunpack.c.l.b16 %v941
    %v1545 = vunpack.c.h.b16 %v941
    %v1546 = vunpack.c.l.b16 %v942
    %v1547 = vunpack.c.h.b16 %v942
    %v1548 = vunpack.c.l.b16 %v943
    %v1549 = vunpack.c.h.b16 %v943
    %v1550 = vunpack.c.l.b16 %v944
    %v1551 = vunpack.c.h.b16 %v944
    %v1552 = vunpack.c.l.b16 %v945
    %v1553 = vunpack.c.h.b16 %v945
    %v1554 = vunpack.c.l.b16 %v946
    %v1555 = vunpack.c.h.b16 %v946
    %v1556 = vunpack.c.l.b16 %v947
    %v1557 = vunpack.c.h.b16 %v947
    %v1558 = vunpack.c.l.b16 %v948
    %v1559 = vunpack.c.h.b16 %v948
    %v1560 = vunpack.c.l.b16 %v949
    %v1561 = vunpack.c.h.b16 %v949
    %v1562 = vunpack.c.l.b16 %v950
    %v1563 = vunpack.c.h.b16 %v950
    %v1564 = vunpack.c.l.b16 %v951
    %v1565 = vunpack.c.h.b16 %v951
    %v1566 = vunpack.c.l.b16 %v952
    %v1567 = vunpack.c.h.b16 %v952
    %v1568 = vunpack.c.l.b16 %v953
    %v1569 = vunpack.c.h.b16 %v953
    %v1570 = vunpack.c.l.b16 %v954
    %v1571 = vunpack.c.h.b16 %v954
    %v1572 = vunpack.c.l.b16 %v955
    %v1573 = vunpack.c.h.b16 %v955
    %v1574 = vunpack.c.l.b16 %v956
    %v1575 = vunpack.c.h.b16 %v956
    %v1576 = vunpack.c.l.b16 %v957
    %v1577 = vunpack.c.h.b16 %v957
    %v1578 = vunpack.c.l.b16 %v958
    %v1579 = vunpack.c.h.b16 %v958
    %v1580 = vunpack.c.l.b16 %v959
    %v1581 = vunpack.c.h.b16 %v959
    %v1582 = vunpack.c.l.b16 %v960
    %v1583 = vunpack.c.h.b16 %v960
    %v1584 = vunpack.c.l.b16 %v961
    %v1585 = vunpack.c.h.b16 %v961
    %v1586 = vunpack.c.l.b16 %v962
    %v1587 = vunpack.c.h.b16 %v962
    %v1588 = vunpack.c.l.b16 %v963
    %v1589 = vunpack.c.h.b16 %v963
    %v1590 = vunpack.c.l.b16 %v964
    %v1591 = vunpack.c.h.b16 %v964
    %v1592 = vunpack.c.l.b16 %v965
    %v1593 = vunpack.c.h.b16 %v965
    %v1594 = vunpack.c.l.b16 %v966
    %v1595 = vunpack.c.h.b16 %v966
    %v1596 = vunpack.c.l.b16 %v967
    %v1597 = vunpack.c.h.b16 %v967
    %v1598 = vunpack.c.l.b16 %v968
    %v1599 = vunpack.c.h.b16 %v968
    %v1600 = vunpack.c.l.b16 %v969
    %v1601 = vunpack.c.h.b16 %v969
    %v1602 = vunpack.c.l.b16 %v970
    %v1603 = vunpack.c.h.b16 %v970
    %v1604 = vunpack.c.l.b16 %v971
    %v1605 = vunpack.c.h.b16 %v971
    %v1606 = vunpack.c.l.b16 %v972
    %v1607 = vunpack.c.h.b16 %v972
    %v1608 = vunpack.c.l.b16 %v973
    %v1609 = vunpack.c.h.b16 %v973
    %v1610 = vunpack.c.l.b16 %v974
    %v1611 = vunpack.c.h.b16 %v974
    %v1612 = vunpack.c.l.b16 %v975
    %v1613 = vunpack.c.h.b16 %v975
    %v1614 = vunpack.c.l.b16 %v976
    %v1615 = vunpack.c.h.b16 %v976
    %v1616 = vunpack.c.l.b16 %v977
    %v1617 = vunpack.c.h.b16 %v977
    %v1618 = vunpack.c.l.b16 %v978
    %v1619 = vunpack.c.h.b16 %v978
    %v1620 = vunpack.c.l.b16 %v979
    %v1621 = vunpack.c.h.b16 %v979
    %v1622 = vunpack.c.l.b16 %v980
    %v1623 = vunpack.c.h.b16 %v980
    %v1624 = vunpack.c.l.b16 %v981
    %v1625 = vunpack.c.h.b16 %v981
    %v1626 = vunpack.c.l.b16 %v982
    %v1627 = vunpack.c.h.b16 %v982
    %v1628 = vunpack.c.l.b16 %v983
    %v1629 = vunpack.c.h.b16 %v983
    %v1630 = vunpack.c.l.b16 %v984
    %v1631 = vunpack.c.h.b16 %v984
    %v1632 = vunpack.c.l.b16 %v985
    %v1633 = vunpack.c.h.b16 %v985
    %v1634 = vunpack.c.l.b16 %v986
    %v1635 = vunpack.c.h.b16 %v986
    %v1636 = vunpack.c.l.b16 %v987
    %v1637 = vunpack.c.h.b16 %v987
    %v1638 = vunpack.c.l.b16 %v988
    %v1639 = vunpack.c.h.b16 %v988
    %v1640 = vunpack.c.l.b16 %v989
    %v1641 = vunpack.c.h.b16 %v989
    %v1642 = vunpack.c.l.b16 %v990
    %v1643 = vunpack.c.h.b16 %v990
    %v1644 = vunpack.c.l.b16 %v991
    %v1645 = vunpack.c.h.b16 %v991
    %v1646 = vunpack.c.l.b16 %v992
    %v1647 = vunpack.c.h.b16 %v992
    %v1648 = vunpack.c.l.b16 %v993
    %v1649 = vunpack.c.h.b16 %v993
    %v1650 = vunpack.c.l.b16 %v994
    %v1651 = vunpack.c.h.b16 %v994
    %v1652 = vunpack.c.l.b16 %v995
    %v1653 = vunpack.c.h.b16 %v995
    %v1654 = vunpack.c.l.b16 %v996
    %v1655 = vunpack.c.h.b16 %v996
    %v1656 = vunpack.c.l.b16 %v997
    %v1657 = vunpack.c.h.b16 %v997
    %v1658 = vunpack.c.l.b16 %v998
    %v1659 = vunpack.c.h.b16 %v998
    %v1660 = vunpack.c.l.b16 %v999
    %v1661 = vunpack.c.h.b16 %v999
    %v1662 = vunpack.c.l.b16 %v1000
    %v1663 = vunpack.c.h.b16 %v1000
    %v1664 = vunpack.c.l.b16 %v1001
    %v1665 = vunpack.c.h.b16 %v1001
    %v1666 = vunpack.c.l.b16 %v1002
    %v1667 = vunpack.c.h.b16 %v1002
    %v1668 = vunpack.c.l.b16 %v1003
    %v1669 = vunpack.c.h.b16 %v1003
    %v1670 = vunpack.c.l.b16 %v1004
    %v1671 = vunpack.c.h.b16 %v1004
    %v1672 = vunpack.c.l.b16 %v1005
    %v1673 = vunpack.c.h.b16 %v1005
    %v1674 = vunpack.c.l.b16 %v1006
    %v1675 = vunpack.c.h.b16 %v1006
    %v1676 = vunpack.c.l.b16 %v1007
    %v1677 = vunpack.c.h.b16 %v1007
    %v1678 = vunpack.c.l.b16 %v1008
    %v1679 = vunpack.c.h.b16 %v1008
    %v1680 = vunpack.c.l.b16 %v1009
    %v1681 = vunpack.c.h.b16 %v1009
    %v1682 = vunpack.c.l.b16 %v1010
    %v1683 = vunpack.c.h.b16 %v1010
    %v1684 = vunpack.c.l.b16 %v1011
    %v1685 = vunpack.c.h.b16 %v1011
    %v1686 = vunpack.c.l.b16 %v1012
    %v1687 = vunpack.c.h.b16 %v1012
    %v1688 = vunpack.c.l.b16 %v1013
    %v1689 = vunpack.c.h.b16 %v1013
    %v1690 = vunpack.c.l.b16 %v1014
    %v1691 = vunpack.c.h.b16 %v1014
    %v1692 = vunpack.c.l.b16 %v1015
    %v1693 = vunpack.c.h.b16 %v1015
    %v1694 = vunpack.c.l.b16 %v1016
    %v1695 = vunpack.c.h.b16 %v1016
    %v1696 = vunpack.c.l.b16 %v1017
    %v1697 = vunpack.c.h.b16 %v1017
    %v1698 = vunpack.c.l.b16 %v1018
    %v1699 = vunpack.c.h.b16 %v1018
    %v1700 = vunpack.c.l.b16 %v1019
    %v1701 = vunpack.c.h.b16 %v1019
    %v1702 = vunpack.c.l.b16 %v1020
    %v1703 = vunpack.c.h.b16 %v1020
    %v1704 = vunpack.c.l.b16 %v1021
    %v1705 = vunpack.c.h.b16 %v1021
    %v1706 = vunpack.c.l.b16 %v1022
    %v1707 = vunpack.c.h.b16 %v1022
    %v1708 = vunpack.c.l.b16 %v1023
    %v1709 = vunpack.c.h.b16 %v1023
    %v1710 = vunpack.c.l.b16 %v1024
    %v1711 = vunpack.c.h.b16 %v1024
    %v1712 = vunpack.c.l.b16 %v1025
    %v1713 = vunpack.c.h.b16 %v1025
    %v1714 = vunpack.c.l.b16 %v1026
    %v1715 = vunpack.c.h.b16 %v1026
    %v1716 = vunpack.c.l.b16 %v1027
    %v1717 = vunpack.c.h.b16 %v1027
    %v1718 = vunpack.c.l.b16 %v1028
    %v1719 = vunpack.c.h.b16 %v1028
    %v1720 = vunpack.c.l.b16 %v1029
    %v1721 = vunpack.c.h.b16 %v1029
    %v1722 = vunpack.c.l.b16 %v1030
    %v1723 = vunpack.c.h.b16 %v1030
    %v1724 = vunpack.c.l.b16 %v1031
    %v1725 = vunpack.c.h.b16 %v1031
    %v1726 = vunpack.c.l.b16 %v1032
    %v1727 = vunpack.c.h.b16 %v1032
    %v1728 = vunpack.c.l.b16 %v1033
    %v1729 = vunpack.c.h.b16 %v1033
    %v1730 = vunpack.c.l.b16 %v1034
    %v1731 = vunpack.c.h.b16 %v1034
    %v1732 = vunpack.c.l.b16 %v1035
    %v1733 = vunpack.c.h.b16 %v1035
    %v1734 = vunpack.c.l.b16 %v1036
    %v1735 = vunpack.c.h.b16 %v1036
    %v1736 = vunpack.c.l.b16 %v1037
    %v1737 = vunpack.c.h.b16 %v1037
    %v1738 = vunpack.c.l.b16 %v1038
    %v1739 = vunpack.c.h.b16 %v1038
    %v1740 = vunpack.c.l.b16 %v1039
    %v1741 = vunpack.c.h.b16 %v1039
    %v1742 = vunpack.c.l.b16 %v1040
    %v1743 = vunpack.c.h.b16 %v1040
    %v1744 = vunpack.c.l.b16 %v1041
    %v1745 = vunpack.c.h.b16 %v1041
    %v1746 = vunpack.c.l.b16 %v1042
    %v1747 = vunpack.c.h.b16 %v1042
    %v1748 = vunpack.c.l.b16 %v1043
    %v1749 = vunpack.c.h.b16 %v1043
    %v1750 = vunpack.c.l.b16 %v1044
    %v1751 = vunpack.c.h.b16 %v1044
    %v1752 = vunpack.c.l.b16 %v1045
    %v1753 = vunpack.c.h.b16 %v1045
    %v1754 = vunpack.c.l.b16 %v1046
    %v1755 = vunpack.c.h.b16 %v1046
    %v1756 = vunpack.c.l.b16 %v1047
    %v1757 = vunpack.c.h.b16 %v1047
    %v1758 = vunpack.c.l.b16 %v1048
    %v1759 = vunpack.c.h.b16 %v1048
    %v1760 = vunpack.c.l.b16 %v1049
    %v1761 = vunpack.c.h.b16 %v1049
    %v1762 = vunpack.c.l.b16 %v1050
    %v1763 = vunpack.c.h.b16 %v1050
    %v1764 = vunpack.c.l.b16 %v1051
    %v1765 = vunpack.c.h.b16 %v1051
    %v1766 = vunpack.c.l.b16 %v1052
    %v1767 = vunpack.c.h.b16 %v1052
    %v1768 = vunpack.c.l.b16 %v1053
    %v1769 = vunpack.c.h.b16 %v1053
    %v1770 = vunpack.c.l.b16 %v1054
    %v1771 = vunpack.c.h.b16 %v1054
    %v1772 = vunpack.c.l.b16 %v1055
    %v1773 = vunpack.c.h.b16 %v1055
    %v1774 = vunpack.c.l.b16 %v1056
    %v1775 = vunpack.c.h.b16 %v1056
    %v1776 = vunpack.c.l.b16 %v1057
    %v1777 = vunpack.c.h.b16 %v1057
    %v1778 = vunpack.c.l.b16 %v1058
    %v1779 = vunpack.c.h.b16 %v1058
    %v1780 = vunpack.c.l.b16 %v1059
    %v1781 = vunpack.c.h.b16 %v1059
    %v1782 = vunpack.c.l.b16 %v1060
    %v1783 = vunpack.c.h.b16 %v1060
    %v1784 = vunpack.c.l.b16 %v1061
    %v1785 = vunpack.c.h.b16 %v1061
    %v1786 = vunpack.c.l.b16 %v1062
    %v1787 = vunpack.c.h.b16 %v1062
    %v1788 = vunpack.c.l.b16 %v1063
    %v1789 = vunpack.c.h.b16 %v1063
    %v1790 = vunpack.c.l.b16 %v1064
    %v1791 = vunpack.c.h.b16 %v1064
    %v1792 = vunpack.c.l.b16 %v1065
    %v1793 = vunpack.c.h.b16 %v1065
    %v1794 = vunpack.c.l.b16 %v1066
    %v1795 = vunpack.c.h.b16 %v1066
    %v1796 = vunpack.c.l.b16 %v1067
    %v1797 = vunpack.c.h.b16 %v1067
    %v1798 = vunpack.c.l.b16 %v1068
    %v1799 = vunpack.c.h.b16 %v1068
    %v1800 = vunpack.c.l.b16 %v1069
    %v1801 = vunpack.c.h.b16 %v1069
    %v1802 = vunpack.c.l.b16 %v1070
    %v1803 = vunpack.c.h.b16 %v1070
    %v1804 = vunpack.c.l.b16 %v1071
    %v1805 = vunpack.c.h.b16 %v1071
    %v1806 = vunpack.c.l.b16 %v1072
    %v1807 = vunpack.c.h.b16 %v1072
    %v1808 = vunpack.c.l.b16 %v1073
    %v1809 = vunpack.c.h.b16 %v1073
    %v1810 = vunpack.c.l.b16 %v1074
    %v1811 = vunpack.c.h.b16 %v1074
    %v1812 = vunpack.c.l.b16 %v1075
    %v1813 = vunpack.c.h.b16 %v1075
    %v1814 = vunpack.c.l.b16 %v1076
    %v1815 = vunpack.c.h.b16 %v1076
    %v1816 = vunpack.c.l.b16 %v1077
    %v1817 = vunpack.c.h.b16 %v1077
    %v1818 = vunpack.c.l.b16 %v1078
    %v1819 = vunpack.c.h.b16 %v1078
    %v1820 = vunpack.c.l.b16 %v1079
    %v1821 = vunpack.c.h.b16 %v1079
    %v1822 = vunpack.c.l.b16 %v1080
    %v1823 = vunpack.c.h.b16 %v1080
    %v1824 = vunpack.c.l.b16 %v1081
    %v1825 = vunpack.c.h.b16 %v1081
    %v1826 = vunpack.c.l.b16 %v1082
    %v1827 = vunpack.c.h.b16 %v1082
    %v1828 = vunpack.c.l.b16 %v1083
    %v1829 = vunpack.c.h.b16 %v1083
    %v1830 = vunpack.c.l.b16 %v1084
    %v1831 = vunpack.c.h.b16 %v1084
    %v1832 = vunpack.c.l.b16 %v1085
    %v1833 = vunpack.c.h.b16 %v1085
    %v1834 = vunpack.c.l.b16 %v1086
    %v1835 = vunpack.c.h.b16 %v1086
    %v1836 = vunpack.c.l.b16 %v1087
    %v1837 = vunpack.c.h.b16 %v1087
    %v1838 = vunpack.c.l.b16 %v1088
    %v1839 = vunpack.c.h.b16 %v1088
    %v1840 = vunpack.c.l.b16 %v1089
    %v1841 = vunpack.c.h.b16 %v1089
    %v1842 = vunpack.c.l.b16 %v1090
    %v1843 = vunpack.c.h.b16 %v1090
    %v1844 = vunpack.c.l.b16 %v1091
    %v1845 = vunpack.c.h.b16 %v1091
    %v1846 = vunpack.c.l.b16 %v1092
    %v1847 = vunpack.c.h.b16 %v1092
    %v1848 = vunpack.c.l.b16 %v1093
    %v1849 = vunpack.c.h.b16 %v1093
    %v1850 = vunpack.c.l.b16 %v1094
    %v1851 = vunpack.c.h.b16 %v1094
    %v1852 = vunpack.c.l.b16 %v1095
    %v1853 = vunpack.c.h.b16 %v1095
    %v1854 = vunpack.c.l.b16 %v1096
    %v1855 = vunpack.c.h.b16 %v1096
    %v1856 = vunpack.c.l.b16 %v1097
    %v1857 = vunpack.c.h.b16 %v1097
    %v1858 = vunpack.c.l.b16 %v1098
    %v1859 = vunpack.c.h.b16 %v1098
    %v1860 = vunpack.c.l.b16 %v1099
    %v1861 = vunpack.c.h.b16 %v1099
    %v1862 = vunpack.c.l.b16 %v1100
    %v1863 = vunpack.c.h.b16 %v1100
    %v1864 = vunpack.c.l.b16 %v1101
    %v1865 = vunpack.c.h.b16 %v1101
    %v1866 = vunpack.c.l.b16 %v1102
    %v1867 = vunpack.c.h.b16 %v1102
    %v1868 = vunpack.c.l.b16 %v1103
    %v1869 = vunpack.c.h.b16 %v1103
    %v1870 = vunpack.c.l.b16 %v1104
    %v1871 = vunpack.c.h.b16 %v1104
    %v1872 = vunpack.c.l.b16 %v1105
    %v1873 = vunpack.c.h.b16 %v1105
    %v1874 = vunpack.c.l.b16 %v1106
    %v1875 = vunpack.c.h.b16 %v1106
    %v1876 = vunpack.c.l.b16 %v1107
    %v1877 = vunpack.c.h.b16 %v1107
    %v1878 = vunpack.c.l.b16 %v1108
    %v1879 = vunpack.c.h.b16 %v1108
    %v1880 = vunpack.c.l.b16 %v1109
    %v1881 = vunpack.c.h.b16 %v1109
    %v1882 = vunpack.c.l.b16 %v1110
    %v1883 = vunpack.c.h.b16 %v1110
    %v1884 = vunpack.c.l.b16 %v1111
    %v1885 = vunpack.c.h.b16 %v1111
    %v1886 = vunpack.c.l.b16 %v1112
    %v1887 = vunpack.c.h.b16 %v1112
    %v1888 = vunpack.c.l.b16 %v1113
    %v1889 = vunpack.c.h.b16 %v1113
    %v1890 = vunpack.c.l.b16 %v1114
    %v1891 = vunpack.c.h.b16 %v1114
    %v1892 = vunpack.c.l.b16 %v1115
    %v1893 = vunpack.c.h.b16 %v1115
    %v1894 = vunpack.c.l.b16 %v1116
    %v1895 = vunpack.c.h.b16 %v1116
    %v1896 = vunpack.c.l.b16 %v1117
    %v1897 = vunpack.c.h.b16 %v1117
    %v1898 = vunpack.c.l.b16 %v1118
    %v1899 = vunpack.c.h.b16 %v1118
    %v1900 = vunpack.c.l.b16 %v1119
    %v1901 = vunpack.c.h.b16 %v1119
    %v1902 = vunpack.c.l.b16 %v1120
    %v1903 = vunpack.c.h.b16 %v1120
    %v1904 = vunpack.c.l.b16 %v1121
    %v1905 = vunpack.c.h.b16 %v1121
    %v1906 = vunpack.c.l.b16 %v1122
    %v1907 = vunpack.c.h.b16 %v1122
    %v1908 = vunpack.c.l.b16 %v1123
    %v1909 = vunpack.c.h.b16 %v1123
    %v1910 = vunpack.c.l.b16 %v1124
    %v1911 = vunpack.c.h.b16 %v1124
    %v1912 = vunpack.c.l.b16 %v1125
    %v1913 = vunpack.c.h.b16 %v1125
    %v1914 = vunpack.c.l.b16 %v1126
    %v1915 = vunpack.c.h.b16 %v1126
    %v1916 = vunpack.c.l.b16 %v1127
    %v1917 = vunpack.c.h.b16 %v1127
    %v1918 = vunpack.c.l.b16 %v1128
    %v1919 = vunpack.c.h.b16 %v1128
    %v1920 = vunpack.c.l.b16 %v1129
    %v1921 = vunpack.c.h.b16 %v1129
    %v1922 = vunpack.c.l.b16 %v1130
    %v1923 = vunpack.c.h.b16 %v1130
    %v1924 = vunpack.c.l.b16 %v1131
    %v1925 = vunpack.c.h.b16 %v1131
    %v1926 = vunpack.c.l.b16 %v1132
    %v1927 = vunpack.c.h.b16 %v1132
    %v1928 = vunpack.c.l.b16 %v1133
    %v1929 = vunpack.c.h.b16 %v1133
    %v1930 = vunpack.c.l.b16 %v1134
    %v1931 = vunpack.c.h.b16 %v1134
    %v1932 = vpack.c.b16 %v1428, %v1420
    %v1933 = vpack.c.b16 %v1429, %v1421
    %v1934 = vpack.c.b16 %v1430, %v1422
    %v1935 = vpack.c.b16 %v1431, %v1423
    %v1936 = vpack.c.b16 %v1432, %v1424
    %v1937 = vpack.c.b16 %v1433, %v1425
    %v1938 = vpack.c.b16 %v1434, %v1426
    %v1939 = vpack.c.b16 %v1435, %v1427
    %v1940 = vpack.c.b16 %v1444, %v1436
    %v1941 = vpack.c.b16 %v1445, %v1437
    %v1942 = vpack.c.b16 %v1446, %v1438
    %v1943 = vpack.c.b16 %v1447, %v1439
    %v1944 = vpack.c.b16 %v1448, %v1440
    %v1945 = vpack.c.b16 %v1449, %v1441
    %v1946 = vpack.c.b16 %v1450, %v1442
    %v1947 = vpack.c.b16 %v1451, %v1443
    %v1948 = vpack.c.b16 %v1460, %v1452
    %v1949 = vpack.c.b16 %v1461, %v1453
    %v1950 = vpack.c.b16 %v1462, %v1454
    %v1951 = vpack.c.b16 %v1463, %v1455
    %v1952 = vpack.c.b16 %v1464, %v1456
    %v1953 = vpack.c.b16 %v1465, %v1457
    %v1954 = vpack.c.b16 %v1466, %v1458
    %v1955 = vpack.c.b16 %v1467, %v1459
    %v1956 = vpack.c.b16 %v1476, %v1468
    %v1957 = vpack.c.b16 %v1477, %v1469
    %v1958 = vpack.c.b16 %v1478, %v1470
    %v1959 = vpack.c.b16 %v1479, %v1471
    %v1960 = vpack.c.b16 %v1480, %v1472
    %v1961 = vpack.c.b16 %v1481, %v1473
    %v1962 = vpack.c.b16 %v1482, %v1474
    %v1963 = vpack.c.b16 %v1483, %v1475
    %v1964 = vpack.c.b16 %v1492, %v1484
    %v1965 = vpack.c.b16 %v1493, %v1485
    %v1966 = vpack.c.b16 %v1494, %v1486
    %v1967 = vpack.c.b16 %v1495, %v1487
    %v1968 = vpack.c.b16 %v1496, %v1488
    %v1969 = vpack.c.b16 %v1497, %v1489
    %v1970 = vpack.c.b16 %v1498, %v1490
    %v1971 = vpack.c.b16 %v1499, %v1491
    %v1972 = vpack.c.b16 %v1508, %v1500
    %v1973 = vpack.c.b16 %v1509, %v1501
    %v1974 = vpack.c.b16 %v1510, %v1502
    %v1975 = vpack.c.b16 %v1511, %v1503
    %v1976 = vpack.c.b16 %v1512, %v1504
    %v1977 = vpack.c.b16 %v1513, %v1505
    %v1978 = vpack.c.b16 %v1514, %v1506
    %v1979 = vpack.c.b16 %v1515, %v1507
    %v1980 = vpack.c.b16 %v1524, %v1516
    %v1981 = vpack.c.b16 %v1525, %v1517
    %v1982 = vpack.c.b16 %v1526, %v1518
    %v1983 = vpack.c.b16 %v1527, %v1519
    %v1984 = vpack.c.b16 %v1528, %v1520
    %v1985 = vpack.c.b16 %v1529, %v1521
    %v1986 = vpack.c.b16 %v1530, %v1522
    %v1987 = vpack.c.b16 %v1531, %v1523
    %v1988 = vpack.c.b16 %v1540, %v1532
    %v1989 = vpack.c.b16 %v1541, %v1533
    %v1990 = vpack.c.b16 %v1542, %v1534
    %v1991 = vpack.c.b16 %v1543, %v1535
    %v1992 = vpack.c.b16 %v1544, %v1536
    %v1993 = vpack.c.b16 %v1545, %v1537
    %v1994 = vpack.c.b16 %v1546, %v1538
    %v1995 = vpack.c.b16 %v1547, %v1539
    %v1996 = vpack.c.b16 %v1556, %v1548
    %v1997 = vpack.c.b16 %v1557, %v1549
    %v1998 = vpack.c.b16 %v1558, %v1550
    %v1999 = vpack.c.b16 %v1559, %v1551
    %v2000 = vpack.c.b16 %v1560, %v1552
    %v2001 = vpack.c.b16 %v1561, %v1553
    %v2002 = vpack.c.b16 %v1562, %v1554
    %v2003 = vpack.c.b16 %v1563, %v1555
    %v2004 = vpack.c.b16 %v1572, %v1564
    %v2005 = vpack.c.b16 %v1573, %v1565
    %v2006 = vpack.c.b16 %v1574, %v1566
    %v2007 = vpack.c.b16 %v1575, %v1567
    %v2008 = vpack.c.b16 %v1576, %v1568
    %v2009 = vpack.c.b16 %v1577, %v1569
    %v2010 = vpack.c.b16 %v1578, %v1570
    %v2011 = vpack.c.b16 %v1579, %v1571
    %v2012 = vpack.c.b16 %v1588, %v1580
    %v2013 = vpack.c.b16 %v1589, %v1581
    %v2014 = vpack.c.b16 %v1590, %v1582
    %v2015 = vpack.c.b16 %v1591, %v1583
    %v2016 = vpack.c.b16 %v1592, %v1584
    %v2017 = vpack.c.b16 %v1593, %v1585
    %v2018 = vpack.c.b16 %v1594, %v1586
    %v2019 = vpack.c.b16 %v1595, %v1587
    %v2020 = vpack.c.b16 %v1604, %v1596
    %v2021 = vpack.c.b16 %v1605, %v1597
    %v2022 = vpack.c.b16 %v1606, %v1598
    %v2023 = vpack.c.b16 %v1607, %v1599
    %v2024 = vpack.c.b16 %v1608, %v1600
    %v2025 = vpack.c.b16 %v1609, %v1601
    %v2026 = vpack.c.b16 %v1610, %v1602
    %v2027 = vpack.c.b16 %v1611, %v1603
    %v2028 = vpack.c.b16 %v1620, %v1612
    %v2029 = vpack.c.b16 %v1621, %v1613
    %v2030 = vpack.c.b16 %v1622, %v1614
    %v2031 = vpack.c.b16 %v1623, %v1615
    %v2032 = vpack.c.b16 %v1624, %v1616
    %v2033 = vpack.c.b16 %v1625, %v1617
    %v2034 = vpack.c.b16 %v1626, %v1618
    %v2035 = vpack.c.b16 %v1627, %v1619
    %v2036 = vpack.c.b16 %v1636, %v1628
    %v2037 = vpack.c.b16 %v1637, %v1629
    %v2038 = vpack.c.b16 %v1638, %v1630
    %v2039 = vpack.c.b16 %v1639, %v1631
    %v2040 = vpack.c.b16 %v1640, %v1632
    %v2041 = vpack.c.b16 %v1641, %v1633
    %v2042 = vpack.c.b16 %v1642, %v1634
    %v2043 = vpack.c.b16 %v1643, %v1635
    %v2044 = vpack.c.b16 %v1652, %v1644
    %v2045 = vpack.c.b16 %v1653, %v1645
    %v2046 = vpack.c.b16 %v1654, %v1646
    %v2047 = vpack.c.b16 %v1655, %v1647
    %v2048 = vpack.c.b16 %v1656, %v1648
    %v2049 = vpack.c.b16 %v1657, %v1649
    %v2050 = vpack.c.b16 %v1658, %v1650
    %v2051 = vpack.c.b16 %v1659, %v1651
    %v2052 = vpack.c.b16 %v1668, %v1660
    %v2053 = vpack.c.b16 %v1669, %v1661
    %v2054 = vpack.c.b16 %v1670, %v1662
    %v2055 = vpack.c.b16 %v1671, %v1663
    %v2056 = vpack.c.b16 %v1672, %v1664
    %v2057 = vpack.c.b16 %v1673, %v1665
    %v2058 = vpack.c.b16 %v1674, %v1666
    %v2059 = vpack.c.b16 %v1675, %v1667
    %v2060 = vpack.c.b16 %v1684, %v1676
    %v2061 = vpack.c.b16 %v1685, %v1677
    %v2062 = vpack.c.b16 %v1686, %v1678
    %v2063 = vpack.c.b16 %v1687, %v1679
    %v2064 = vpack.c.b16 %v1688, %v1680
    %v2065 = vpack.c.b16 %v1689, %v1681
    %v2066 = vpack.c.b16 %v1690, %v1682
    %v2067 = vpack.c.b16 %v1691, %v1683
    %v2068 = vpack.c.b16 %v1700, %v1692
    %v2069 = vpack.c.b16 %v1701, %v1693
    %v2070 = vpack.c.b16 %v1702, %v1694
    %v2071 = vpack.c.b16 %v1703, %v1695
    %v2072 = vpack.c.b16 %v1704, %v1696
    %v2073 = vpack.c.b16 %v1705, %v1697
    %v2074 = vpack.c.b16 %v1706, %v1698
    %v2075 = vpack.c.b16 %v1707, %v1699
    %v2076 = vpack.c.b16 %v1716, %v1708
    %v2077 = vpack.c.b16 %v1717, %v1709
    %v2078 = vpack.c.b16 %v1718, %v1710
    %v2079 = vpack.c.b16 %v1719, %v1711
    %v2080 = vpack.c.b16 %v1720, %v1712
    %v2081 = vpack.c.b16 %v1721, %v1713
    %v2082 = vpack.c.b16 %v1722, %v1714
    %v2083 = vpack.c.b16 %v1723, %v1715
    %v2084 = vpack.c.b16 %v1732, %v1724
    %v2085 = vpack.c.b16 %v1733, %v1725
    %v2086 = vpack.c.b16 %v1734, %v1726
    %v2087 = vpack.c.b16 %v1735, %v1727
    %v2088 = vpack.c.b16 %v1736, %v1728
    %v2089 = vpack.c.b16 %v1737, %v1729
    %v2090 = vpack.c.b16 %v1738, %v1730
    %v2091 = vpack.c.b16 %v1739, %v1731
    %v2092 = vpack.c.b16 %v1748, %v1740
    %v2093 = vpack.c.b16 %v1749, %v1741
    %v2094 = vpack.c.b16 %v1750, %v1742
    %v2095 = vpack.c.b16 %v1751, %v1743
    %v2096 = vpack.c.b16 %v1752, %v1744
    %v2097 = vpack.c.b16 %v1753, %v1745
    %v2098 = vpack.c.b16 %v1754, %v1746
    %v2099 = vpack.c.b16 %v1755, %v1747
    %v2100 = vpack.c.b16 %v1764, %v1756
    %v2101 = vpack.c.b16 %v1765, %v1757
    %v2102 = vpack.c.b16 %v1766, %v1758
    %v2103 = vpack.c.b16 %v1767, %v1759
    %v2104 = vpack.c.b16 %v1768, %v1760
    %v2105 = vpack.c.b16 %v1769, %v1761
    %v2106 = vpack.c.b16 %v1770, %v1762
    %v2107 = vpack.c.b16 %v1771, %v1763
    %v2108 = vpack.c.b16 %v1780, %v1772
    %v2109 = vpack.c.b16 %v1781, %v1773
    %v2110 = vpack.c.b16 %v1782, %v1774
    %v2111 = vpack.c.b16 %v1783, %v1775
    %v2112 = vpack.c.b16 %v1784, %v1776
    %v2113 = vpack.c.b16 %v1785, %v1777
    %v2114 = vpack.c.b16 %v1786, %v1778
    %v2115 = vpack.c.b16 %v1787, %v1779
    %v2116 = vpack.c.b16 %v1796, %v1788
    %v2117 = vpack.c.b16 %v1797, %v1789
    %v2118 = vpack.c.b16 %v1798, %v1790
    %v2119 = vpack.c.b16 %v1799, %v1791
    %v2120 = vpack.c.b16 %v1800, %v1792
    %v2121 = vpack.c.b16 %v1801, %v1793
    %v2122 = vpack.c.b16 %v1802, %v1794
    %v2123 = vpack.c.b16 %v1803, %v1795
    %v2124 = vpack.c.b16 %v1812, %v1804
    %v2125 = vpack.c.b16 %v1813, %v1805
    %v2126 = vpack.c.b16 %v1814, %v1806
    %v2127 = vpack.c.b16 %v1815, %v1807
    %v2128 = vpack.c.b16 %v1816, %v1808
    %v2129 = vpack.c.b16 %v1817, %v1809
    %v2130 = vpack.c.b16 %v1818, %v1810
    %v2131 = vpack.c.b16 %v1819, %v1811
    %v2132 = vpack.c.b16 %v1828, %v1820
    %v2133 = vpack.c.b16 %v1829, %v1821
    %v2134 = vpack.c.b16 %v1830, %v1822
    %v2135 = vpack.c.b16 %v1831, %v1823
    %v2136 = vpack.c.b16 %v1832, %v1824
    %v2137 = vpack.c.b16 %v1833, %v1825
    %v2138 = vpack.c.b16 %v1834, %v1826
    %v2139 = vpack.c.b16 %v1835, %v1827
    %v2140 = vpack.c.b16 %v1844, %v1836
    %v2141 = vpack.c.b16 %v1845, %v1837
    %v2142 = vpack.c.b16 %v1846, %v1838
    %v2143 = vpack.c.b16 %v1847, %v1839
    %v2144 = vpack.c.b16 %v1848, %v1840
    %v2145 = vpack.c.b16 %v1849, %v1841
    %v2146 = vpack.c.b16 %v1850, %v1842
    %v2147 = vpack.c.b16 %v1851, %v1843
    %v2148 = vpack.c.b16 %v1860, %v1852
    %v2149 = vpack.c.b16 %v1861, %v1853
    %v2150 = vpack.c.b16 %v1862, %v1854
    %v2151 = vpack.c.b16 %v1863, %v1855
    %v2152 = vpack.c.b16 %v1864, %v1856
    %v2153 = vpack.c.b16 %v1865, %v1857
    %v2154 = vpack.c.b16 %v1866, %v1858
    %v2155 = vpack.c.b16 %v1867, %v1859
    %v2156 = vpack.c.b16 %v1876, %v1868
    %v2157 = vpack.c.b16 %v1877, %v1869
    %v2158 = vpack.c.b16 %v1878, %v1870
    %v2159 = vpack.c.b16 %v1879, %v1871
    %v2160 = vpack.c.b16 %v1880, %v1872
    %v2161 = vpack.c.b16 %v1881, %v1873
    %v2162 = vpack.c.b16 %v1882, %v1874
    %v2163 = vpack.c.b16 %v1883, %v1875
    %v2164 = vpack.c.b16 %v1892, %v1884
    %v2165 = vpack.c.b16 %v1893, %v1885
    %v2166 = vpack.c.b16 %v1894, %v1886
    %v2167 = vpack.c.b16 %v1895, %v1887
    %v2168 = vpack.c.b16 %v1896, %v1888
    %v2169 = vpack.c.b16 %v1897, %v1889
    %v2170 = vpack.c.b16 %v1898, %v1890
    %v2171 = vpack.c.b16 %v1899, %v1891
    %v2172 = vpack.c.b16 %v1908, %v1900
    %v2173 = vpack.c.b16 %v1909, %v1901
    %v2174 = vpack.c.b16 %v1910, %v1902
    %v2175 = vpack.c.b16 %v1911, %v1903
    %v2176 = vpack.c.b16 %v1912, %v1904
    %v2177 = vpack.c.b16 %v1913, %v1905
    %v2178 = vpack.c.b16 %v1914, %v1906
    %v2179 = vpack.c.b16 %v1915, %v1907
    %v2180 = vpack.c.b16 %v1924, %v1916
    %v2181 = vpack.c.b16 %v1925, %v1917
    %v2182 = vpack.c.b16 %v1926, %v1918
    %v2183 = vpack.c.b16 %v1927, %v1919
    %v2184 = vpack.c.b16 %v1928, %v1920
    %v2185 = vpack.c.b16 %v1929, %v1921
    %v2186 = vpack.c.b16 %v1930, %v1922
    %v2187 = vpack.c.b16 %v1931, %v1923
    %2444 = vmatpush.bf16.msra.mxu0 %v1988
    %2445 = vmatpush.bf16.msra.mxu0 %v1980
    %2446 = vmatpush.bf16.msra.mxu0 %v1972
    %2447 = vmatpush.bf16.msra.mxu0 %v1964
    %2448 = vmatpush.bf16.msra.mxu0 %v1956
    %2449 = vmatpush.bf16.msra.mxu0 %v1948
    %2450 = vmatpush.bf16.msra.mxu0 %v1940
    %2451 = vmatpush.bf16.msra.mxu0 %v1932
    %2452 = vmatmul.bf16.gmra.mxu0 %v875
    %v2453 = vpop.f32.mrf.mxu0
    %v2454 = vadd.f32 %v1156, %v2453
    %v2455 = vpop.f32.mrf.mxu0
    %2456 = vdwg.mxu0
    %2457 = vmatpush.bf16.msra.mxu0 %v2052
    %2458 = vmatpush.bf16.msra.mxu0 %v2044
    %2459 = vmatpush.bf16.msra.mxu0 %v2036
    %2460 = vmatpush.bf16.msra.mxu0 %v2028
    %2461 = vmatpush.bf16.msra.mxu0 %v2020
    %2462 = vmatpush.bf16.msra.mxu0 %v2012
    %2463 = vmatpush.bf16.msra.mxu0 %v2004
    %2464 = vmatpush.bf16.msra.mxu0 %v1996
    %2465 = vmatmul.bf16.gmra.mxu0 %v876
    %v2466 = vpop.f32.mrf.mxu0
    %v2467 = vadd.f32 %v2454, %v2466
    %v2468 = vpop.f32.mrf.mxu0
    %2469 = vdwg.mxu0
    %2470 = vmatpush.bf16.msra.mxu0 %v2116
    %2471 = vmatpush.bf16.msra.mxu0 %v2108
    %2472 = vmatpush.bf16.msra.mxu0 %v2100
    %2473 = vmatpush.bf16.msra.mxu0 %v2092
    %2474 = vmatpush.bf16.msra.mxu0 %v2084
    %2475 = vmatpush.bf16.msra.mxu0 %v2076
    %2476 = vmatpush.bf16.msra.mxu0 %v2068
    %2477 = vmatpush.bf16.msra.mxu0 %v2060
    %2478 = vmatmul.bf16.gmra.mxu0 %v877
    %v2479 = vpop.f32.mrf.mxu0
    %v2480 = vadd.f32 %v2467, %v2479
    %v2481 = vpop.f32.mrf.mxu0
    %2482 = vdwg.mxu0
    %2483 = vmatpush.bf16.msra.mxu0 %v2180
    %2484 = vmatpush.bf16.msra.mxu0 %v2172
    %2485 = vmatpush.bf16.msra.mxu0 %v2164
    %2486 = vmatpush.bf16.msra.mxu0 %v2156
    %2487 = vmatpush.bf16.msra.mxu0 %v2148
    %2488 = vmatpush.bf16.msra.mxu0 %v2140
    %2489 = vmatpush.bf16.msra.mxu0 %v2132
    %2490 = vmatpush.bf16.msra.mxu0 %v2124
    %2491 = vmatmul.bf16.gmra.mxu0 %v878
    %v2492 = vpop.f32.mrf.mxu0
    %v2493 = vadd.f32 %v2480, %v2492
    %v2494 = vpop.f32.mrf.mxu0
    %2495 = vdwg.mxu0
    %2496 = vmatpush.bf16.msra.mxu0 %v1989
    %2497 = vmatpush.bf16.msra.mxu0 %v1981
    %2498 = vmatpush.bf16.msra.mxu0 %v1973
    %2499 = vmatpush.bf16.msra.mxu0 %v1965
    %2500 = vmatpush.bf16.msra.mxu0 %v1957
    %2501 = vmatpush.bf16.msra.mxu0 %v1949
    %2502 = vmatpush.bf16.msra.mxu0 %v1941
    %2503 = vmatpush.bf16.msra.mxu0 %v1933
    %2504 = vmatmul.bf16.gmra.mxu0 %v875
    %v2505 = vpop.f32.mrf.mxu0
    %v2506 = vadd.f32 %v1157, %v2505
    %v2507 = vpop.f32.mrf.mxu0
    %2508 = vdwg.mxu0
    %2509 = vmatpush.bf16.msra.mxu0 %v2053
    %2510 = vmatpush.bf16.msra.mxu0 %v2045
    %2511 = vmatpush.bf16.msra.mxu0 %v2037
    %2512 = vmatpush.bf16.msra.mxu0 %v2029
    %2513 = vmatpush.bf16.msra.mxu0 %v2021
    %2514 = vmatpush.bf16.msra.mxu0 %v2013
    %2515 = vmatpush.bf16.msra.mxu0 %v2005
    %2516 = vmatpush.bf16.msra.mxu0 %v1997
    %2517 = vmatmul.bf16.gmra.mxu0 %v876
    %v2518 = vpop.f32.mrf.mxu0
    %v2519 = vadd.f32 %v2506, %v2518
    %v2520 = vpop.f32.mrf.mxu0
    %2521 = vdwg.mxu0
    %2522 = vmatpush.bf16.msra.mxu0 %v2117
    %2523 = vmatpush.bf16.msra.mxu0 %v2109
    %2524 = vmatpush.bf16.msra.mxu0 %v2101
    %2525 = vmatpush.bf16.msra.mxu0 %v2093
    %2526 = vmatpush.bf16.msra.mxu0 %v2085
    %2527 = vmatpush.bf16.msra.mxu0 %v2077
    %2528 = vmatpush.bf16.msra.mxu0 %v2069
    %2529 = vmatpush.bf16.msra.mxu0 %v2061
    %2530 = vmatmul.bf16.gmra.mxu0 %v877
    %v2531 = vpop.f32.mrf.mxu0
    %v2532 = vadd.f32 %v2519, %v2531
    %v2533 = vpop.f32.mrf.mxu0
    %2534 = vdwg.mxu0
    %2535 = vmatpush.bf16.msra.mxu0 %v2181
    %2536 = vmatpush.bf16.msra.mxu0 %v2173
    %2537 = vmatpush.bf16.msra.mxu0 %v2165
    %2538 = vmatpush.bf16.msra.mxu0 %v2157
    %2539 = vmatpush.bf16.msra.mxu0 %v2149
    %2540 = vmatpush.bf16.msra.mxu0 %v2141
    %2541 = vmatpush.bf16.msra.mxu0 %v2133
    %2542 = vmatpush.bf16.msra.mxu0 %v2125
    %2543 = vmatmul.bf16.gmra.mxu0 %v878
    %v2544 = vpop.f32.mrf.mxu0
    %v2545 = vadd.f32 %v2532, %v2544
    %v2546 = vpop.f32.mrf.mxu0
    %2547 = vdwg.mxu0
    %2548 = vmatpush.bf16.msra.mxu0 %v1990
    %2549 = vmatpush.bf16.msra.mxu0 %v1982
    %2550 = vmatpush.bf16.msra.mxu0 %v1974
    %2551 = vmatpush.bf16.msra.mxu0 %v1966
    %2552 = vmatpush.bf16.msra.mxu0 %v1958
    %2553 = vmatpush.bf16.msra.mxu0 %v1950
    %2554 = vmatpush.bf16.msra.mxu0 %v1942
    %2555 = vmatpush.bf16.msra.mxu0 %v1934
    %2556 = vmatmul.bf16.gmra.mxu0 %v875
    %v2557 = vpop.f32.mrf.mxu0
    %v2558 = vadd.f32 %v1158, %v2557
    %v2559 = vpop.f32.mrf.mxu0
    %2560 = vdwg.mxu0
    %2561 = vmatpush.bf16.msra.mxu0 %v2054
    %2562 = vmatpush.bf16.msra.mxu0 %v2046
    %2563 = vmatpush.bf16.msra.mxu0 %v2038
    %2564 = vmatpush.bf16.msra.mxu0 %v2030
    %2565 = vmatpush.bf16.msra.mxu0 %v2022
    %2566 = vmatpush.bf16.msra.mxu0 %v2014
    %2567 = vmatpush.bf16.msra.mxu0 %v2006
    %2568 = vmatpush.bf16.msra.mxu0 %v1998
    %2569 = vmatmul.bf16.gmra.mxu0 %v876
    %v2570 = vpop.f32.mrf.mxu0
    %v2571 = vadd.f32 %v2558, %v2570
    %v2572 = vpop.f32.mrf.mxu0
    %2573 = vdwg.mxu0
    %2574 = vmatpush.bf16.msra.mxu0 %v2118
    %2575 = vmatpush.bf16.msra.mxu0 %v2110
    %2576 = vmatpush.bf16.msra.mxu0 %v2102
    %2577 = vmatpush.bf16.msra.mxu0 %v2094
    %2578 = vmatpush.bf16.msra.mxu0 %v2086
    %2579 = vmatpush.bf16.msra.mxu0 %v2078
    %2580 = vmatpush.bf16.msra.mxu0 %v2070
    %2581 = vmatpush.bf16.msra.mxu0 %v2062
    %2582 = vmatmul.bf16.gmra.mxu0 %v877
    %v2583 = vpop.f32.mrf.mxu0
    %v2584 = vadd.f32 %v2571, %v2583
    %v2585 = vpop.f32.mrf.mxu0
    %2586 = vdwg.mxu0
    %2587 = vmatpush.bf16.msra.mxu0 %v2182
    %2588 = vmatpush.bf16.msra.mxu0 %v2174
    %2589 = vmatpush.bf16.msra.mxu0 %v2166
    %2590 = vmatpush.bf16.msra.mxu0 %v2158
    %2591 = vmatpush.bf16.msra.mxu0 %v2150
    %2592 = vmatpush.bf16.msra.mxu0 %v2142
    %2593 = vmatpush.bf16.msra.mxu0 %v2134
    %2594 = vmatpush.bf16.msra.mxu0 %v2126
    %2595 = vmatmul.bf16.gmra.mxu0 %v878
    %v2596 = vpop.f32.mrf.mxu0
    %v2597 = vadd.f32 %v2584, %v2596
    %v2598 = vpop.f32.mrf.mxu0
    %2599 = vdwg.mxu0
    %2600 = vmatpush.bf16.msra.mxu0 %v1991
    %2601 = vmatpush.bf16.msra.mxu0 %v1983
    %2602 = vmatpush.bf16.msra.mxu0 %v1975
    %2603 = vmatpush.bf16.msra.mxu0 %v1967
    %2604 = vmatpush.bf16.msra.mxu0 %v1959
    %2605 = vmatpush.bf16.msra.mxu0 %v1951
    %2606 = vmatpush.bf16.msra.mxu0 %v1943
    %2607 = vmatpush.bf16.msra.mxu0 %v1935
    %2608 = vmatmul.bf16.gmra.mxu0 %v875
    %v2609 = vpop.f32.mrf.mxu0
    %v2610 = vadd.f32 %v1159, %v2609
    %v2611 = vpop.f32.mrf.mxu0
    %2612 = vdwg.mxu0
    %2613 = vmatpush.bf16.msra.mxu0 %v2055
    %2614 = vmatpush.bf16.msra.mxu0 %v2047
    %2615 = vmatpush.bf16.msra.mxu0 %v2039
    %2616 = vmatpush.bf16.msra.mxu0 %v2031
    %2617 = vmatpush.bf16.msra.mxu0 %v2023
    %2618 = vmatpush.bf16.msra.mxu0 %v2015
    %2619 = vmatpush.bf16.msra.mxu0 %v2007
    %2620 = vmatpush.bf16.msra.mxu0 %v1999
    %2621 = vmatmul.bf16.gmra.mxu0 %v876
    %v2622 = vpop.f32.mrf.mxu0
    %v2623 = vadd.f32 %v2610, %v2622
    %v2624 = vpop.f32.mrf.mxu0
    %2625 = vdwg.mxu0
    %2626 = vmatpush.bf16.msra.mxu0 %v2119
    %2627 = vmatpush.bf16.msra.mxu0 %v2111
    %2628 = vmatpush.bf16.msra.mxu0 %v2103
    %2629 = vmatpush.bf16.msra.mxu0 %v2095
    %2630 = vmatpush.bf16.msra.mxu0 %v2087
    %2631 = vmatpush.bf16.msra.mxu0 %v2079
    %2632 = vmatpush.bf16.msra.mxu0 %v2071
    %2633 = vmatpush.bf16.msra.mxu0 %v2063
    %2634 = vmatmul.bf16.gmra.mxu0 %v877
    %v2635 = vpop.f32.mrf.mxu0
    %v2636 = vadd.f32 %v2623, %v2635
    %v2637 = vpop.f32.mrf.mxu0
    %2638 = vdwg.mxu0
    %2639 = vmatpush.bf16.msra.mxu0 %v2183
    %2640 = vmatpush.bf16.msra.mxu0 %v2175
    %2641 = vmatpush.bf16.msra.mxu0 %v2167
    %2642 = vmatpush.bf16.msra.mxu0 %v2159
    %2643 = vmatpush.bf16.msra.mxu0 %v2151
    %2644 = vmatpush.bf16.msra.mxu0 %v2143
    %2645 = vmatpush.bf16.msra.mxu0 %v2135
    %2646 = vmatpush.bf16.msra.mxu0 %v2127
    %2647 = vmatmul.bf16.gmra.mxu0 %v878
    %v2648 = vpop.f32.mrf.mxu0
    %v2649 = vadd.f32 %v2636, %v2648
    %v2650 = vpop.f32.mrf.mxu0
    %2651 = vdwg.mxu0
    %2652 = vmatpush.bf16.msra.mxu0 %v1992
    %2653 = vmatpush.bf16.msra.mxu0 %v1984
    %2654 = vmatpush.bf16.msra.mxu0 %v1976
    %2655 = vmatpush.bf16.msra.mxu0 %v1968
    %2656 = vmatpush.bf16.msra.mxu0 %v1960
    %2657 = vmatpush.bf16.msra.mxu0 %v1952
    %2658 = vmatpush.bf16.msra.mxu0 %v1944
    %2659 = vmatpush.bf16.msra.mxu0 %v1936
    %2660 = vmatmul.bf16.gmra.mxu0 %v875
    %v2661 = vpop.f32.mrf.mxu0
    %v2662 = vadd.f32 %v1160, %v2661
    %v2663 = vpop.f32.mrf.mxu0
    %2664 = vdwg.mxu0
    %2665 = vmatpush.bf16.msra.mxu0 %v2056
    %2666 = vmatpush.bf16.msra.mxu0 %v2048
    %2667 = vmatpush.bf16.msra.mxu0 %v2040
    %2668 = vmatpush.bf16.msra.mxu0 %v2032
    %2669 = vmatpush.bf16.msra.mxu0 %v2024
    %2670 = vmatpush.bf16.msra.mxu0 %v2016
    %2671 = vmatpush.bf16.msra.mxu0 %v2008
    %2672 = vmatpush.bf16.msra.mxu0 %v2000
    %2673 = vmatmul.bf16.gmra.mxu0 %v876
    %v2674 = vpop.f32.mrf.mxu0
    %v2675 = vadd.f32 %v2662, %v2674
    %v2676 = vpop.f32.mrf.mxu0
    %2677 = vdwg.mxu0
    %2678 = vmatpush.bf16.msra.mxu0 %v2120
    %2679 = vmatpush.bf16.msra.mxu0 %v2112
    %2680 = vmatpush.bf16.msra.mxu0 %v2104
    %2681 = vmatpush.bf16.msra.mxu0 %v2096
    %2682 = vmatpush.bf16.msra.mxu0 %v2088
    %2683 = vmatpush.bf16.msra.mxu0 %v2080
    %2684 = vmatpush.bf16.msra.mxu0 %v2072
    %2685 = vmatpush.bf16.msra.mxu0 %v2064
    %2686 = vmatmul.bf16.gmra.mxu0 %v877
    %v2687 = vpop.f32.mrf.mxu0
    %v2688 = vadd.f32 %v2675, %v2687
    %v2689 = vpop.f32.mrf.mxu0
    %2690 = vdwg.mxu0
    %2691 = vmatpush.bf16.msra.mxu0 %v2184
    %2692 = vmatpush.bf16.msra.mxu0 %v2176
    %2693 = vmatpush.bf16.msra.mxu0 %v2168
    %2694 = vmatpush.bf16.msra.mxu0 %v2160
    %2695 = vmatpush.bf16.msra.mxu0 %v2152
    %2696 = vmatpush.bf16.msra.mxu0 %v2144
    %2697 = vmatpush.bf16.msra.mxu0 %v2136
    %2698 = vmatpush.bf16.msra.mxu0 %v2128
    %2699 = vmatmul.bf16.gmra.mxu0 %v878
    %v2700 = vpop.f32.mrf.mxu0
    %v2701 = vadd.f32 %v2688, %v2700
    %v2702 = vpop.f32.mrf.mxu0
    %2703 = vdwg.mxu0
    %2704 = vmatpush.bf16.msra.mxu0 %v1993
    %2705 = vmatpush.bf16.msra.mxu0 %v1985
    %2706 = vmatpush.bf16.msra.mxu0 %v1977
    %2707 = vmatpush.bf16.msra.mxu0 %v1969
    %2708 = vmatpush.bf16.msra.mxu0 %v1961
    %2709 = vmatpush.bf16.msra.mxu0 %v1953
    %2710 = vmatpush.bf16.msra.mxu0 %v1945
    %2711 = vmatpush.bf16.msra.mxu0 %v1937
    %2712 = vmatmul.bf16.gmra.mxu0 %v875
    %v2713 = vpop.f32.mrf.mxu0
    %v2714 = vadd.f32 %v1161, %v2713
    %v2715 = vpop.f32.mrf.mxu0
    %2716 = vdwg.mxu0
    %2717 = vmatpush.bf16.msra.mxu0 %v2057
    %2718 = vmatpush.bf16.msra.mxu0 %v2049
    %2719 = vmatpush.bf16.msra.mxu0 %v2041
    %2720 = vmatpush.bf16.msra.mxu0 %v2033
    %2721 = vmatpush.bf16.msra.mxu0 %v2025
    %2722 = vmatpush.bf16.msra.mxu0 %v2017
    %2723 = vmatpush.bf16.msra.mxu0 %v2009
    %2724 = vmatpush.bf16.msra.mxu0 %v2001
    %2725 = vmatmul.bf16.gmra.mxu0 %v876
    %v2726 = vpop.f32.mrf.mxu0
    %v2727 = vadd.f32 %v2714, %v2726
    %v2728 = vpop.f32.mrf.mxu0
    %2729 = vdwg.mxu0
    %2730 = vmatpush.bf16.msra.mxu0 %v2121
    %2731 = vmatpush.bf16.msra.mxu0 %v2113
    %2732 = vmatpush.bf16.msra.mxu0 %v2105
    %2733 = vmatpush.bf16.msra.mxu0 %v2097
    %2734 = vmatpush.bf16.msra.mxu0 %v2089
    %2735 = vmatpush.bf16.msra.mxu0 %v2081
    %2736 = vmatpush.bf16.msra.mxu0 %v2073
    %2737 = vmatpush.bf16.msra.mxu0 %v2065
    %2738 = vmatmul.bf16.gmra.mxu0 %v877
    %v2739 = vpop.f32.mrf.mxu0
    %v2740 = vadd.f32 %v2727, %v2739
    %v2741 = vpop.f32.mrf.mxu0
    %2742 = vdwg.mxu0
    %2743 = vmatpush.bf16.msra.mxu0 %v2185
    %2744 = vmatpush.bf16.msra.mxu0 %v2177
    %2745 = vmatpush.bf16.msra.mxu0 %v2169
    %2746 = vmatpush.bf16.msra.mxu0 %v2161
    %2747 = vmatpush.bf16.msra.mxu0 %v2153
    %2748 = vmatpush.bf16.msra.mxu0 %v2145
    %2749 = vmatpush.bf16.msra.mxu0 %v2137
    %2750 = vmatpush.bf16.msra.mxu0 %v2129
    %2751 = vmatmul.bf16.gmra.mxu0 %v878
    %v2752 = vpop.f32.mrf.mxu0
    %v2753 = vadd.f32 %v2740, %v2752
    %v2754 = vpop.f32.mrf.mxu0
    %2755 = vdwg.mxu0
    %2756 = vmatpush.bf16.msra.mxu0 %v1994
    %2757 = vmatpush.bf16.msra.mxu0 %v1986
    %2758 = vmatpush.bf16.msra.mxu0 %v1978
    %2759 = vmatpush.bf16.msra.mxu0 %v1970
    %2760 = vmatpush.bf16.msra.mxu0 %v1962
    %2761 = vmatpush.bf16.msra.mxu0 %v1954
    %2762 = vmatpush.bf16.msra.mxu0 %v1946
    %2763 = vmatpush.bf16.msra.mxu0 %v1938
    %2764 = vmatmul.bf16.gmra.mxu0 %v875
    %v2765 = vpop.f32.mrf.mxu0
    %v2766 = vadd.f32 %v1162, %v2765
    %v2767 = vpop.f32.mrf.mxu0
    %2768 = vdwg.mxu0
    %2769 = vmatpush.bf16.msra.mxu0 %v2058
    %2770 = vmatpush.bf16.msra.mxu0 %v2050
    %2771 = vmatpush.bf16.msra.mxu0 %v2042
    %2772 = vmatpush.bf16.msra.mxu0 %v2034
    %2773 = vmatpush.bf16.msra.mxu0 %v2026
    %2774 = vmatpush.bf16.msra.mxu0 %v2018
    %2775 = vmatpush.bf16.msra.mxu0 %v2010
    %2776 = vmatpush.bf16.msra.mxu0 %v2002
    %2777 = vmatmul.bf16.gmra.mxu0 %v876
    %v2778 = vpop.f32.mrf.mxu0
    %v2779 = vadd.f32 %v2766, %v2778
    %v2780 = vpop.f32.mrf.mxu0
    %2781 = vdwg.mxu0
    %2782 = vmatpush.bf16.msra.mxu0 %v2122
    %2783 = vmatpush.bf16.msra.mxu0 %v2114
    %2784 = vmatpush.bf16.msra.mxu0 %v2106
    %2785 = vmatpush.bf16.msra.mxu0 %v2098
    %2786 = vmatpush.bf16.msra.mxu0 %v2090
    %2787 = vmatpush.bf16.msra.mxu0 %v2082
    %2788 = vmatpush.bf16.msra.mxu0 %v2074
    %2789 = vmatpush.bf16.msra.mxu0 %v2066
    %2790 = vmatmul.bf16.gmra.mxu0 %v877
    %v2791 = vpop.f32.mrf.mxu0
    %v2792 = vadd.f32 %v2779, %v2791
    %v2793 = vpop.f32.mrf.mxu0
    %2794 = vdwg.mxu0
    %2795 = vmatpush.bf16.msra.mxu0 %v2186
    %2796 = vmatpush.bf16.msra.mxu0 %v2178
    %2797 = vmatpush.bf16.msra.mxu0 %v2170
    %2798 = vmatpush.bf16.msra.mxu0 %v2162
    %2799 = vmatpush.bf16.msra.mxu0 %v2154
    %2800 = vmatpush.bf16.msra.mxu0 %v2146
    %2801 = vmatpush.bf16.msra.mxu0 %v2138
    %2802 = vmatpush.bf16.msra.mxu0 %v2130
    %2803 = vmatmul.bf16.gmra.mxu0 %v878
    %v2804 = vpop.f32.mrf.mxu0
    %v2805 = vadd.f32 %v2792, %v2804
    %v2806 = vpop.f32.mrf.mxu0
    %2807 = vdwg.mxu0
    %2808 = vmatpush.bf16.msra.mxu0 %v1995
    %2809 = vmatpush.bf16.msra.mxu0 %v1987
    %2810 = vmatpush.bf16.msra.mxu0 %v1979
    %2811 = vmatpush.bf16.msra.mxu0 %v1971
    %2812 = vmatpush.bf16.msra.mxu0 %v1963
    %2813 = vmatpush.bf16.msra.mxu0 %v1955
    %2814 = vmatpush.bf16.msra.mxu0 %v1947
    %2815 = vmatpush.bf16.msra.mxu0 %v1939
    %2816 = vmatmul.bf16.gmra.mxu0 %v875
    %v2817 = vpop.f32.mrf.mxu0
    %v2818 = vadd.f32 %v1163, %v2817
    %v2819 = vpop.f32.mrf.mxu0
    %2820 = vdwg.mxu0
    %2821 = vmatpush.bf16.msra.mxu0 %v2059
    %2822 = vmatpush.bf16.msra.mxu0 %v2051
    %2823 = vmatpush.bf16.msra.mxu0 %v2043
    %2824 = vmatpush.bf16.msra.mxu0 %v2035
    %2825 = vmatpush.bf16.msra.mxu0 %v2027
    %2826 = vmatpush.bf16.msra.mxu0 %v2019
    %2827 = vmatpush.bf16.msra.mxu0 %v2011
    %2828 = vmatpush.bf16.msra.mxu0 %v2003
    %2829 = vmatmul.bf16.gmra.mxu0 %v876
    %v2830 = vpop.f32.mrf.mxu0
    %v2831 = vadd.f32 %v2818, %v2830
    %v2832 = vpop.f32.mrf.mxu0
    %2833 = vdwg.mxu0
    %2834 = vmatpush.bf16.msra.mxu0 %v2123
    %2835 = vmatpush.bf16.msra.mxu0 %v2115
    %2836 = vmatpush.bf16.msra.mxu0 %v2107
    %2837 = vmatpush.bf16.msra.mxu0 %v2099
    %2838 = vmatpush.bf16.msra.mxu0 %v2091
    %2839 = vmatpush.bf16.msra.mxu0 %v2083
    %2840 = vmatpush.bf16.msra.mxu0 %v2075
    %2841 = vmatpush.bf16.msra.mxu0 %v2067
    %2842 = vmatmul.bf16.gmra.mxu0 %v877
    %v2843 = vpop.f32.mrf.mxu0
    %v2844 = vadd.f32 %v2831, %v2843
    %v2845 = vpop.f32.mrf.mxu0
    %2846 = vdwg.mxu0
    %2847 = vmatpush.bf16.msra.mxu0 %v2187
    %2848 = vmatpush.bf16.msra.mxu0 %v2179
    %2849 = vmatpush.bf16.msra.mxu0 %v2171
    %2850 = vmatpush.bf16.msra.mxu0 %v2163
    %2851 = vmatpush.bf16.msra.mxu0 %v2155
    %2852 = vmatpush.bf16.msra.mxu0 %v2147
    %2853 = vmatpush.bf16.msra.mxu0 %v2139
    %2854 = vmatpush.bf16.msra.mxu0 %v2131
    %2855 = vmatmul.bf16.gmra.mxu0 %v878
    %v2856 = vpop.f32.mrf.mxu0
    %v2857 = vadd.f32 %v2844, %v2856
    %v2858 = vpop.f32.mrf.mxu0
    %2859 = vdwg.mxu0
    %v2860 = vmul.f32 %v2493, 0.5
    %v2861 = vmul.f32 %v2545, 0.5
    %v2862 = vmul.f32 %v2597, 0.5
    %v2863 = vmul.f32 %v2649, 0.5
    %v2864 = vmul.f32 %v2701, 0.5
    %v2865 = vmul.f32 %v2753, 0.5
    %v2866 = vmul.f32 %v2805, 0.5
    %v2867 = vmul.f32 %v2857, 0.5
    %v2868 = vtanh.pop %v2860
    %v2869 = vtanh.pop %v2861
    %v2870 = vtanh.pop %v2862
    %v2871 = vtanh.pop %v2863
    %v2872 = vtanh.pop %v2864
    %v2873 = vtanh.pop %v2865
    %v2874 = vtanh.pop %v2866
    %v2875 = vtanh.pop %v2867
    %v2876 = vadd.f32 %v2868, 1.0
    %v2877 = vadd.f32 %v2869, 1.0
    %v2878 = vadd.f32 %v2870, 1.0
    %v2879 = vadd.f32 %v2871, 1.0
    %v2880 = vadd.f32 %v2872, 1.0
    %v2881 = vadd.f32 %v2873, 1.0
    %v2882 = vadd.f32 %v2874, 1.0
    %v2883 = vadd.f32 %v2875, 1.0
    %v2884 = vmul.f32 %v2876, 0.5
    %v2885 = vmul.f32 %v2877, 0.5
    %v2886 = vmul.f32 %v2878, 0.5
    %v2887 = vmul.f32 %v2879, 0.5
    %v2888 = vmul.f32 %v2880, 0.5
    %v2889 = vmul.f32 %v2881, 0.5
    %v2890 = vmul.f32 %v2882, 0.5
    %v2891 = vmul.f32 %v2883, 0.5
    %v2892 = vpack.c.bf16 %v2884, %v2884
    %v2893 = vpack.c.bf16 %v2885, %v2885
    %v2894 = vpack.c.bf16 %v2886, %v2886
    %v2895 = vpack.c.bf16 %v2887, %v2887
    %v2896 = vpack.c.bf16 %v2888, %v2888
    %v2897 = vpack.c.bf16 %v2889, %v2889
    %v2898 = vpack.c.bf16 %v2890, %v2890
    %v2899 = vpack.c.bf16 %v2891, %v2891
    %v2900 = vld [vmem:[#allocation16] sm:$0xff]
    %v2901 = vld [vmem:[#allocation16 + $0x8] sm:$0xff]
    %v2902 = vld [vmem:[#allocation16 + $0x10] sm:$0xff]
    %v2903 = vld [vmem:[#allocation16 + $0x18] sm:$0xff]
    %v2904 = vld [vmem:[#allocation16 + $0x20] sm:$0xff]
    %v2905 = vld [vmem:[#allocation16 + $0x28] sm:$0xff]
    %v2906 = vld [vmem:[#allocation16 + $0x30] sm:$0xff]
    %v2907 = vld [vmem:[#allocation16 + $0x38] sm:$0xff]
    %v2908 = vld [vmem:[#allocation16 + $0x40] sm:$0xff]
    %v2909 = vld [vmem:[#allocation16 + $0x48] sm:$0xff]
    %v2910 = vld [vmem:[#allocation16 + $0x50] sm:$0xff]
    %v2911 = vld [vmem:[#allocation16 + $0x58] sm:$0xff]
    %v2912 = vld [vmem:[#allocation16 + $0x60] sm:$0xff]
    %v2913 = vld [vmem:[#allocation16 + $0x68] sm:$0xff]
    %v2914 = vld [vmem:[#allocation16 + $0x70] sm:$0xff]
    %v2915 = vld [vmem:[#allocation16 + $0x78] sm:$0xff]
    %v2916 = vld [vmem:[#allocation16 + $0x80] sm:$0xff]
    %v2917 = vld [vmem:[#allocation16 + $0x88] sm:$0xff]
    %v2918 = vld [vmem:[#allocation16 + $0x90] sm:$0xff]
    %v2919 = vld [vmem:[#allocation16 + $0x98] sm:$0xff]
    %v2920 = vld [vmem:[#allocation16 + $0xa0] sm:$0xff]
    %v2921 = vld [vmem:[#allocation16 + $0xa8] sm:$0xff]
    %v2922 = vld [vmem:[#allocation16 + $0xb0] sm:$0xff]
    %v2923 = vld [vmem:[#allocation16 + $0xb8] sm:$0xff]
    %v2924 = vld [vmem:[#allocation16 + $0xc0] sm:$0xff]
    %v2925 = vld [vmem:[#allocation16 + $0xc8] sm:$0xff]
    %v2926 = vld [vmem:[#allocation16 + $0xd0] sm:$0xff]
    %v2927 = vld [vmem:[#allocation16 + $0xd8] sm:$0xff]
    %v2928 = vld [vmem:[#allocation16 + $0xe0] sm:$0xff]
    %v2929 = vld [vmem:[#allocation16 + $0xe8] sm:$0xff]
    %v2930 = vld [vmem:[#allocation16 + $0xf0] sm:$0xff]
    %v2931 = vld [vmem:[#allocation16 + $0xf8] sm:$0xff]
    %v2932 = vld [vmem:[#allocation16 + $0x100] sm:$0xff]
    %v2933 = vld [vmem:[#allocation16 + $0x108] sm:$0xff]
    %v2934 = vld [vmem:[#allocation16 + $0x110] sm:$0xff]
    %v2935 = vld [vmem:[#allocation16 + $0x118] sm:$0xff]
    %v2936 = vld [vmem:[#allocation16 + $0x120] sm:$0xff]
    %v2937 = vld [vmem:[#allocation16 + $0x128] sm:$0xff]
    %v2938 = vld [vmem:[#allocation16 + $0x130] sm:$0xff]
    %v2939 = vld [vmem:[#allocation16 + $0x138] sm:$0xff]
    %v2940 = vld [vmem:[#allocation16 + $0x140] sm:$0xff]
    %v2941 = vld [vmem:[#allocation16 + $0x148] sm:$0xff]
    %v2942 = vld [vmem:[#allocation16 + $0x150] sm:$0xff]
    %v2943 = vld [vmem:[#allocation16 + $0x158] sm:$0xff]
    %v2944 = vld [vmem:[#allocation16 + $0x160] sm:$0xff]
    %v2945 = vld [vmem:[#allocation16 + $0x168] sm:$0xff]
    %v2946 = vld [vmem:[#allocation16 + $0x170] sm:$0xff]
    %v2947 = vld [vmem:[#allocation16 + $0x178] sm:$0xff]
    %v2948 = vld [vmem:[#allocation16 + $0x180] sm:$0xff]
    %v2949 = vld [vmem:[#allocation16 + $0x188] sm:$0xff]
    %v2950 = vld [vmem:[#allocation16 + $0x190] sm:$0xff]
    %v2951 = vld [vmem:[#allocation16 + $0x198] sm:$0xff]
    %v2952 = vld [vmem:[#allocation16 + $0x1a0] sm:$0xff]
    %v2953 = vld [vmem:[#allocation16 + $0x1a8] sm:$0xff]
    %v2954 = vld [vmem:[#allocation16 + $0x1b0] sm:$0xff]
    %v2955 = vld [vmem:[#allocation16 + $0x1b8] sm:$0xff]
    %v2956 = vld [vmem:[#allocation16 + $0x1c0] sm:$0xff]
    %v2957 = vld [vmem:[#allocation16 + $0x1c8] sm:$0xff]
    %v2958 = vld [vmem:[#allocation16 + $0x1d0] sm:$0xff]
    %v2959 = vld [vmem:[#allocation16 + $0x1d8] sm:$0xff]
    %v2960 = vld [vmem:[#allocation16 + $0x1e0] sm:$0xff]
    %v2961 = vld [vmem:[#allocation16 + $0x1e8] sm:$0xff]
    %v2962 = vld [vmem:[#allocation16 + $0x1f0] sm:$0xff]
    %v2963 = vld [vmem:[#allocation16 + $0x1f8] sm:$0xff]
    %v2964 = vld [vmem:[#allocation16 + $0x200] sm:$0xff]
    %v2965 = vld [vmem:[#allocation16 + $0x208] sm:$0xff]
    %v2966 = vld [vmem:[#allocation16 + $0x210] sm:$0xff]
    %v2967 = vld [vmem:[#allocation16 + $0x218] sm:$0xff]
    %v2968 = vld [vmem:[#allocation16 + $0x220] sm:$0xff]
    %v2969 = vld [vmem:[#allocation16 + $0x228] sm:$0xff]
    %v2970 = vld [vmem:[#allocation16 + $0x230] sm:$0xff]
    %v2971 = vld [vmem:[#allocation16 + $0x238] sm:$0xff]
    %v2972 = vld [vmem:[#allocation16 + $0x240] sm:$0xff]
    %v2973 = vld [vmem:[#allocation16 + $0x248] sm:$0xff]
    %v2974 = vld [vmem:[#allocation16 + $0x250] sm:$0xff]
    %v2975 = vld [vmem:[#allocation16 + $0x258] sm:$0xff]
    %v2976 = vld [vmem:[#allocation16 + $0x260] sm:$0xff]
    %v2977 = vld [vmem:[#allocation16 + $0x268] sm:$0xff]
    %v2978 = vld [vmem:[#allocation16 + $0x270] sm:$0xff]
    %v2979 = vld [vmem:[#allocation16 + $0x278] sm:$0xff]
    %v2980 = vld [vmem:[#allocation16 + $0x280] sm:$0xff]
    %v2981 = vld [vmem:[#allocation16 + $0x288] sm:$0xff]
    %v2982 = vld [vmem:[#allocation16 + $0x290] sm:$0xff]
    %v2983 = vld [vmem:[#allocation16 + $0x298] sm:$0xff]
    %v2984 = vld [vmem:[#allocation16 + $0x2a0] sm:$0xff]
    %v2985 = vld [vmem:[#allocation16 + $0x2a8] sm:$0xff]
    %v2986 = vld [vmem:[#allocation16 + $0x2b0] sm:$0xff]
    %v2987 = vld [vmem:[#allocation16 + $0x2b8] sm:$0xff]
    %v2988 = vld [vmem:[#allocation16 + $0x2c0] sm:$0xff]
    %v2989 = vld [vmem:[#allocation16 + $0x2c8] sm:$0xff]
    %v2990 = vld [vmem:[#allocation16 + $0x2d0] sm:$0xff]
    %v2991 = vld [vmem:[#allocation16 + $0x2d8] sm:$0xff]
    %v2992 = vld [vmem:[#allocation16 + $0x2e0] sm:$0xff]
    %v2993 = vld [vmem:[#allocation16 + $0x2e8] sm:$0xff]
    %v2994 = vld [vmem:[#allocation16 + $0x2f0] sm:$0xff]
    %v2995 = vld [vmem:[#allocation16 + $0x2f8] sm:$0xff]
    %v2996 = vld [vmem:[#allocation16 + $0x300] sm:$0xff]
    %v2997 = vld [vmem:[#allocation16 + $0x308] sm:$0xff]
    %v2998 = vld [vmem:[#allocation16 + $0x310] sm:$0xff]
    %v2999 = vld [vmem:[#allocation16 + $0x318] sm:$0xff]
    %v3000 = vld [vmem:[#allocation16 + $0x320] sm:$0xff]
    %v3001 = vld [vmem:[#allocation16 + $0x328] sm:$0xff]
    %v3002 = vld [vmem:[#allocation16 + $0x330] sm:$0xff]
    %v3003 = vld [vmem:[#allocation16 + $0x338] sm:$0xff]
    %v3004 = vld [vmem:[#allocation16 + $0x340] sm:$0xff]
    %v3005 = vld [vmem:[#allocation16 + $0x348] sm:$0xff]
    %v3006 = vld [vmem:[#allocation16 + $0x350] sm:$0xff]
    %v3007 = vld [vmem:[#allocation16 + $0x358] sm:$0xff]
    %v3008 = vld [vmem:[#allocation16 + $0x360] sm:$0xff]
    %v3009 = vld [vmem:[#allocation16 + $0x368] sm:$0xff]
    %v3010 = vld [vmem:[#allocation16 + $0x370] sm:$0xff]
    %v3011 = vld [vmem:[#allocation16 + $0x378] sm:$0xff]
    %v3012 = vld [vmem:[#allocation16 + $0x380] sm:$0xff]
    %v3013 = vld [vmem:[#allocation16 + $0x388] sm:$0xff]
    %v3014 = vld [vmem:[#allocation16 + $0x390] sm:$0xff]
    %v3015 = vld [vmem:[#allocation16 + $0x398] sm:$0xff]
    %v3016 = vld [vmem:[#allocation16 + $0x3a0] sm:$0xff]
    %v3017 = vld [vmem:[#allocation16 + $0x3a8] sm:$0xff]
    %v3018 = vld [vmem:[#allocation16 + $0x3b0] sm:$0xff]
    %v3019 = vld [vmem:[#allocation16 + $0x3b8] sm:$0xff]
    %v3020 = vld [vmem:[#allocation16 + $0x3c0] sm:$0xff]
    %v3021 = vld [vmem:[#allocation16 + $0x3c8] sm:$0xff]
    %v3022 = vld [vmem:[#allocation16 + $0x3d0] sm:$0xff]
    %v3023 = vld [vmem:[#allocation16 + $0x3d8] sm:$0xff]
    %v3024 = vld [vmem:[#allocation16 + $0x3e0] sm:$0xff]
    %v3025 = vld [vmem:[#allocation16 + $0x3e8] sm:$0xff]
    %v3026 = vld [vmem:[#allocation16 + $0x3f0] sm:$0xff]
    %v3027 = vld [vmem:[#allocation16 + $0x3f8] sm:$0xff]
    %v3028 = vld [vmem:[%s10] sm:$0x3]
    %v3029 = vunpack.c.l.bf16 %v3028
    %v3031 = vperm.slane %v3029, 0
    %v3032 = vperm.slane %v3029, 2
    %v3035 = vperm.slane %v3031, 0
    %v3036 = vperm.slane %v3032, 0
    %v3165 = vunpack.c.l.b16 %v2900
    %v3166 = vunpack.c.h.b16 %v2900
    %v3167 = vunpack.c.l.b16 %v2901
    %v3168 = vunpack.c.h.b16 %v2901
    %v3169 = vunpack.c.l.b16 %v2902
    %v3170 = vunpack.c.h.b16 %v2902
    %v3171 = vunpack.c.l.b16 %v2903
    %v3172 = vunpack.c.h.b16 %v2903
    %v3173 = vunpack.c.l.b16 %v2904
    %v3174 = vunpack.c.h.b16 %v2904
    %v3175 = vunpack.c.l.b16 %v2905
    %v3176 = vunpack.c.h.b16 %v2905
    %v3177 = vunpack.c.l.b16 %v2906
    %v3178 = vunpack.c.h.b16 %v2906
    %v3179 = vunpack.c.l.b16 %v2907
    %v3180 = vunpack.c.h.b16 %v2907
    %v3181 = vunpack.c.l.b16 %v2908
    %v3182 = vunpack.c.h.b16 %v2908
    %v3183 = vunpack.c.l.b16 %v2909
    %v3184 = vunpack.c.h.b16 %v2909
    %v3185 = vunpack.c.l.b16 %v2910
    %v3186 = vunpack.c.h.b16 %v2910
    %v3187 = vunpack.c.l.b16 %v2911
    %v3188 = vunpack.c.h.b16 %v2911
    %v3189 = vunpack.c.l.b16 %v2912
    %v3190 = vunpack.c.h.b16 %v2912
    %v3191 = vunpack.c.l.b16 %v2913
    %v3192 = vunpack.c.h.b16 %v2913
    %v3193 = vunpack.c.l.b16 %v2914
    %v3194 = vunpack.c.h.b16 %v2914
    %v3195 = vunpack.c.l.b16 %v2915
    %v3196 = vunpack.c.h.b16 %v2915
    %v3197 = vunpack.c.l.b16 %v2916
    %v3198 = vunpack.c.h.b16 %v2916
    %v3199 = vunpack.c.l.b16 %v2917
    %v3200 = vunpack.c.h.b16 %v2917
    %v3201 = vunpack.c.l.b16 %v2918
    %v3202 = vunpack.c.h.b16 %v2918
    %v3203 = vunpack.c.l.b16 %v2919
    %v3204 = vunpack.c.h.b16 %v2919
    %v3205 = vunpack.c.l.b16 %v2920
    %v3206 = vunpack.c.h.b16 %v2920
    %v3207 = vunpack.c.l.b16 %v2921
    %v3208 = vunpack.c.h.b16 %v2921
    %v3209 = vunpack.c.l.b16 %v2922
    %v3210 = vunpack.c.h.b16 %v2922
    %v3211 = vunpack.c.l.b16 %v2923
    %v3212 = vunpack.c.h.b16 %v2923
    %v3213 = vunpack.c.l.b16 %v2924
    %v3214 = vunpack.c.h.b16 %v2924
    %v3215 = vunpack.c.l.b16 %v2925
    %v3216 = vunpack.c.h.b16 %v2925
    %v3217 = vunpack.c.l.b16 %v2926
    %v3218 = vunpack.c.h.b16 %v2926
    %v3219 = vunpack.c.l.b16 %v2927
    %v3220 = vunpack.c.h.b16 %v2927
    %v3221 = vunpack.c.l.b16 %v2928
    %v3222 = vunpack.c.h.b16 %v2928
    %v3223 = vunpack.c.l.b16 %v2929
    %v3224 = vunpack.c.h.b16 %v2929
    %v3225 = vunpack.c.l.b16 %v2930
    %v3226 = vunpack.c.h.b16 %v2930
    %v3227 = vunpack.c.l.b16 %v2931
    %v3228 = vunpack.c.h.b16 %v2931
    %v3229 = vunpack.c.l.b16 %v2932
    %v3230 = vunpack.c.h.b16 %v2932
    %v3231 = vunpack.c.l.b16 %v2933
    %v3232 = vunpack.c.h.b16 %v2933
    %v3233 = vunpack.c.l.b16 %v2934
    %v3234 = vunpack.c.h.b16 %v2934
    %v3235 = vunpack.c.l.b16 %v2935
    %v3236 = vunpack.c.h.b16 %v2935
    %v3237 = vunpack.c.l.b16 %v2936
    %v3238 = vunpack.c.h.b16 %v2936
    %v3239 = vunpack.c.l.b16 %v2937
    %v3240 = vunpack.c.h.b16 %v2937
    %v3241 = vunpack.c.l.b16 %v2938
    %v3242 = vunpack.c.h.b16 %v2938
    %v3243 = vunpack.c.l.b16 %v2939
    %v3244 = vunpack.c.h.b16 %v2939
    %v3245 = vunpack.c.l.b16 %v2940
    %v3246 = vunpack.c.h.b16 %v2940
    %v3247 = vunpack.c.l.b16 %v2941
    %v3248 = vunpack.c.h.b16 %v2941
    %v3249 = vunpack.c.l.b16 %v2942
    %v3250 = vunpack.c.h.b16 %v2942
    %v3251 = vunpack.c.l.b16 %v2943
    %v3252 = vunpack.c.h.b16 %v2943
    %v3253 = vunpack.c.l.b16 %v2944
    %v3254 = vunpack.c.h.b16 %v2944
    %v3255 = vunpack.c.l.b16 %v2945
    %v3256 = vunpack.c.h.b16 %v2945
    %v3257 = vunpack.c.l.b16 %v2946
    %v3258 = vunpack.c.h.b16 %v2946
    %v3259 = vunpack.c.l.b16 %v2947
    %v3260 = vunpack.c.h.b16 %v2947
    %v3261 = vunpack.c.l.b16 %v2948
    %v3262 = vunpack.c.h.b16 %v2948
    %v3263 = vunpack.c.l.b16 %v2949
    %v3264 = vunpack.c.h.b16 %v2949
    %v3265 = vunpack.c.l.b16 %v2950
    %v3266 = vunpack.c.h.b16 %v2950
    %v3267 = vunpack.c.l.b16 %v2951
    %v3268 = vunpack.c.h.b16 %v2951
    %v3269 = vunpack.c.l.b16 %v2952
    %v3270 = vunpack.c.h.b16 %v2952
    %v3271 = vunpack.c.l.b16 %v2953
    %v3272 = vunpack.c.h.b16 %v2953
    %v3273 = vunpack.c.l.b16 %v2954
    %v3274 = vunpack.c.h.b16 %v2954
    %v3275 = vunpack.c.l.b16 %v2955
    %v3276 = vunpack.c.h.b16 %v2955
    %v3277 = vunpack.c.l.b16 %v2956
    %v3278 = vunpack.c.h.b16 %v2956
    %v3279 = vunpack.c.l.b16 %v2957
    %v3280 = vunpack.c.h.b16 %v2957
    %v3281 = vunpack.c.l.b16 %v2958
    %v3282 = vunpack.c.h.b16 %v2958
    %v3283 = vunpack.c.l.b16 %v2959
    %v3284 = vunpack.c.h.b16 %v2959
    %v3285 = vunpack.c.l.b16 %v2960
    %v3286 = vunpack.c.h.b16 %v2960
    %v3287 = vunpack.c.l.b16 %v2961
    %v3288 = vunpack.c.h.b16 %v2961
    %v3289 = vunpack.c.l.b16 %v2962
    %v3290 = vunpack.c.h.b16 %v2962
    %v3291 = vunpack.c.l.b16 %v2963
    %v3292 = vunpack.c.h.b16 %v2963
    %v3293 = vunpack.c.l.b16 %v2964
    %v3294 = vunpack.c.h.b16 %v2964
    %v3295 = vunpack.c.l.b16 %v2965
    %v3296 = vunpack.c.h.b16 %v2965
    %v3297 = vunpack.c.l.b16 %v2966
    %v3298 = vunpack.c.h.b16 %v2966
    %v3299 = vunpack.c.l.b16 %v2967
    %v3300 = vunpack.c.h.b16 %v2967
    %v3301 = vunpack.c.l.b16 %v2968
    %v3302 = vunpack.c.h.b16 %v2968
    %v3303 = vunpack.c.l.b16 %v2969
    %v3304 = vunpack.c.h.b16 %v2969
    %v3305 = vunpack.c.l.b16 %v2970
    %v3306 = vunpack.c.h.b16 %v2970
    %v3307 = vunpack.c.l.b16 %v2971
    %v3308 = vunpack.c.h.b16 %v2971
    %v3309 = vunpack.c.l.b16 %v2972
    %v3310 = vunpack.c.h.b16 %v2972
    %v3311 = vunpack.c.l.b16 %v2973
    %v3312 = vunpack.c.h.b16 %v2973
    %v3313 = vunpack.c.l.b16 %v2974
    %v3314 = vunpack.c.h.b16 %v2974
    %v3315 = vunpack.c.l.b16 %v2975
    %v3316 = vunpack.c.h.b16 %v2975
    %v3317 = vunpack.c.l.b16 %v2976
    %v3318 = vunpack.c.h.b16 %v2976
    %v3319 = vunpack.c.l.b16 %v2977
    %v3320 = vunpack.c.h.b16 %v2977
    %v3321 = vunpack.c.l.b16 %v2978
    %v3322 = vunpack.c.h.b16 %v2978
    %v3323 = vunpack.c.l.b16 %v2979
    %v3324 = vunpack.c.h.b16 %v2979
    %v3325 = vunpack.c.l.b16 %v2980
    %v3326 = vunpack.c.h.b16 %v2980
    %v3327 = vunpack.c.l.b16 %v2981
    %v3328 = vunpack.c.h.b16 %v2981
    %v3329 = vunpack.c.l.b16 %v2982
    %v3330 = vunpack.c.h.b16 %v2982
    %v3331 = vunpack.c.l.b16 %v2983
    %v3332 = vunpack.c.h.b16 %v2983
    %v3333 = vunpack.c.l.b16 %v2984
    %v3334 = vunpack.c.h.b16 %v2984
    %v3335 = vunpack.c.l.b16 %v2985
    %v3336 = vunpack.c.h.b16 %v2985
    %v3337 = vunpack.c.l.b16 %v2986
    %v3338 = vunpack.c.h.b16 %v2986
    %v3339 = vunpack.c.l.b16 %v2987
    %v3340 = vunpack.c.h.b16 %v2987
    %v3341 = vunpack.c.l.b16 %v2988
    %v3342 = vunpack.c.h.b16 %v2988
    %v3343 = vunpack.c.l.b16 %v2989
    %v3344 = vunpack.c.h.b16 %v2989
    %v3345 = vunpack.c.l.b16 %v2990
    %v3346 = vunpack.c.h.b16 %v2990
    %v3347 = vunpack.c.l.b16 %v2991
    %v3348 = vunpack.c.h.b16 %v2991
    %v3349 = vunpack.c.l.b16 %v2992
    %v3350 = vunpack.c.h.b16 %v2992
    %v3351 = vunpack.c.l.b16 %v2993
    %v3352 = vunpack.c.h.b16 %v2993
    %v3353 = vunpack.c.l.b16 %v2994
    %v3354 = vunpack.c.h.b16 %v2994
    %v3355 = vunpack.c.l.b16 %v2995
    %v3356 = vunpack.c.h.b16 %v2995
    %v3357 = vunpack.c.l.b16 %v2996
    %v3358 = vunpack.c.h.b16 %v2996
    %v3359 = vunpack.c.l.b16 %v2997
    %v3360 = vunpack.c.h.b16 %v2997
    %v3361 = vunpack.c.l.b16 %v2998
    %v3362 = vunpack.c.h.b16 %v2998
    %v3363 = vunpack.c.l.b16 %v2999
    %v3364 = vunpack.c.h.b16 %v2999
    %v3365 = vunpack.c.l.b16 %v3000
    %v3366 = vunpack.c.h.b16 %v3000
    %v3367 = vunpack.c.l.b16 %v3001
    %v3368 = vunpack.c.h.b16 %v3001
    %v3369 = vunpack.c.l.b16 %v3002
    %v3370 = vunpack.c.h.b16 %v3002
    %v3371 = vunpack.c.l.b16 %v3003
    %v3372 = vunpack.c.h.b16 %v3003
    %v3373 = vunpack.c.l.b16 %v3004
    %v3374 = vunpack.c.h.b16 %v3004
    %v3375 = vunpack.c.l.b16 %v3005
    %v3376 = vunpack.c.h.b16 %v3005
    %v3377 = vunpack.c.l.b16 %v3006
    %v3378 = vunpack.c.h.b16 %v3006
    %v3379 = vunpack.c.l.b16 %v3007
    %v3380 = vunpack.c.h.b16 %v3007
    %v3381 = vunpack.c.l.b16 %v3008
    %v3382 = vunpack.c.h.b16 %v3008
    %v3383 = vunpack.c.l.b16 %v3009
    %v3384 = vunpack.c.h.b16 %v3009
    %v3385 = vunpack.c.l.b16 %v3010
    %v3386 = vunpack.c.h.b16 %v3010
    %v3387 = vunpack.c.l.b16 %v3011
    %v3388 = vunpack.c.h.b16 %v3011
    %v3389 = vunpack.c.l.b16 %v3012
    %v3390 = vunpack.c.h.b16 %v3012
    %v3391 = vunpack.c.l.b16 %v3013
    %v3392 = vunpack.c.h.b16 %v3013
    %v3393 = vunpack.c.l.b16 %v3014
    %v3394 = vunpack.c.h.b16 %v3014
    %v3395 = vunpack.c.l.b16 %v3015
    %v3396 = vunpack.c.h.b16 %v3015
    %v3397 = vunpack.c.l.b16 %v3016
    %v3398 = vunpack.c.h.b16 %v3016
    %v3399 = vunpack.c.l.b16 %v3017
    %v3400 = vunpack.c.h.b16 %v3017
    %v3401 = vunpack.c.l.b16 %v3018
    %v3402 = vunpack.c.h.b16 %v3018
    %v3403 = vunpack.c.l.b16 %v3019
    %v3404 = vunpack.c.h.b16 %v3019
    %v3405 = vunpack.c.l.b16 %v3020
    %v3406 = vunpack.c.h.b16 %v3020
    %v3407 = vunpack.c.l.b16 %v3021
    %v3408 = vunpack.c.h.b16 %v3021
    %v3409 = vunpack.c.l.b16 %v3022
    %v3410 = vunpack.c.h.b16 %v3022
    %v3411 = vunpack.c.l.b16 %v3023
    %v3412 = vunpack.c.h.b16 %v3023
    %v3413 = vunpack.c.l.b16 %v3024
    %v3414 = vunpack.c.h.b16 %v3024
    %v3415 = vunpack.c.l.b16 %v3025
    %v3416 = vunpack.c.h.b16 %v3025
    %v3417 = vunpack.c.l.b16 %v3026
    %v3418 = vunpack.c.h.b16 %v3026
    %v3419 = vunpack.c.l.b16 %v3027
    %v3420 = vunpack.c.h.b16 %v3027
    %v3421 = vpack.c.b16 %v3167, %v3165
    %v3422 = vpack.c.b16 %v3168, %v3166
    %v3423 = vpack.c.b16 %v3171, %v3169
    %v3424 = vpack.c.b16 %v3172, %v3170
    %v3425 = vpack.c.b16 %v3175, %v3173
    %v3426 = vpack.c.b16 %v3176, %v3174
    %v3427 = vpack.c.b16 %v3179, %v3177
    %v3428 = vpack.c.b16 %v3180, %v3178
    %v3429 = vpack.c.b16 %v3183, %v3181
    %v3430 = vpack.c.b16 %v3184, %v3182
    %v3431 = vpack.c.b16 %v3187, %v3185
    %v3432 = vpack.c.b16 %v3188, %v3186
    %v3433 = vpack.c.b16 %v3191, %v3189
    %v3434 = vpack.c.b16 %v3192, %v3190
    %v3435 = vpack.c.b16 %v3195, %v3193
    %v3436 = vpack.c.b16 %v3196, %v3194
    %v3437 = vpack.c.b16 %v3199, %v3197
    %v3438 = vpack.c.b16 %v3200, %v3198
    %v3439 = vpack.c.b16 %v3203, %v3201
    %v3440 = vpack.c.b16 %v3204, %v3202
    %v3441 = vpack.c.b16 %v3207, %v3205
    %v3442 = vpack.c.b16 %v3208, %v3206
    %v3443 = vpack.c.b16 %v3211, %v3209
    %v3444 = vpack.c.b16 %v3212, %v3210
    %v3445 = vpack.c.b16 %v3215, %v3213
    %v3446 = vpack.c.b16 %v3216, %v3214
    %v3447 = vpack.c.b16 %v3219, %v3217
    %v3448 = vpack.c.b16 %v3220, %v3218
    %v3449 = vpack.c.b16 %v3223, %v3221
    %v3450 = vpack.c.b16 %v3224, %v3222
    %v3451 = vpack.c.b16 %v3227, %v3225
    %v3452 = vpack.c.b16 %v3228, %v3226
    %v3453 = vpack.c.b16 %v3231, %v3229
    %v3454 = vpack.c.b16 %v3232, %v3230
    %v3455 = vpack.c.b16 %v3235, %v3233
    %v3456 = vpack.c.b16 %v3236, %v3234
    %v3457 = vpack.c.b16 %v3239, %v3237
    %v3458 = vpack.c.b16 %v3240, %v3238
    %v3459 = vpack.c.b16 %v3243, %v3241
    %v3460 = vpack.c.b16 %v3244, %v3242
    %v3461 = vpack.c.b16 %v3247, %v3245
    %v3462 = vpack.c.b16 %v3248, %v3246
    %v3463 = vpack.c.b16 %v3251, %v3249
    %v3464 = vpack.c.b16 %v3252, %v3250
    %v3465 = vpack.c.b16 %v3255, %v3253
    %v3466 = vpack.c.b16 %v3256, %v3254
    %v3467 = vpack.c.b16 %v3259, %v3257
    %v3468 = vpack.c.b16 %v3260, %v3258
    %v3469 = vpack.c.b16 %v3263, %v3261
    %v3470 = vpack.c.b16 %v3264, %v3262
    %v3471 = vpack.c.b16 %v3267, %v3265
    %v3472 = vpack.c.b16 %v3268, %v3266
    %v3473 = vpack.c.b16 %v3271, %v3269
    %v3474 = vpack.c.b16 %v3272, %v3270
    %v3475 = vpack.c.b16 %v3275, %v3273
    %v3476 = vpack.c.b16 %v3276, %v3274
    %v3477 = vpack.c.b16 %v3279, %v3277
    %v3478 = vpack.c.b16 %v3280, %v3278
    %v3479 = vpack.c.b16 %v3283, %v3281
    %v3480 = vpack.c.b16 %v3284, %v3282
    %v3481 = vpack.c.b16 %v3287, %v3285
    %v3482 = vpack.c.b16 %v3288, %v3286
    %v3483 = vpack.c.b16 %v3291, %v3289
    %v3484 = vpack.c.b16 %v3292, %v3290
    %v3485 = vpack.c.b16 %v3295, %v3293
    %v3486 = vpack.c.b16 %v3296, %v3294
    %v3487 = vpack.c.b16 %v3299, %v3297
    %v3488 = vpack.c.b16 %v3300, %v3298
    %v3489 = vpack.c.b16 %v3303, %v3301
    %v3490 = vpack.c.b16 %v3304, %v3302
    %v3491 = vpack.c.b16 %v3307, %v3305
    %v3492 = vpack.c.b16 %v3308, %v3306
    %v3493 = vpack.c.b16 %v3311, %v3309
    %v3494 = vpack.c.b16 %v3312, %v3310
    %v3495 = vpack.c.b16 %v3315, %v3313
    %v3496 = vpack.c.b16 %v3316, %v3314
    %v3497 = vpack.c.b16 %v3319, %v3317
    %v3498 = vpack.c.b16 %v3320, %v3318
    %v3499 = vpack.c.b16 %v3323, %v3321
    %v3500 = vpack.c.b16 %v3324, %v3322
    %v3501 = vpack.c.b16 %v3327, %v3325
    %v3502 = vpack.c.b16 %v3328, %v3326
    %v3503 = vpack.c.b16 %v3331, %v3329
    %v3504 = vpack.c.b16 %v3332, %v3330
    %v3505 = vpack.c.b16 %v3335, %v3333
    %v3506 = vpack.c.b16 %v3336, %v3334
    %v3507 = vpack.c.b16 %v3339, %v3337
    %v3508 = vpack.c.b16 %v3340, %v3338
    %v3509 = vpack.c.b16 %v3343, %v3341
    %v3510 = vpack.c.b16 %v3344, %v3342
    %v3511 = vpack.c.b16 %v3347, %v3345
    %v3512 = vpack.c.b16 %v3348, %v3346
    %v3513 = vpack.c.b16 %v3351, %v3349
    %v3514 = vpack.c.b16 %v3352, %v3350
    %v3515 = vpack.c.b16 %v3355, %v3353
    %v3516 = vpack.c.b16 %v3356, %v3354
    %v3517 = vpack.c.b16 %v3359, %v3357
    %v3518 = vpack.c.b16 %v3360, %v3358
    %v3519 = vpack.c.b16 %v3363, %v3361
    %v3520 = vpack.c.b16 %v3364, %v3362
    %v3521 = vpack.c.b16 %v3367, %v3365
    %v3522 = vpack.c.b16 %v3368, %v3366
    %v3523 = vpack.c.b16 %v3371, %v3369
    %v3524 = vpack.c.b16 %v3372, %v3370
    %v3525 = vpack.c.b16 %v3375, %v3373
    %v3526 = vpack.c.b16 %v3376, %v3374
    %v3527 = vpack.c.b16 %v3379, %v3377
    %v3528 = vpack.c.b16 %v3380, %v3378
    %v3529 = vpack.c.b16 %v3383, %v3381
    %v3530 = vpack.c.b16 %v3384, %v3382
    %v3531 = vpack.c.b16 %v3387, %v3385
    %v3532 = vpack.c.b16 %v3388, %v3386
    %v3533 = vpack.c.b16 %v3391, %v3389
    %v3534 = vpack.c.b16 %v3392, %v3390
    %v3535 = vpack.c.b16 %v3395, %v3393
    %v3536 = vpack.c.b16 %v3396, %v3394
    %v3537 = vpack.c.b16 %v3399, %v3397
    %v3538 = vpack.c.b16 %v3400, %v3398
    %v3539 = vpack.c.b16 %v3403, %v3401
    %v3540 = vpack.c.b16 %v3404, %v3402
    %v3541 = vpack.c.b16 %v3407, %v3405
    %v3542 = vpack.c.b16 %v3408, %v3406
    %v3543 = vpack.c.b16 %v3411, %v3409
    %v3544 = vpack.c.b16 %v3412, %v3410
    %v3545 = vpack.c.b16 %v3415, %v3413
    %v3546 = vpack.c.b16 %v3416, %v3414
    %v3547 = vpack.c.b16 %v3419, %v3417
    %v3548 = vpack.c.b16 %v3420, %v3418
    %3677 = vmatpush.bf16.msra.mxu0 %v3435
    %3678 = vmatpush.bf16.msra.mxu0 %v3433
    %3679 = vmatpush.bf16.msra.mxu0 %v3431
    %3680 = vmatpush.bf16.msra.mxu0 %v3429
    %3681 = vmatpush.bf16.msra.mxu0 %v3427
    %3682 = vmatpush.bf16.msra.mxu0 %v3425
    %3683 = vmatpush.bf16.msra.mxu0 %v3423
    %3684 = vmatpush.bf16.msra.mxu0 %v3421
    %3685 = vmatmul.bf16.gmra.mxu0 %v2892
    %v3686 = vpop.f32.mrf.mxu0
    %v3687 = vadd.f32 %v3035, %v3686
    %v3688 = vpop.f32.mrf.mxu0
    %3689 = vdwg.mxu0
    %3690 = vmatpush.bf16.msra.mxu0 %v3451
    %3691 = vmatpush.bf16.msra.mxu0 %v3449
    %3692 = vmatpush.bf16.msra.mxu0 %v3447
    %3693 = vmatpush.bf16.msra.mxu0 %v3445
    %3694 = vmatpush.bf16.msra.mxu0 %v3443
    %3695 = vmatpush.bf16.msra.mxu0 %v3441
    %3696 = vmatpush.bf16.msra.mxu0 %v3439
    %3697 = vmatpush.bf16.msra.mxu0 %v3437
    %3698 = vmatmul.bf16.gmra.mxu0 %v2893
    %v3699 = vpop.f32.mrf.mxu0
    %v3700 = vadd.f32 %v3687, %v3699
    %v3701 = vpop.f32.mrf.mxu0
    %3702 = vdwg.mxu0
    %3703 = vmatpush.bf16.msra.mxu0 %v3467
    %3704 = vmatpush.bf16.msra.mxu0 %v3465
    %3705 = vmatpush.bf16.msra.mxu0 %v3463
    %3706 = vmatpush.bf16.msra.mxu0 %v3461
    %3707 = vmatpush.bf16.msra.mxu0 %v3459
    %3708 = vmatpush.bf16.msra.mxu0 %v3457
    %3709 = vmatpush.bf16.msra.mxu0 %v3455
    %3710 = vmatpush.bf16.msra.mxu0 %v3453
    %3711 = vmatmul.bf16.gmra.mxu0 %v2894
    %v3712 = vpop.f32.mrf.mxu0
    %v3713 = vadd.f32 %v3700, %v3712
    %v3714 = vpop.f32.mrf.mxu0
    %3715 = vdwg.mxu0
    %3716 = vmatpush.bf16.msra.mxu0 %v3483
    %3717 = vmatpush.bf16.msra.mxu0 %v3481
    %3718 = vmatpush.bf16.msra.mxu0 %v3479
    %3719 = vmatpush.bf16.msra.mxu0 %v3477
    %3720 = vmatpush.bf16.msra.mxu0 %v3475
    %3721 = vmatpush.bf16.msra.mxu0 %v3473
    %3722 = vmatpush.bf16.msra.mxu0 %v3471
    %3723 = vmatpush.bf16.msra.mxu0 %v3469
    %3724 = vmatmul.bf16.gmra.mxu0 %v2895
    %v3725 = vpop.f32.mrf.mxu0
    %v3726 = vadd.f32 %v3713, %v3725
    %v3727 = vpop.f32.mrf.mxu0
    %3728 = vdwg.mxu0
    %3729 = vmatpush.bf16.msra.mxu0 %v3499
    %3730 = vmatpush.bf16.msra.mxu0 %v3497
    %3731 = vmatpush.bf16.msra.mxu0 %v3495
    %3732 = vmatpush.bf16.msra.mxu0 %v3493
    %3733 = vmatpush.bf16.msra.mxu0 %v3491
    %3734 = vmatpush.bf16.msra.mxu0 %v3489
    %3735 = vmatpush.bf16.msra.mxu0 %v3487
    %3736 = vmatpush.bf16.msra.mxu0 %v3485
    %3737 = vmatmul.bf16.gmra.mxu0 %v2896
    %v3738 = vpop.f32.mrf.mxu0
    %v3739 = vadd.f32 %v3726, %v3738
    %v3740 = vpop.f32.mrf.mxu0
    %3741 = vdwg.mxu0
    %3742 = vmatpush.bf16.msra.mxu0 %v3515
    %3743 = vmatpush.bf16.msra.mxu0 %v3513
    %3744 = vmatpush.bf16.msra.mxu0 %v3511
    %3745 = vmatpush.bf16.msra.mxu0 %v3509
    %3746 = vmatpush.bf16.msra.mxu0 %v3507
    %3747 = vmatpush.bf16.msra.mxu0 %v3505
    %3748 = vmatpush.bf16.msra.mxu0 %v3503
    %3749 = vmatpush.bf16.msra.mxu0 %v3501
    %3750 = vmatmul.bf16.gmra.mxu0 %v2897
    %v3751 = vpop.f32.mrf.mxu0
    %v3752 = vadd.f32 %v3739, %v3751
    %v3753 = vpop.f32.mrf.mxu0
    %3754 = vdwg.mxu0
    %3755 = vmatpush.bf16.msra.mxu0 %v3531
    %3756 = vmatpush.bf16.msra.mxu0 %v3529
    %3757 = vmatpush.bf16.msra.mxu0 %v3527
    %3758 = vmatpush.bf16.msra.mxu0 %v3525
    %3759 = vmatpush.bf16.msra.mxu0 %v3523
    %3760 = vmatpush.bf16.msra.mxu0 %v3521
    %3761 = vmatpush.bf16.msra.mxu0 %v3519
    %3762 = vmatpush.bf16.msra.mxu0 %v3517
    %3763 = vmatmul.bf16.gmra.mxu0 %v2898
    %v3764 = vpop.f32.mrf.mxu0
    %v3765 = vadd.f32 %v3752, %v3764
    %v3766 = vpop.f32.mrf.mxu0
    %3767 = vdwg.mxu0
    %3768 = vmatpush.bf16.msra.mxu0 %v3547
    %3769 = vmatpush.bf16.msra.mxu0 %v3545
    %3770 = vmatpush.bf16.msra.mxu0 %v3543
    %3771 = vmatpush.bf16.msra.mxu0 %v3541
    %3772 = vmatpush.bf16.msra.mxu0 %v3539
    %3773 = vmatpush.bf16.msra.mxu0 %v3537
    %3774 = vmatpush.bf16.msra.mxu0 %v3535
    %3775 = vmatpush.bf16.msra.mxu0 %v3533
    %3776 = vmatmul.bf16.gmra.mxu0 %v2899
    %v3777 = vpop.f32.mrf.mxu0
    %v3778 = vadd.f32 %v3765, %v3777
    %v3779 = vpop.f32.mrf.mxu0
    %3780 = vdwg.mxu0
    %3781 = vmatpush.bf16.msra.mxu0 %v3436
    %3782 = vmatpush.bf16.msra.mxu0 %v3434
    %3783 = vmatpush.bf16.msra.mxu0 %v3432
    %3784 = vmatpush.bf16.msra.mxu0 %v3430
    %3785 = vmatpush.bf16.msra.mxu0 %v3428
    %3786 = vmatpush.bf16.msra.mxu0 %v3426
    %3787 = vmatpush.bf16.msra.mxu0 %v3424
    %3788 = vmatpush.bf16.msra.mxu0 %v3422
    %3789 = vmatmul.bf16.gmra.mxu0 %v2892
    %v3790 = vpop.f32.mrf.mxu0
    %v3791 = vadd.f32 %v3036, %v3790
    %v3792 = vpop.f32.mrf.mxu0
    %3793 = vdwg.mxu0
    %3794 = vmatpush.bf16.msra.mxu0 %v3452
    %3795 = vmatpush.bf16.msra.mxu0 %v3450
    %3796 = vmatpush.bf16.msra.mxu0 %v3448
    %3797 = vmatpush.bf16.msra.mxu0 %v3446
    %3798 = vmatpush.bf16.msra.mxu0 %v3444
    %3799 = vmatpush.bf16.msra.mxu0 %v3442
    %3800 = vmatpush.bf16.msra.mxu0 %v3440
    %3801 = vmatpush.bf16.msra.mxu0 %v3438
    %3802 = vmatmul.bf16.gmra.mxu0 %v2893
    %v3803 = vpop.f32.mrf.mxu0
    %v3804 = vadd.f32 %v3791, %v3803
    %v3805 = vpop.f32.mrf.mxu0
    %3806 = vdwg.mxu0
    %3807 = vmatpush.bf16.msra.mxu0 %v3468
    %3808 = vmatpush.bf16.msra.mxu0 %v3466
    %3809 = vmatpush.bf16.msra.mxu0 %v3464
    %3810 = vmatpush.bf16.msra.mxu0 %v3462
    %3811 = vmatpush.bf16.msra.mxu0 %v3460
    %3812 = vmatpush.bf16.msra.mxu0 %v3458
    %3813 = vmatpush.bf16.msra.mxu0 %v3456
    %3814 = vmatpush.bf16.msra.mxu0 %v3454
    %3815 = vmatmul.bf16.gmra.mxu0 %v2894
    %v3816 = vpop.f32.mrf.mxu0
    %v3817 = vadd.f32 %v3804, %v3816
    %v3818 = vpop.f32.mrf.mxu0
    %3819 = vdwg.mxu0
    %3820 = vmatpush.bf16.msra.mxu0 %v3484
    %3821 = vmatpush.bf16.msra.mxu0 %v3482
    %3822 = vmatpush.bf16.msra.mxu0 %v3480
    %3823 = vmatpush.bf16.msra.mxu0 %v3478
    %3824 = vmatpush.bf16.msra.mxu0 %v3476
    %3825 = vmatpush.bf16.msra.mxu0 %v3474
    %3826 = vmatpush.bf16.msra.mxu0 %v3472
    %3827 = vmatpush.bf16.msra.mxu0 %v3470
    %3828 = vmatmul.bf16.gmra.mxu0 %v2895
    %v3829 = vpop.f32.mrf.mxu0
    %v3830 = vadd.f32 %v3817, %v3829
    %v3831 = vpop.f32.mrf.mxu0
    %3832 = vdwg.mxu0
    %3833 = vmatpush.bf16.msra.mxu0 %v3500
    %3834 = vmatpush.bf16.msra.mxu0 %v3498
    %3835 = vmatpush.bf16.msra.mxu0 %v3496
    %3836 = vmatpush.bf16.msra.mxu0 %v3494
    %3837 = vmatpush.bf16.msra.mxu0 %v3492
    %3838 = vmatpush.bf16.msra.mxu0 %v3490
    %3839 = vmatpush.bf16.msra.mxu0 %v3488
    %3840 = vmatpush.bf16.msra.mxu0 %v3486
    %3841 = vmatmul.bf16.gmra.mxu0 %v2896
    %v3842 = vpop.f32.mrf.mxu0
    %v3843 = vadd.f32 %v3830, %v3842
    %v3844 = vpop.f32.mrf.mxu0
    %3845 = vdwg.mxu0
    %3846 = vmatpush.bf16.msra.mxu0 %v3516
    %3847 = vmatpush.bf16.msra.mxu0 %v3514
    %3848 = vmatpush.bf16.msra.mxu0 %v3512
    %3849 = vmatpush.bf16.msra.mxu0 %v3510
    %3850 = vmatpush.bf16.msra.mxu0 %v3508
    %3851 = vmatpush.bf16.msra.mxu0 %v3506
    %3852 = vmatpush.bf16.msra.mxu0 %v3504
    %3853 = vmatpush.bf16.msra.mxu0 %v3502
    %3854 = vmatmul.bf16.gmra.mxu0 %v2897
    %v3855 = vpop.f32.mrf.mxu0
    %v3856 = vadd.f32 %v3843, %v3855
    %v3857 = vpop.f32.mrf.mxu0
    %3858 = vdwg.mxu0
    %3859 = vmatpush.bf16.msra.mxu0 %v3532
    %3860 = vmatpush.bf16.msra.mxu0 %v3530
    %3861 = vmatpush.bf16.msra.mxu0 %v3528
    %3862 = vmatpush.bf16.msra.mxu0 %v3526
    %3863 = vmatpush.bf16.msra.mxu0 %v3524
    %3864 = vmatpush.bf16.msra.mxu0 %v3522
    %3865 = vmatpush.bf16.msra.mxu0 %v3520
    %3866 = vmatpush.bf16.msra.mxu0 %v3518
    %3867 = vmatmul.bf16.gmra.mxu0 %v2898
    %v3868 = vpop.f32.mrf.mxu0
    %v3869 = vadd.f32 %v3856, %v3868
    %v3870 = vpop.f32.mrf.mxu0
    %3871 = vdwg.mxu0
    %3872 = vmatpush.bf16.msra.mxu0 %v3548
    %3873 = vmatpush.bf16.msra.mxu0 %v3546
    %3874 = vmatpush.bf16.msra.mxu0 %v3544
    %3875 = vmatpush.bf16.msra.mxu0 %v3542
    %3876 = vmatpush.bf16.msra.mxu0 %v3540
    %3877 = vmatpush.bf16.msra.mxu0 %v3538
    %3878 = vmatpush.bf16.msra.mxu0 %v3536
    %3879 = vmatpush.bf16.msra.mxu0 %v3534
    %3880 = vmatmul.bf16.gmra.mxu0 %v2899
    %v3881 = vpop.f32.mrf.mxu0
    %v3882 = vadd.f32 %v3869, %v3881
    %v3883 = vpop.f32.mrf.mxu0
    %3884 = vdwg.mxu0
    %v3887 = vrot.slane %v3882, 6
    %v3888 = vsel %vm200, %v3778, %v3887
    %3890 = vst [vmem:[#allocation17] sm:$0xf] %v3888
    // Predicated region
    $region82: #{tpu_custom_call.1} parent=1 // pred_check
      _
    $region83: #{tpu_custom_call.1} parent=1 // pred_check_branch
      %3892 = sbr.rel (0) target = $region85
    $region84: #{tpu_custom_call.1} parent=1 // pred_region
      %3894 = vsyncadd [#allocation4], 0
      %s3896 = sshll.u32 [#allocation17], 4
      %s3897 = int_to_ptr.vmem [resolvable:$true] %s3896
      %s3898 = sshll.u32 %s11, 4
      %s3899 = int_to_ptr.hbm [resolvable:$true] %s3898
      %3901 = dma.vmem_to_hbm [thread:$0]  %s3897, 64, %s3899, [#allocation4]
    $region85: #{tpu_custom_call.1} parent=1 // pred_fallthru
      _
    // Predicated region
    $region86: #{tpu_custom_call.1} parent=1 // pred_check
      _
    $region87: #{tpu_custom_call.1} parent=1 // pred_check_branch
      %3903 = sbr.rel (0) target = $region89
    $region88: #{tpu_custom_call.1} parent=1 // pred_region
      %3905 = dma.done [#allocation4], 64
    $region89: #{tpu_custom_call.1} parent=1 // pred_fallthru
      _
    %3906 = vsyncpa [#allocation3], 1
    %3907 = vsyncpa [#allocation6], 1
    %3908 = vsyncpa [#allocation9], 1
    %3909 = vsyncpa [#allocation12], 1
    %3910 = vsyncpa [#allocation15], 1
    %3911 = vsyncpa [#allocation4], 1

</llo_original>
